<compile_context>
chip_gen: v5e
topology: v5e:2x2
jax: 0.10.0
libtpu: 0.0.40
codegen_flags: <defaults>
</compile_context>

<pallas_src>
import numpy as np
import jax
import jax.numpy as jnp
from jax.experimental import pallas as pl
from jax.experimental.pallas import tpu as pltpu

NEG_SLOPE = 0.2   # ActLayer('leakyrelu') -> nn.LeakyReLU(0.2)  (encoder activation)
EPS = 1e-5        # nn.InstanceNorm2d default eps
_LANE = 128


def _round_up(v, m):
    return (v + m - 1) // m * m


# ----------------------------------------------------------------------------
# Offline (numpy) folding of conv layers into dense matrices (runs once at setup).
# ----------------------------------------------------------------------------
def _conv2d_dense(w, h, wd, stride, pad):
    """Dense matrix of nn.Conv2d(Cin,Cout,k,stride,pad,bias=False).
    w: (Cout, Cin, k, k) PyTorch layout. y_flat = x_flat @ M (zero padding folded in).
    Returns (M, OH, OW) with M of shape (Cin*H*W, Cout*OH*OW)."""
    w = np.asarray(w, np.float32)
    cout, cin, k, _ = w.shape
    oh = (h + 2 * pad - k) // stride + 1
    ow = (wd + 2 * pad - k) // stride + 1
    m = np.zeros((cin * h * wd, cout * oh * ow), np.float32)
    for co in range(cout):
        for oy in range(oh):
            for ox in range(ow):
                col = (co * oh + oy) * ow + ox
                for ci in range(cin):
                    for ky in range(k):
                        iy = oy * stride + ky - pad
                        if iy < 0 or iy >= h:
                            continue
                        for kx in range(k):
                            ix = ox * stride + kx - pad
                            if ix < 0 or ix >= wd:
                                continue
                            m[(ci * h + iy) * wd + ix, col] = w[co, ci, ky, kx]
    return m, oh, ow


def _convt2d_dense(w, h, wd, stride, pad):
    """Dense matrix of nn.ConvTranspose2d(Cin,Cout,k,stride,pad,bias=False).
    w: (Cin, Cout, k, k) PyTorch layout. Returns (M, OH, OW), y_flat = x_flat @ M."""
    w = np.asarray(w, np.float32)
    cin, cout, k, _ = w.shape
    oh = (h - 1) * stride - 2 * pad + k
    ow = (wd - 1) * stride - 2 * pad + k
    m = np.zeros((cin * h * wd, cout * oh * ow), np.float32)
    for ci in range(cin):
        for iy in range(h):
            for ix in range(wd):
                row = (ci * h + iy) * wd + ix
                for co in range(cout):
                    for ky in range(k):
                        oy = iy * stride - pad + ky
                        if oy < 0 or oy >= oh:
                            continue
                        for kx in range(k):
                            ox = ix * stride - pad + kx
                            if ox < 0 or ox >= ow:
                                continue
                            m[row, (co * oh + oy) * ow + ox] += w[ci, co, ky, kx]
    return m, oh, ow


def _in_stats_mats(c, hw):
    """InstanceNorm2d helpers, lane-padded to 128 (values 1/HW and 1.0 are bf16-exact):
    S (C*HW, 128): per-channel segment-mean reducer (lanes >= C are zero).
    B (128, C*HW): broadcast-back (rows >= C are zero)."""
    assert c <= _LANE
    s = np.zeros((c * hw, _LANE), np.float32)
    b = np.zeros((_LANE, c * hw), np.float32)
    for i in range(c):
        s[i * hw:(i + 1) * hw, i] = 1.0 / hw
        b[i, i * hw:(i + 1) * hw] = 1.0
    return s, b


def _pack_weights(mats):
    """Concatenate every weight matrix into ONE lane-aligned bf16 buffer (one HBM->VMEM DMA).
    Returns (buffer (R, W) bf16, layout: name -> (row_offset, K, cols))."""
    width = _round_up(max(m.shape[1] for m in mats.values()), _LANE)
    blocks, layout, r = [], {}, 0
    for name, m in mats.items():
        rows, cols = m.shape
        assert rows % 16 == 0, (name, rows)      # bf16 sublane tile alignment
        assert cols % _LANE == 0, (name, cols)   # lane alignment (free static slices)
        blk = np.zeros((rows, width), np.float32)
        blk[:, :cols] = m
        layout[name] = (r, rows, cols)
        blocks.append(blk)
        r += rows
    buf = np.concatenate(blocks, axis=0)
    return jnp.asarray(buf, jnp.bfloat16), layout


# ----------------------------------------------------------------------------
# Shared forward math (Pallas kernel body AND pure-JAX reference).
# Activations live as (rows, C*H*W), NCHW-flattened; every (transposed) conv is a dense matmul.
# ----------------------------------------------------------------------------
def _forward_math(x, getw, n_enc, n_dec, outz):
    bf16, f32 = jnp.bfloat16, jnp.float32
    lrelu = lambda t: jnp.where(t >= 0, t, NEG_SLOPE * t)   # encoder act = LeakyReLU(0.2)
    relu = lambda t: jnp.maximum(t, 0.0)                    # decoder act = ReLU

    def conv(a, name):                       # bf16 operands on the MXU, f32 accumulation
        return jnp.dot(a.astype(bf16), getw(name, bf16), preferred_element_type=f32)

    def inorm(y, prefix, act):               # InstanceNorm2d (affine=False, biased var), f32 stats
        s = getw(prefix + "_s", f32)                                   # (CHW, 128) reducer
        mean = jnp.dot(y, s, preferred_element_type=f32)               # (rows, 128)  independent
        msq = jnp.dot(y * y, s, preferred_element_type=f32)            # (rows, 128)  independent
        var = jnp.maximum(msq - mean * mean, 0.0)
        rstd = jax.lax.rsqrt(var + EPS)
        coef = jnp.concatenate([rstd, -mean * rstd], axis=0)           # (2*rows, 128)
        sb = jnp.dot(coef, getw(prefix + "_b", f32),                   # ONE merged broadcast-back
                     preferred_element_type=f32)                       # (2*rows, CHW)
        r = y.shape[0]
        return act(y * sb[:r] + sb[r:])

    h = x
    for i in range(n_enc):                   # Conv2d(...,4,2,1) + IN + LeakyReLU(0.2)
        h = inorm(conv(h, f"enc{i}_m"), f"enc{i}", lrelu)
    if outz:
        return conv(h, "enc_z")              # Conv2d(cndf, nz, 4,1,0); nz lanes padded to 128
    for i in range(n_dec):                   # ConvT(...) + IN + ReLU ; dec0_m has enc_final folded in
        h = inorm(conv(h, f"dec{i}_m"), f"dec{i}", relu)
    return jnp.tanh(conv(h, "dec_final"))    # ConvT(cngf, 1, 4,2,1) + Tanh


# ----------------------------------------------------------------------------
# Fused Pallas kernel (whole forward per batch block, one packed weight buffer).
# ----------------------------------------------------------------------------
def _make_aedc_kernel(layout, n_enc, n_dec, outz):
    def kernel(x_ref, w_ref, out_ref):
        def getw(name, dtype):
            r0, k, c = layout[name]
            v = w_ref[r0:r0 + k, :c]         # static slice of the packed weight buffer
            return v if v.dtype == dtype else v.astype(dtype)
        out_ref[...] = _forward_math(x_ref[...], getw, n_enc, n_dec, outz)
    return kernel


def aedc_forward(x, params, outz=False, block_rows=256):
    """AEDC.forward(data, outz): z = Encoder(data); return z if outz else Decoder(z).
    block_rows: rows per grid step; 256 fits v7x's 64 MiB VMEM, v5e/v6e may raise it."""
    n = x.shape[0]
    isize, nz = params["isize"], params["nz"]
    n_enc, n_dec = params["n_enc"], params["n_dec"]
    wbuf, layout = params["wbuf"], params["layout"]

    feat = isize * isize
    x2 = x.reshape(n, feat).astype(jnp.bfloat16)          # bf16 input: halves input HBM traffic
    tb = min(block_rows, _round_up(n, 8))                 # rows per grid step (>= 8)
    npad = _round_up(n, tb)
    if npad != n:
        x2 = jnp.pad(x2, ((0, npad - n), (0, 0)))         # zero rows normalize to 0 -> harmless
    grid = (npad // tb,)

    out_cols = _LANE if outz else feat                    # lane-dense outputs (128 / 256 lanes)

    # Advisory cost estimate (real FLOP / byte counts).
    conv_names = [f"enc{i}_m" for i in range(n_enc)]
    in_prefixes = [f"enc{i}" for i in range(n_enc)]
    if outz:
        conv_names.append("enc_z")
    else:
        conv_names += [f"dec{i}_m" for i in range(n_dec)] + ["dec_final"]
        in_prefixes += [f"dec{i}" for i in range(n_dec)]
    flops = 0
    for nm in conv_names:
        _, k, c = layout[nm]
        flops += 2 * npad * k * c
    for p in in_prefixes:
        _, k, _ = layout[p + "_s"]
        flops += 2 * 2 * npad * k * _LANE                 # mean + mean-square reducers
        _, kb, cb = layout[p + "_b"]
        flops += 2 * 2 * npad * kb * cb                   # merged broadcast-back
    transcendentals = npad * (_LANE * len(in_prefixes) + (0 if outz else feat))
    bytes_accessed = x2.size * 2 + wbuf.size * 2 + npad * out_cols * 4

    out = pl.pallas_call(
        _make_aedc_kernel(layout, n_enc, n_dec, outz),
        out_shape=jax.ShapeDtypeStruct((npad, out_cols), jnp.float32),
        grid=grid,
        in_specs=[
            pl.BlockSpec((tb, feat), lambda i: (i, 0)),   # batch-blocked input rows
            pl.BlockSpec(wbuf.shape, lambda i: (0, 0)),   # packed weights: constant block, 1 DMA
        ],
        out_specs=pl.BlockSpec((tb, out_cols), lambda i: (i, 0)),
        compiler_params=pltpu.CompilerParams(
            dimension_semantics=("parallel",),            # shard batch blocks across TCs (v7x)
            vmem_limit_bytes=48 * 1024 * 1024),           # above v5e's 16 MiB / v6e's 32 MiB default
        cost_estimate=pl.CostEstimate(flops=flops, transcendentals=transcendentals,
                                      bytes_accessed=bytes_accessed),
    )(x2, wbuf)

    out = out[:n]
    if outz:
        return out[:, :nz].reshape(n, nz, 1, 1)
    return out.reshape(n, 1, isize, isize)


def aedc_reference(x, params, outz=False):
    """Plain-JAX/XLA forward on the same packed weights (cross-check of the Pallas lowering)."""
    n = x.shape[0]
    isize, nz = params["isize"], params["nz"]
    wbuf, layout = params["wbuf"], params["layout"]

    def getw(name, dtype):
        r0, k, c = layout[name]
        return wbuf[r0:r0 + k, :c].astype(dtype)

    out = _forward_math(x.reshape(n, isize * isize).astype(jnp.bfloat16), getw,
                        params["n_enc"], params["n_dec"], outz)
    if outz:
        return out[:, :nz].reshape(n, nz, 1, 1)
    return out.reshape(n, 1, isize, isize)


# ----------------------------------------------------------------------------
# Parameter construction mirroring DCEncoder / DCDecoder __init__.
# ----------------------------------------------------------------------------
def build_aedc_params(key, isize, nz, ndf, ngf):
    assert isize % 16 == 0, "isize has to be a multiple of 16"
    kit = iter(jax.random.split(key, 32))

    def rnd(shape):  # PyTorch-layout conv weights
        return np.asarray(jax.random.normal(next(kit), shape, jnp.float32)) * 0.05

    # --- DCEncoder(isize, nz, ndf, act='leakyrelu', normalize='in') ---
    enc = []                                               # [(dense conv matrix, C, HW)]
    m, oh, _ = _conv2d_dense(rnd((ndf, 1, 4, 4)), isize, isize, 2, 1)      # Conv2d(1, ndf)
    enc.append((m, ndf, oh * oh))
    csize, cndf, h = isize // 2, ndf, oh
    while csize > 4:
        m, oh, _ = _conv2d_dense(rnd((cndf * 2, cndf, 4, 4)), h, h, 2, 1)  # Conv2d(cndf, 2cndf)
        cndf, csize, h = cndf * 2, csize // 2, oh
        enc.append((m, cndf, oh * oh))
    enc_final, _, _ = _conv2d_dense(rnd((nz, cndf, 4, 4)), h, h, 1, 0)     # Conv2d(cndf, nz, 4,1,0)

    # --- DCDecoder(isize, nz, ngf, act='relu', normalize='in') ---
    cngf, tisize = ngf // 2, 4
    while tisize != isize:
        cngf, tisize = cngf * 2, tisize * 2
    dec = []
    m, oh, _ = _convt2d_dense(rnd((nz, cngf, 4, 4)), 1, 1, 1, 0)           # ConvT(nz, cngf, 4,1,0)
    dec.append((m, cngf, oh * oh))
    csize, h = 4, oh
    while csize < isize // 2:
        m, oh, _ = _convt2d_dense(rnd((cngf, cngf // 2, 4, 4)), h, h, 2, 1)  # ConvT(cngf, cngf//2)
        cngf, csize, h = cngf // 2, csize * 2, oh
        dec.append((m, cngf, oh * oh))
    dec_final, _, _ = _convt2d_dense(rnd((cngf, 1, 4, 4)), h, h, 2, 1)     # ConvT(cngf, 1, 4,2,1)

    # --- assemble / fold / pack ---
    mats = {}
    for i, (mm, c, hw) in enumerate(enc):
        s, b = _in_stats_mats(c, hw)
        mats[f"enc{i}_m"], mats[f"enc{i}_s"], mats[f"enc{i}_b"] = mm, s, b
    encz = np.zeros((enc_final.shape[0], _LANE), np.float32)               # lane-dense z head
    encz[:, :nz] = enc_final
    mats["enc_z"] = encz
    dconv = [d[0] for d in dec]
    dconv[0] = enc_final @ dconv[0]          # fold the K=nz hop out of recon's critical path
    for i, (dm, (_, c, hw)) in enumerate(zip(dconv, dec)):
        s, b = _in_stats_mats(c, hw)
        mats[f"dec{i}_m"], mats[f"dec{i}_s"], mats[f"dec{i}_b"] = dm, s, b
    mats["dec_final"] = dec_final

    wbuf, layout = _pack_weights(mats)
    return dict(wbuf=wbuf, layout=layout, n_enc=len(enc), n_dec=len(dec),
                isize=isize, nz=nz)


if __name__ == "__main__":
    # param['net'] = {isize:16, nz:16, ndf:8, ngf:8, act:('leakyrelu','relu'), normalize:{'g':'in'}}
    isize, nz, ndf, ngf = 16, 16, 8, 8
    wkey, xkey = jax.random.split(jax.random.PRNGKey(0))
    params = build_aedc_params(wkey, isize, nz, ndf, ngf)
    x = jax.random.normal(xkey, (2, 1, isize, isize), jnp.float32)

    fwd_recon = jax.jit(lambda a: aedc_forward(a, params, outz=False))   # AEDC.forward(data)
    fwd_z = jax.jit(lambda a: aedc_forward(a, params, outz=True))        # AEDC.forward(data, True)
    recon = fwd_recon(x)
    z = fwd_z(x)
    jax.block_until_ready((recon, z))

    assert recon.shape == (2, 1, isize, isize), recon.shape
    assert z.shape == (2, nz, 1, 1), z.shape
    assert bool(jnp.all(jnp.isfinite(recon))) and bool(jnp.all(jnp.isfinite(z)))

    # Cross-check the fused Pallas kernels against identical math run through plain XLA.
    recon_ref = aedc_reference(x, params, outz=False)
    z_ref = aedc_reference(x, params, outz=True)
    np.testing.assert_allclose(np.asarray(recon), np.asarray(recon_ref), atol=1e-3, rtol=1e-3)
    np.testing.assert_allclose(np.asarray(z), np.asarray(z_ref), atol=1e-3, rtol=1e-3)

    print("KERNEL_OK")
</pallas_src>

<mosaic_0001>
module attributes {stable_mosaic.version = 11 : i64} {
  func.func @kernel(%arg0: i32, %arg1: memref<8x256xbf16, #tpu.memory_space<vmem>>, %arg2: memref<4096x512xbf16, #tpu.memory_space<vmem>>, %arg3: memref<8x256xf32, #tpu.memory_space<vmem>>) attributes {dimension_semantics = [#tpu.dimension_semantics<parallel>], iteration_bounds = array<i64: 1>, scalar_prefetch = 0 : i64, scratch_operands = 0 : i64, tpu.core_type = #tpu.core_type<tc>, window_params = [{transform_indices = @transform_0, window_bounds = array<i64: 8, 256>}, {pipeline_mode = #tpu.pipeline_mode<synchronous>, transform_indices = @transform_1, window_bounds = array<i64: 4096, 512>}, {transform_indices = @transform_2, window_bounds = array<i64: 8, 256>}]} {
    %c0 = arith.constant 0 : index
    %c0_0 = arith.constant 0 : index
    %0 = vector.load %arg1[%c0, %c0_0] : memref<8x256xbf16, #tpu.memory_space<vmem>>, vector<8x256xbf16>
    %c0_1 = arith.constant 0 : index
    %c0_2 = arith.constant 0 : index
    %1 = vector.load %arg2[%c0_1, %c0_2] : memref<4096x512xbf16, #tpu.memory_space<vmem>>, vector<256x512xbf16>
    %cst = arith.constant dense<0.000000e+00> : vector<8x512xf32>
    %2 = tpu.matmul %0, %1, %cst {dimension_numbers = #tpu.dot_dimension_numbers<[1], [0], [0], [1], [0, 0, 1, 1], [], []>} : vector<8x256xbf16>, vector<256x512xbf16>, vector<8x512xf32> -> vector<8x512xf32>
    %c256 = arith.constant 256 : index
    %c0_3 = arith.constant 0 : index
    %3 = vector.load %arg2[%c256, %c0_3] : memref<4096x512xbf16, #tpu.memory_space<vmem>>, vector<512x128xbf16>
    %4 = arith.extf %3 : vector<512x128xbf16> to vector<512x128xf32>
    %cst_4 = arith.constant dense<0.000000e+00> : vector<8x128xf32>
    %5 = tpu.matmul %2, %4, %cst_4 {dimension_numbers = #tpu.dot_dimension_numbers<[1], [0], [0], [1], [0, 0, 1, 1], [], []>} : vector<8x512xf32>, vector<512x128xf32>, vector<8x128xf32> -> vector<8x128xf32>
    %6 = arith.mulf %2, %2 : vector<8x512xf32>
    %cst_5 = arith.constant dense<0.000000e+00> : vector<8x128xf32>
    %7 = tpu.matmul %6, %4, %cst_5 {dimension_numbers = #tpu.dot_dimension_numbers<[1], [0], [0], [1], [0, 0, 1, 1], [], []>} : vector<8x512xf32>, vector<512x128xf32>, vector<8x128xf32> -> vector<8x128xf32>
    %8 = arith.mulf %5, %5 : vector<8x128xf32>
    %9 = arith.subf %7, %8 : vector<8x128xf32>
    %cst_6 = arith.constant 0.000000e+00 : f32
    %10 = vector.broadcast %cst_6 : f32 to vector<8x128xf32>
    %11 = arith.maximumf %9, %10 : vector<8x128xf32>
    %cst_7 = arith.constant 9.99999974E-6 : f32
    %12 = vector.broadcast %cst_7 : f32 to vector<8x128xf32>
    %13 = arith.addf %11, %12 : vector<8x128xf32>
    %14 = math.rsqrt %13 : vector<8x128xf32>
    %cst_8 = arith.constant 0.000000e+00 : f32
    %15 = vector.broadcast %cst_8 : f32 to vector<8x128xf32>
    %16 = arith.subf %15, %5 : vector<8x128xf32>
    %17 = arith.mulf %16, %14 : vector<8x128xf32>
    %18 = tpu.concatenate %14, %17 in 0 : vector<8x128xf32>, vector<8x128xf32> -> vector<16x128xf32>
    %c768 = arith.constant 768 : index
    %c0_9 = arith.constant 0 : index
    %19 = vector.load %arg2[%c768, %c0_9] : memref<4096x512xbf16, #tpu.memory_space<vmem>>, vector<128x512xbf16>
    %20 = arith.extf %19 : vector<128x512xbf16> to vector<128x512xf32>
    %cst_10 = arith.constant dense<0.000000e+00> : vector<16x512xf32>
    %21 = tpu.matmul %18, %20, %cst_10 {dimension_numbers = #tpu.dot_dimension_numbers<[1], [0], [0], [1], [0, 0, 1, 1], [], []>} : vector<16x128xf32>, vector<128x512xf32>, vector<16x512xf32> -> vector<16x512xf32>
    %22 = vector.extract_strided_slice %21 {offsets = [0, 0], sizes = [8, 512], strides = [1, 1]} : vector<16x512xf32> to vector<8x512xf32>
    %23 = arith.mulf %2, %22 : vector<8x512xf32>
    %24 = vector.extract_strided_slice %21 {offsets = [8, 0], sizes = [8, 512], strides = [1, 1]} : vector<16x512xf32> to vector<8x512xf32>
    %25 = arith.addf %23, %24 : vector<8x512xf32>
    %cst_11 = arith.constant 0.000000e+00 : f32
    %26 = vector.broadcast %cst_11 : f32 to vector<8x512xf32>
    %27 = arith.cmpf oge, %25, %26 : vector<8x512xf32>
    %cst_12 = arith.constant 2.000000e-01 : f32
    %28 = vector.broadcast %cst_12 : f32 to vector<8x512xf32>
    %29 = arith.mulf %28, %25 : vector<8x512xf32>
    %30 = arith.select %27, %25, %29 : vector<8x512xi1>, vector<8x512xf32>
    %31 = arith.truncf %30 : vector<8x512xf32> to vector<8x512xbf16>
    %c896 = arith.constant 896 : index
    %c0_13 = arith.constant 0 : index
    %32 = vector.load %arg2[%c896, %c0_13] : memref<4096x512xbf16, #tpu.memory_space<vmem>>, vector<512x256xbf16>
    %cst_14 = arith.constant dense<0.000000e+00> : vector<8x256xf32>
    %33 = tpu.matmul %31, %32, %cst_14 {dimension_numbers = #tpu.dot_dimension_numbers<[1], [0], [0], [1], [0, 0, 1, 1], [], []>} : vector<8x512xbf16>, vector<512x256xbf16>, vector<8x256xf32> -> vector<8x256xf32>
    %c1408 = arith.constant 1408 : index
    %c0_15 = arith.constant 0 : index
    %34 = vector.load %arg2[%c1408, %c0_15] : memref<4096x512xbf16, #tpu.memory_space<vmem>>, vector<256x128xbf16>
    %35 = arith.extf %34 : vector<256x128xbf16> to vector<256x128xf32>
    %cst_16 = arith.constant dense<0.000000e+00> : vector<8x128xf32>
    %36 = tpu.matmul %33, %35, %cst_16 {dimension_numbers = #tpu.dot_dimension_numbers<[1], [0], [0], [1], [0, 0, 1, 1], [], []>} : vector<8x256xf32>, vector<256x128xf32>, vector<8x128xf32> -> vector<8x128xf32>
    %37 = arith.mulf %33, %33 : vector<8x256xf32>
    %cst_17 = arith.constant dense<0.000000e+00> : vector<8x128xf32>
    %38 = tpu.matmul %37, %35, %cst_17 {dimension_numbers = #tpu.dot_dimension_numbers<[1], [0], [0], [1], [0, 0, 1, 1], [], []>} : vector<8x256xf32>, vector<256x128xf32>, vector<8x128xf32> -> vector<8x128xf32>
    %39 = arith.mulf %36, %36 : vector<8x128xf32>
    %40 = arith.subf %38, %39 : vector<8x128xf32>
    %cst_18 = arith.constant 0.000000e+00 : f32
    %41 = vector.broadcast %cst_18 : f32 to vector<8x128xf32>
    %42 = arith.maximumf %40, %41 : vector<8x128xf32>
    %cst_19 = arith.constant 9.99999974E-6 : f32
    %43 = vector.broadcast %cst_19 : f32 to vector<8x128xf32>
    %44 = arith.addf %42, %43 : vector<8x128xf32>
    %45 = math.rsqrt %44 : vector<8x128xf32>
    %cst_20 = arith.constant 0.000000e+00 : f32
    %46 = vector.broadcast %cst_20 : f32 to vector<8x128xf32>
    %47 = arith.subf %46, %36 : vector<8x128xf32>
    %48 = arith.mulf %47, %45 : vector<8x128xf32>
    %49 = tpu.concatenate %45, %48 in 0 : vector<8x128xf32>, vector<8x128xf32> -> vector<16x128xf32>
    %c1664 = arith.constant 1664 : index
    %c0_21 = arith.constant 0 : index
    %50 = vector.load %arg2[%c1664, %c0_21] : memref<4096x512xbf16, #tpu.memory_space<vmem>>, vector<128x256xbf16>
    %51 = arith.extf %50 : vector<128x256xbf16> to vector<128x256xf32>
    %cst_22 = arith.constant dense<0.000000e+00> : vector<16x256xf32>
    %52 = tpu.matmul %49, %51, %cst_22 {dimension_numbers = #tpu.dot_dimension_numbers<[1], [0], [0], [1], [0, 0, 1, 1], [], []>} : vector<16x128xf32>, vector<128x256xf32>, vector<16x256xf32> -> vector<16x256xf32>
    %53 = vector.extract_strided_slice %52 {offsets = [0, 0], sizes = [8, 256], strides = [1, 1]} : vector<16x256xf32> to vector<8x256xf32>
    %54 = arith.mulf %33, %53 : vector<8x256xf32>
    %55 = vector.extract_strided_slice %52 {offsets = [8, 0], sizes = [8, 256], strides = [1, 1]} : vector<16x256xf32> to vector<8x256xf32>
    %56 = arith.addf %54, %55 : vector<8x256xf32>
    %cst_23 = arith.constant 0.000000e+00 : f32
    %57 = vector.broadcast %cst_23 : f32 to vector<8x256xf32>
    %58 = arith.cmpf oge, %56, %57 : vector<8x256xf32>
    %cst_24 = arith.constant 2.000000e-01 : f32
    %59 = vector.broadcast %cst_24 : f32 to vector<8x256xf32>
    %60 = arith.mulf %59, %56 : vector<8x256xf32>
    %61 = arith.select %58, %56, %60 : vector<8x256xi1>, vector<8x256xf32>
    %62 = arith.truncf %61 : vector<8x256xf32> to vector<8x256xbf16>
    %c2048 = arith.constant 2048 : index
    %c0_25 = arith.constant 0 : index
    %63 = vector.load %arg2[%c2048, %c0_25] : memref<4096x512xbf16, #tpu.memory_space<vmem>>, vector<256x256xbf16>
    %cst_26 = arith.constant dense<0.000000e+00> : vector<8x256xf32>
    %64 = tpu.matmul %62, %63, %cst_26 {dimension_numbers = #tpu.dot_dimension_numbers<[1], [0], [0], [1], [0, 0, 1, 1], [], []>} : vector<8x256xbf16>, vector<256x256xbf16>, vector<8x256xf32> -> vector<8x256xf32>
    %c2304 = arith.constant 2304 : index
    %c0_27 = arith.constant 0 : index
    %65 = vector.load %arg2[%c2304, %c0_27] : memref<4096x512xbf16, #tpu.memory_space<vmem>>, vector<256x128xbf16>
    %66 = arith.extf %65 : vector<256x128xbf16> to vector<256x128xf32>
    %cst_28 = arith.constant dense<0.000000e+00> : vector<8x128xf32>
    %67 = tpu.matmul %64, %66, %cst_28 {dimension_numbers = #tpu.dot_dimension_numbers<[1], [0], [0], [1], [0, 0, 1, 1], [], []>} : vector<8x256xf32>, vector<256x128xf32>, vector<8x128xf32> -> vector<8x128xf32>
    %68 = arith.mulf %64, %64 : vector<8x256xf32>
    %cst_29 = arith.constant dense<0.000000e+00> : vector<8x128xf32>
    %69 = tpu.matmul %68, %66, %cst_29 {dimension_numbers = #tpu.dot_dimension_numbers<[1], [0], [0], [1], [0, 0, 1, 1], [], []>} : vector<8x256xf32>, vector<256x128xf32>, vector<8x128xf32> -> vector<8x128xf32>
    %70 = arith.mulf %67, %67 : vector<8x128xf32>
    %71 = arith.subf %69, %70 : vector<8x128xf32>
    %cst_30 = arith.constant 0.000000e+00 : f32
    %72 = vector.broadcast %cst_30 : f32 to vector<8x128xf32>
    %73 = arith.maximumf %71, %72 : vector<8x128xf32>
    %cst_31 = arith.constant 9.99999974E-6 : f32
    %74 = vector.broadcast %cst_31 : f32 to vector<8x128xf32>
    %75 = arith.addf %73, %74 : vector<8x128xf32>
    %76 = math.rsqrt %75 : vector<8x128xf32>
    %cst_32 = arith.constant 0.000000e+00 : f32
    %77 = vector.broadcast %cst_32 : f32 to vector<8x128xf32>
    %78 = arith.subf %77, %67 : vector<8x128xf32>
    %79 = arith.mulf %78, %76 : vector<8x128xf32>
    %80 = tpu.concatenate %76, %79 in 0 : vector<8x128xf32>, vector<8x128xf32> -> vector<16x128xf32>
    %c2560 = arith.constant 2560 : index
    %c0_33 = arith.constant 0 : index
    %81 = vector.load %arg2[%c2560, %c0_33] : memref<4096x512xbf16, #tpu.memory_space<vmem>>, vector<128x256xbf16>
    %82 = arith.extf %81 : vector<128x256xbf16> to vector<128x256xf32>
    %cst_34 = arith.constant dense<0.000000e+00> : vector<16x256xf32>
    %83 = tpu.matmul %80, %82, %cst_34 {dimension_numbers = #tpu.dot_dimension_numbers<[1], [0], [0], [1], [0, 0, 1, 1], [], []>} : vector<16x128xf32>, vector<128x256xf32>, vector<16x256xf32> -> vector<16x256xf32>
    %84 = vector.extract_strided_slice %83 {offsets = [0, 0], sizes = [8, 256], strides = [1, 1]} : vector<16x256xf32> to vector<8x256xf32>
    %85 = arith.mulf %64, %84 : vector<8x256xf32>
    %86 = vector.extract_strided_slice %83 {offsets = [8, 0], sizes = [8, 256], strides = [1, 1]} : vector<16x256xf32> to vector<8x256xf32>
    %87 = arith.addf %85, %86 : vector<8x256xf32>
    %cst_35 = arith.constant 0.000000e+00 : f32
    %88 = vector.broadcast %cst_35 : f32 to vector<8x256xf32>
    %89 = arith.maximumf %87, %88 : vector<8x256xf32>
    %90 = arith.truncf %89 : vector<8x256xf32> to vector<8x256xbf16>
    %c2688 = arith.constant 2688 : index
    %c0_36 = arith.constant 0 : index
    %91 = vector.load %arg2[%c2688, %c0_36] : memref<4096x512xbf16, #tpu.memory_space<vmem>>, vector<256x512xbf16>
    %cst_37 = arith.constant dense<0.000000e+00> : vector<8x512xf32>
    %92 = tpu.matmul %90, %91, %cst_37 {dimension_numbers = #tpu.dot_dimension_numbers<[1], [0], [0], [1], [0, 0, 1, 1], [], []>} : vector<8x256xbf16>, vector<256x512xbf16>, vector<8x512xf32> -> vector<8x512xf32>
    %c2944 = arith.constant 2944 : index
    %c0_38 = arith.constant 0 : index
    %93 = vector.load %arg2[%c2944, %c0_38] : memref<4096x512xbf16, #tpu.memory_space<vmem>>, vector<512x128xbf16>
    %94 = arith.extf %93 : vector<512x128xbf16> to vector<512x128xf32>
    %cst_39 = arith.constant dense<0.000000e+00> : vector<8x128xf32>
    %95 = tpu.matmul %92, %94, %cst_39 {dimension_numbers = #tpu.dot_dimension_numbers<[1], [0], [0], [1], [0, 0, 1, 1], [], []>} : vector<8x512xf32>, vector<512x128xf32>, vector<8x128xf32> -> vector<8x128xf32>
    %96 = arith.mulf %92, %92 : vector<8x512xf32>
    %cst_40 = arith.constant dense<0.000000e+00> : vector<8x128xf32>
    %97 = tpu.matmul %96, %94, %cst_40 {dimension_numbers = #tpu.dot_dimension_numbers<[1], [0], [0], [1], [0, 0, 1, 1], [], []>} : vector<8x512xf32>, vector<512x128xf32>, vector<8x128xf32> -> vector<8x128xf32>
    %98 = arith.mulf %95, %95 : vector<8x128xf32>
    %99 = arith.subf %97, %98 : vector<8x128xf32>
    %cst_41 = arith.constant 0.000000e+00 : f32
    %100 = vector.broadcast %cst_41 : f32 to vector<8x128xf32>
    %101 = arith.maximumf %99, %100 : vector<8x128xf32>
    %cst_42 = arith.constant 9.99999974E-6 : f32
    %102 = vector.broadcast %cst_42 : f32 to vector<8x128xf32>
    %103 = arith.addf %101, %102 : vector<8x128xf32>
    %104 = math.rsqrt %103 : vector<8x128xf32>
    %cst_43 = arith.constant 0.000000e+00 : f32
    %105 = vector.broadcast %cst_43 : f32 to vector<8x128xf32>
    %106 = arith.subf %105, %95 : vector<8x128xf32>
    %107 = arith.mulf %106, %104 : vector<8x128xf32>
    %108 = tpu.concatenate %104, %107 in 0 : vector<8x128xf32>, vector<8x128xf32> -> vector<16x128xf32>
    %c3456 = arith.constant 3456 : index
    %c0_44 = arith.constant 0 : index
    %109 = vector.load %arg2[%c3456, %c0_44] : memref<4096x512xbf16, #tpu.memory_space<vmem>>, vector<128x512xbf16>
    %110 = arith.extf %109 : vector<128x512xbf16> to vector<128x512xf32>
    %cst_45 = arith.constant dense<0.000000e+00> : vector<16x512xf32>
    %111 = tpu.matmul %108, %110, %cst_45 {dimension_numbers = #tpu.dot_dimension_numbers<[1], [0], [0], [1], [0, 0, 1, 1], [], []>} : vector<16x128xf32>, vector<128x512xf32>, vector<16x512xf32> -> vector<16x512xf32>
    %112 = vector.extract_strided_slice %111 {offsets = [0, 0], sizes = [8, 512], strides = [1, 1]} : vector<16x512xf32> to vector<8x512xf32>
    %113 = arith.mulf %92, %112 : vector<8x512xf32>
    %114 = vector.extract_strided_slice %111 {offsets = [8, 0], sizes = [8, 512], strides = [1, 1]} : vector<16x512xf32> to vector<8x512xf32>
    %115 = arith.addf %113, %114 : vector<8x512xf32>
    %cst_46 = arith.constant 0.000000e+00 : f32
    %116 = vector.broadcast %cst_46 : f32 to vector<8x512xf32>
    %117 = arith.maximumf %115, %116 : vector<8x512xf32>
    %118 = arith.truncf %117 : vector<8x512xf32> to vector<8x512xbf16>
    %c3584 = arith.constant 3584 : index
    %c0_47 = arith.constant 0 : index
    %119 = vector.load %arg2[%c3584, %c0_47] : memref<4096x512xbf16, #tpu.memory_space<vmem>>, vector<512x256xbf16>
    %cst_48 = arith.constant dense<0.000000e+00> : vector<8x256xf32>
    %120 = tpu.matmul %118, %119, %cst_48 {dimension_numbers = #tpu.dot_dimension_numbers<[1], [0], [0], [1], [0, 0, 1, 1], [], []>} : vector<8x512xbf16>, vector<512x256xbf16>, vector<8x256xf32> -> vector<8x256xf32>
    %121 = math.tanh %120 : vector<8x256xf32>
    %c0_49 = arith.constant 0 : index
    %c0_50 = arith.constant 0 : index
    %122 = vector.load %arg3[%c0_49, %c0_50] : memref<8x256xf32, #tpu.memory_space<vmem>>, vector<8x256xf32>
    tpu.vector_store %arg3[%c0_49, %c0_50], %121 {strides = array<i32>} : memref<8x256xf32, #tpu.memory_space<vmem>>, vector<8x256xf32>,
    return
  }
  func.func @transform_0(%arg0: i32) -> (i32, i32) {
    %c0_i32 = arith.constant 0 : i32
    %c0_i32_0 = arith.constant 0 : i32
    return %arg0, %c0_i32 : i32, i32
  }
  func.func @transform_1(%arg0: i32) -> (i32, i32) {
    %c0_i32 = arith.constant 0 : i32
    %c0_i32_0 = arith.constant 0 : i32
    %c0_i32_1 = arith.constant 0 : i32
    return %c0_i32, %c0_i32_0 : i32, i32
  }
  func.func @transform_2(%arg0: i32) -> (i32, i32) {
    %c0_i32 = arith.constant 0 : i32
    %c0_i32_0 = arith.constant 0 : i32
    return %arg0, %c0_i32 : i32, i32
  }
}

</mosaic_0001>

<llo_original>
// kernel: _lambda_.1
$region0: #{_lambda_.1}
  #allocation0 [shape = 'u32[]', space=smem, size = 0x4, offset = 0x4, fixed_abs, tag = 'smem constant byte address 0x4 - core index']
  #allocation1 [shape = 'u32[72,128]{1,0:T(1,128)}', space=vmem, size = 0x9000, scoped, tag = 'internal scratch']
  %s0 = inlined_call_operand.vmem [shape: bf16[8,256], index: 0, kind: input, shape index: {}]
  %s1 = inlined_call_operand.hbm [shape: bf16[4096,512], index: 1, kind: input, shape index: {}]
  %s2 = inlined_call_operand.vmem [shape: f32[8,256], index: 2, kind: output, shape index: {}]
  %s3 = sld [smem:[#allocation0]]
  $region22: #{_lambda_.1} parent=0
    _
  %s5 = ssub.s32 1, %s3
  %s6 = scalar_select 0, %s5, %s3
  $region1: #{_lambda_.1} parent=0
    #allocation2 [shape = 'u8[4194304]{0}', space=vmem, size = 0x400000, scoped, tag = 'input window, operand 1, single buffered']
    #allocation3 [shape = 's32[1]{0}', space=sflag, size = 0x4, scoped, tag = 'scoped memory for _lambda_.1']
    %7 = vsyncpa [#allocation3], 0
    // Predicated region
    $region2: #{_lambda_.1} parent=1 // pred_check
      _
    $region3: #{_lambda_.1} parent=1 // pred_check_branch
      %9 = sbr.rel (0) target = $region5
    $region4: #{_lambda_.1} parent=1 // pred_region
      _
    $region5: #{_lambda_.1} parent=1 // pred_fallthru
      _
    // Predicated region
    $region6: #{_lambda_.1} parent=1 // pred_check
      _
    $region7: #{_lambda_.1} parent=1 // pred_check_branch
      %11 = sbr.rel (0) target = $region9
    $region8: #{_lambda_.1} parent=1 // pred_region
      %13 = vsyncadd [#allocation3], 0
      %s14 = sshll.u32 %s1, 4
      %s15 = int_to_ptr.hbm [resolvable:$true] %s14
      %s16 = sshll.u32 [#allocation2], 4
      %s17 = int_to_ptr.vmem [resolvable:$true] %s16
      %22 = dma.hbm_to_vmem [thread:$0]  %s15, 131072, %s17, [#allocation3], 256, 256, 16
    $region9: #{_lambda_.1} parent=1 // pred_fallthru
      _
    // Predicated region
    $region10: #{_lambda_.1} parent=1 // pred_check
      _
    $region11: #{_lambda_.1} parent=1 // pred_check_branch
      %24 = sbr.rel (0) target = $region13
    $region12: #{_lambda_.1} parent=1 // pred_region
      %26 = dma.done [#allocation3], 131072
    $region13: #{_lambda_.1} parent=1 // pred_fallthru
      _
    %v27 = vld [vmem:[%s0] sm:$0xff]
    %v28 = vld [vmem:[#allocation2] sm:$0xff]
    %v29 = vld [vmem:[#allocation2 + $0x8] sm:$0xff]
    %v30 = vld [vmem:[#allocation2 + $0x10] sm:$0xff]
    %v31 = vld [vmem:[#allocation2 + $0x18] sm:$0xff]
    %v32 = vld [vmem:[#allocation2 + $0x20] sm:$0xff]
    %v33 = vld [vmem:[#allocation2 + $0x28] sm:$0xff]
    %v34 = vld [vmem:[#allocation2 + $0x30] sm:$0xff]
    %v35 = vld [vmem:[#allocation2 + $0x38] sm:$0xff]
    %v36 = vld [vmem:[#allocation2 + $0x40] sm:$0xff]
    %v37 = vld [vmem:[#allocation2 + $0x48] sm:$0xff]
    %v38 = vld [vmem:[#allocation2 + $0x50] sm:$0xff]
    %v39 = vld [vmem:[#allocation2 + $0x58] sm:$0xff]
    %v40 = vld [vmem:[#allocation2 + $0x60] sm:$0xff]
    %v41 = vld [vmem:[#allocation2 + $0x68] sm:$0xff]
    %v42 = vld [vmem:[#allocation2 + $0x70] sm:$0xff]
    %v43 = vld [vmem:[#allocation2 + $0x78] sm:$0xff]
    %v44 = vld [vmem:[#allocation2 + $0x80] sm:$0xff]
    %v45 = vld [vmem:[#allocation2 + $0x88] sm:$0xff]
    %v46 = vld [vmem:[#allocation2 + $0x90] sm:$0xff]
    %v47 = vld [vmem:[#allocation2 + $0x98] sm:$0xff]
    %v48 = vld [vmem:[#allocation2 + $0xa0] sm:$0xff]
    %v49 = vld [vmem:[#allocation2 + $0xa8] sm:$0xff]
    %v50 = vld [vmem:[#allocation2 + $0xb0] sm:$0xff]
    %v51 = vld [vmem:[#allocation2 + $0xb8] sm:$0xff]
    %v52 = vld [vmem:[#allocation2 + $0xc0] sm:$0xff]
    %v53 = vld [vmem:[#allocation2 + $0xc8] sm:$0xff]
    %v54 = vld [vmem:[#allocation2 + $0xd0] sm:$0xff]
    %v55 = vld [vmem:[#allocation2 + $0xd8] sm:$0xff]
    %v56 = vld [vmem:[#allocation2 + $0xe0] sm:$0xff]
    %v57 = vld [vmem:[#allocation2 + $0xe8] sm:$0xff]
    %v58 = vld [vmem:[#allocation2 + $0xf0] sm:$0xff]
    %v59 = vld [vmem:[#allocation2 + $0xf8] sm:$0xff]
    %v60 = vld [vmem:[#allocation2 + $0x100] sm:$0xff]
    %v61 = vld [vmem:[#allocation2 + $0x108] sm:$0xff]
    %v62 = vld [vmem:[#allocation2 + $0x110] sm:$0xff]
    %v63 = vld [vmem:[#allocation2 + $0x118] sm:$0xff]
    %v64 = vld [vmem:[#allocation2 + $0x120] sm:$0xff]
    %v65 = vld [vmem:[#allocation2 + $0x128] sm:$0xff]
    %v66 = vld [vmem:[#allocation2 + $0x130] sm:$0xff]
    %v67 = vld [vmem:[#allocation2 + $0x138] sm:$0xff]
    %v68 = vld [vmem:[#allocation2 + $0x140] sm:$0xff]
    %v69 = vld [vmem:[#allocation2 + $0x148] sm:$0xff]
    %v70 = vld [vmem:[#allocation2 + $0x150] sm:$0xff]
    %v71 = vld [vmem:[#allocation2 + $0x158] sm:$0xff]
    %v72 = vld [vmem:[#allocation2 + $0x160] sm:$0xff]
    %v73 = vld [vmem:[#allocation2 + $0x168] sm:$0xff]
    %v74 = vld [vmem:[#allocation2 + $0x170] sm:$0xff]
    %v75 = vld [vmem:[#allocation2 + $0x178] sm:$0xff]
    %v76 = vld [vmem:[#allocation2 + $0x180] sm:$0xff]
    %v77 = vld [vmem:[#allocation2 + $0x188] sm:$0xff]
    %v78 = vld [vmem:[#allocation2 + $0x190] sm:$0xff]
    %v79 = vld [vmem:[#allocation2 + $0x198] sm:$0xff]
    %v80 = vld [vmem:[#allocation2 + $0x1a0] sm:$0xff]
    %v81 = vld [vmem:[#allocation2 + $0x1a8] sm:$0xff]
    %v82 = vld [vmem:[#allocation2 + $0x1b0] sm:$0xff]
    %v83 = vld [vmem:[#allocation2 + $0x1b8] sm:$0xff]
    %v84 = vld [vmem:[#allocation2 + $0x1c0] sm:$0xff]
    %v85 = vld [vmem:[#allocation2 + $0x1c8] sm:$0xff]
    %v86 = vld [vmem:[#allocation2 + $0x1d0] sm:$0xff]
    %v87 = vld [vmem:[#allocation2 + $0x1d8] sm:$0xff]
    %v88 = vld [vmem:[#allocation2 + $0x1e0] sm:$0xff]
    %v89 = vld [vmem:[#allocation2 + $0x1e8] sm:$0xff]
    %v90 = vld [vmem:[#allocation2 + $0x1f0] sm:$0xff]
    %v91 = vld [vmem:[#allocation2 + $0x1f8] sm:$0xff]
    %v93 = vunpack.c.l.b16 %v27
    %v94 = vunpack.c.h.b16 %v27
    %v95 = vpack.c.b16 %v93, %v93
    %v96 = vpack.c.b16 %v94, %v94
    %v163 = vunpack.c.l.b16 %v28
    %v164 = vunpack.c.h.b16 %v28
    %v165 = vunpack.c.l.b16 %v29
    %v166 = vunpack.c.h.b16 %v29
    %v167 = vunpack.c.l.b16 %v30
    %v168 = vunpack.c.h.b16 %v30
    %v169 = vunpack.c.l.b16 %v31
    %v170 = vunpack.c.h.b16 %v31
    %v171 = vunpack.c.l.b16 %v32
    %v172 = vunpack.c.h.b16 %v32
    %v173 = vunpack.c.l.b16 %v33
    %v174 = vunpack.c.h.b16 %v33
    %v175 = vunpack.c.l.b16 %v34
    %v176 = vunpack.c.h.b16 %v34
    %v177 = vunpack.c.l.b16 %v35
    %v178 = vunpack.c.h.b16 %v35
    %v179 = vunpack.c.l.b16 %v36
    %v180 = vunpack.c.h.b16 %v36
    %v181 = vunpack.c.l.b16 %v37
    %v182 = vunpack.c.h.b16 %v37
    %v183 = vunpack.c.l.b16 %v38
    %v184 = vunpack.c.h.b16 %v38
    %v185 = vunpack.c.l.b16 %v39
    %v186 = vunpack.c.h.b16 %v39
    %v187 = vunpack.c.l.b16 %v40
    %v188 = vunpack.c.h.b16 %v40
    %v189 = vunpack.c.l.b16 %v41
    %v190 = vunpack.c.h.b16 %v41
    %v191 = vunpack.c.l.b16 %v42
    %v192 = vunpack.c.h.b16 %v42
    %v193 = vunpack.c.l.b16 %v43
    %v194 = vunpack.c.h.b16 %v43
    %v195 = vunpack.c.l.b16 %v44
    %v196 = vunpack.c.h.b16 %v44
    %v197 = vunpack.c.l.b16 %v45
    %v198 = vunpack.c.h.b16 %v45
    %v199 = vunpack.c.l.b16 %v46
    %v200 = vunpack.c.h.b16 %v46
    %v201 = vunpack.c.l.b16 %v47
    %v202 = vunpack.c.h.b16 %v47
    %v203 = vunpack.c.l.b16 %v48
    %v204 = vunpack.c.h.b16 %v48
    %v205 = vunpack.c.l.b16 %v49
    %v206 = vunpack.c.h.b16 %v49
    %v207 = vunpack.c.l.b16 %v50
    %v208 = vunpack.c.h.b16 %v50
    %v209 = vunpack.c.l.b16 %v51
    %v210 = vunpack.c.h.b16 %v51
    %v211 = vunpack.c.l.b16 %v52
    %v212 = vunpack.c.h.b16 %v52
    %v213 = vunpack.c.l.b16 %v53
    %v214 = vunpack.c.h.b16 %v53
    %v215 = vunpack.c.l.b16 %v54
    %v216 = vunpack.c.h.b16 %v54
    %v217 = vunpack.c.l.b16 %v55
    %v218 = vunpack.c.h.b16 %v55
    %v219 = vunpack.c.l.b16 %v56
    %v220 = vunpack.c.h.b16 %v56
    %v221 = vunpack.c.l.b16 %v57
    %v222 = vunpack.c.h.b16 %v57
    %v223 = vunpack.c.l.b16 %v58
    %v224 = vunpack.c.h.b16 %v58
    %v225 = vunpack.c.l.b16 %v59
    %v226 = vunpack.c.h.b16 %v59
    %v227 = vunpack.c.l.b16 %v60
    %v228 = vunpack.c.h.b16 %v60
    %v229 = vunpack.c.l.b16 %v61
    %v230 = vunpack.c.h.b16 %v61
    %v231 = vunpack.c.l.b16 %v62
    %v232 = vunpack.c.h.b16 %v62
    %v233 = vunpack.c.l.b16 %v63
    %v234 = vunpack.c.h.b16 %v63
    %v235 = vunpack.c.l.b16 %v64
    %v236 = vunpack.c.h.b16 %v64
    %v237 = vunpack.c.l.b16 %v65
    %v238 = vunpack.c.h.b16 %v65
    %v239 = vunpack.c.l.b16 %v66
    %v240 = vunpack.c.h.b16 %v66
    %v241 = vunpack.c.l.b16 %v67
    %v242 = vunpack.c.h.b16 %v67
    %v243 = vunpack.c.l.b16 %v68
    %v244 = vunpack.c.h.b16 %v68
    %v245 = vunpack.c.l.b16 %v69
    %v246 = vunpack.c.h.b16 %v69
    %v247 = vunpack.c.l.b16 %v70
    %v248 = vunpack.c.h.b16 %v70
    %v249 = vunpack.c.l.b16 %v71
    %v250 = vunpack.c.h.b16 %v71
    %v251 = vunpack.c.l.b16 %v72
    %v252 = vunpack.c.h.b16 %v72
    %v253 = vunpack.c.l.b16 %v73
    %v254 = vunpack.c.h.b16 %v73
    %v255 = vunpack.c.l.b16 %v74
    %v256 = vunpack.c.h.b16 %v74
    %v257 = vunpack.c.l.b16 %v75
    %v258 = vunpack.c.h.b16 %v75
    %v259 = vunpack.c.l.b16 %v76
    %v260 = vunpack.c.h.b16 %v76
    %v261 = vunpack.c.l.b16 %v77
    %v262 = vunpack.c.h.b16 %v77
    %v263 = vunpack.c.l.b16 %v78
    %v264 = vunpack.c.h.b16 %v78
    %v265 = vunpack.c.l.b16 %v79
    %v266 = vunpack.c.h.b16 %v79
    %v267 = vunpack.c.l.b16 %v80
    %v268 = vunpack.c.h.b16 %v80
    %v269 = vunpack.c.l.b16 %v81
    %v270 = vunpack.c.h.b16 %v81
    %v271 = vunpack.c.l.b16 %v82
    %v272 = vunpack.c.h.b16 %v82
    %v273 = vunpack.c.l.b16 %v83
    %v274 = vunpack.c.h.b16 %v83
    %v275 = vunpack.c.l.b16 %v84
    %v276 = vunpack.c.h.b16 %v84
    %v277 = vunpack.c.l.b16 %v85
    %v278 = vunpack.c.h.b16 %v85
    %v279 = vunpack.c.l.b16 %v86
    %v280 = vunpack.c.h.b16 %v86
    %v281 = vunpack.c.l.b16 %v87
    %v282 = vunpack.c.h.b16 %v87
    %v283 = vunpack.c.l.b16 %v88
    %v284 = vunpack.c.h.b16 %v88
    %v285 = vunpack.c.l.b16 %v89
    %v286 = vunpack.c.h.b16 %v89
    %v287 = vunpack.c.l.b16 %v90
    %v288 = vunpack.c.h.b16 %v90
    %v289 = vunpack.c.l.b16 %v91
    %v290 = vunpack.c.h.b16 %v91
    %v291 = vpack.c.b16 %v167, %v163
    %v292 = vpack.c.b16 %v168, %v164
    %v293 = vpack.c.b16 %v169, %v165
    %v294 = vpack.c.b16 %v170, %v166
    %v295 = vpack.c.b16 %v175, %v171
    %v296 = vpack.c.b16 %v176, %v172
    %v297 = vpack.c.b16 %v177, %v173
    %v298 = vpack.c.b16 %v178, %v174
    %v299 = vpack.c.b16 %v183, %v179
    %v300 = vpack.c.b16 %v184, %v180
    %v301 = vpack.c.b16 %v185, %v181
    %v302 = vpack.c.b16 %v186, %v182
    %v303 = vpack.c.b16 %v191, %v187
    %v304 = vpack.c.b16 %v192, %v188
    %v305 = vpack.c.b16 %v193, %v189
    %v306 = vpack.c.b16 %v194, %v190
    %v307 = vpack.c.b16 %v199, %v195
    %v308 = vpack.c.b16 %v200, %v196
    %v309 = vpack.c.b16 %v201, %v197
    %v310 = vpack.c.b16 %v202, %v198
    %v311 = vpack.c.b16 %v207, %v203
    %v312 = vpack.c.b16 %v208, %v204
    %v313 = vpack.c.b16 %v209, %v205
    %v314 = vpack.c.b16 %v210, %v206
    %v315 = vpack.c.b16 %v215, %v211
    %v316 = vpack.c.b16 %v216, %v212
    %v317 = vpack.c.b16 %v217, %v213
    %v318 = vpack.c.b16 %v218, %v214
    %v319 = vpack.c.b16 %v223, %v219
    %v320 = vpack.c.b16 %v224, %v220
    %v321 = vpack.c.b16 %v225, %v221
    %v322 = vpack.c.b16 %v226, %v222
    %v323 = vpack.c.b16 %v231, %v227
    %v324 = vpack.c.b16 %v232, %v228
    %v325 = vpack.c.b16 %v233, %v229
    %v326 = vpack.c.b16 %v234, %v230
    %v327 = vpack.c.b16 %v239, %v235
    %v328 = vpack.c.b16 %v240, %v236
    %v329 = vpack.c.b16 %v241, %v237
    %v330 = vpack.c.b16 %v242, %v238
    %v331 = vpack.c.b16 %v247, %v243
    %v332 = vpack.c.b16 %v248, %v244
    %v333 = vpack.c.b16 %v249, %v245
    %v334 = vpack.c.b16 %v250, %v246
    %v335 = vpack.c.b16 %v255, %v251
    %v336 = vpack.c.b16 %v256, %v252
    %v337 = vpack.c.b16 %v257, %v253
    %v338 = vpack.c.b16 %v258, %v254
    %v339 = vpack.c.b16 %v263, %v259
    %v340 = vpack.c.b16 %v264, %v260
    %v341 = vpack.c.b16 %v265, %v261
    %v342 = vpack.c.b16 %v266, %v262
    %v343 = vpack.c.b16 %v271, %v267
    %v344 = vpack.c.b16 %v272, %v268
    %v345 = vpack.c.b16 %v273, %v269
    %v346 = vpack.c.b16 %v274, %v270
    %v347 = vpack.c.b16 %v279, %v275
    %v348 = vpack.c.b16 %v280, %v276
    %v349 = vpack.c.b16 %v281, %v277
    %v350 = vpack.c.b16 %v282, %v278
    %v351 = vpack.c.b16 %v287, %v283
    %v352 = vpack.c.b16 %v288, %v284
    %v353 = vpack.c.b16 %v289, %v285
    %v354 = vpack.c.b16 %v290, %v286
    %419 = vmatpush.bf16.msra.mxu0 %v319
    %420 = vmatpush.bf16.msra.mxu0 %v315
    %421 = vmatpush.bf16.msra.mxu0 %v311
    %422 = vmatpush.bf16.msra.mxu0 %v307
    %423 = vmatpush.bf16.msra.mxu0 %v303
    %424 = vmatpush.bf16.msra.mxu0 %v299
    %425 = vmatpush.bf16.msra.mxu0 %v295
    %426 = vmatpush.bf16.msra.mxu0 %v291
    %427 = vmatmul.bf16.gmra.mxu0 %v95
    %v428 = vpop.f32.mrf.mxu0
    %v429 = vadd.f32 0.0, %v428
    %v430 = vpop.f32.mrf.mxu0
    %431 = vdwg.mxu0
    %432 = vmatpush.bf16.msra.mxu0 %v351
    %433 = vmatpush.bf16.msra.mxu0 %v347
    %434 = vmatpush.bf16.msra.mxu0 %v343
    %435 = vmatpush.bf16.msra.mxu0 %v339
    %436 = vmatpush.bf16.msra.mxu0 %v335
    %437 = vmatpush.bf16.msra.mxu0 %v331
    %438 = vmatpush.bf16.msra.mxu0 %v327
    %439 = vmatpush.bf16.msra.mxu0 %v323
    %440 = vmatmul.bf16.gmra.mxu0 %v96
    %v441 = vpop.f32.mrf.mxu0
    %v442 = vadd.f32 %v429, %v441
    %v443 = vpop.f32.mrf.mxu0
    %444 = vdwg.mxu0
    %445 = vmatpush.bf16.msra.mxu0 %v320
    %446 = vmatpush.bf16.msra.mxu0 %v316
    %447 = vmatpush.bf16.msra.mxu0 %v312
    %448 = vmatpush.bf16.msra.mxu0 %v308
    %449 = vmatpush.bf16.msra.mxu0 %v304
    %450 = vmatpush.bf16.msra.mxu0 %v300
    %451 = vmatpush.bf16.msra.mxu0 %v296
    %452 = vmatpush.bf16.msra.mxu0 %v292
    %453 = vmatmul.bf16.gmra.mxu0 %v95
    %v454 = vpop.f32.mrf.mxu0
    %v455 = vadd.f32 0.0, %v454
    %v456 = vpop.f32.mrf.mxu0
    %457 = vdwg.mxu0
    %458 = vmatpush.bf16.msra.mxu0 %v352
    %459 = vmatpush.bf16.msra.mxu0 %v348
    %460 = vmatpush.bf16.msra.mxu0 %v344
    %461 = vmatpush.bf16.msra.mxu0 %v340
    %462 = vmatpush.bf16.msra.mxu0 %v336
    %463 = vmatpush.bf16.msra.mxu0 %v332
    %464 = vmatpush.bf16.msra.mxu0 %v328
    %465 = vmatpush.bf16.msra.mxu0 %v324
    %466 = vmatmul.bf16.gmra.mxu0 %v96
    %v467 = vpop.f32.mrf.mxu0
    %v468 = vadd.f32 %v455, %v467
    %v469 = vpop.f32.mrf.mxu0
    %470 = vdwg.mxu0
    %471 = vmatpush.bf16.msra.mxu0 %v321
    %472 = vmatpush.bf16.msra.mxu0 %v317
    %473 = vmatpush.bf16.msra.mxu0 %v313
    %474 = vmatpush.bf16.msra.mxu0 %v309
    %475 = vmatpush.bf16.msra.mxu0 %v305
    %476 = vmatpush.bf16.msra.mxu0 %v301
    %477 = vmatpush.bf16.msra.mxu0 %v297
    %478 = vmatpush.bf16.msra.mxu0 %v293
    %479 = vmatmul.bf16.gmra.mxu0 %v95
    %v480 = vpop.f32.mrf.mxu0
    %v481 = vadd.f32 0.0, %v480
    %v482 = vpop.f32.mrf.mxu0
    %483 = vdwg.mxu0
    %484 = vmatpush.bf16.msra.mxu0 %v353
    %485 = vmatpush.bf16.msra.mxu0 %v349
    %486 = vmatpush.bf16.msra.mxu0 %v345
    %487 = vmatpush.bf16.msra.mxu0 %v341
    %488 = vmatpush.bf16.msra.mxu0 %v337
    %489 = vmatpush.bf16.msra.mxu0 %v333
    %490 = vmatpush.bf16.msra.mxu0 %v329
    %491 = vmatpush.bf16.msra.mxu0 %v325
    %492 = vmatmul.bf16.gmra.mxu0 %v96
    %v493 = vpop.f32.mrf.mxu0
    %v494 = vadd.f32 %v481, %v493
    %v495 = vpop.f32.mrf.mxu0
    %496 = vdwg.mxu0
    %497 = vmatpush.bf16.msra.mxu0 %v322
    %498 = vmatpush.bf16.msra.mxu0 %v318
    %499 = vmatpush.bf16.msra.mxu0 %v314
    %500 = vmatpush.bf16.msra.mxu0 %v310
    %501 = vmatpush.bf16.msra.mxu0 %v306
    %502 = vmatpush.bf16.msra.mxu0 %v302
    %503 = vmatpush.bf16.msra.mxu0 %v298
    %504 = vmatpush.bf16.msra.mxu0 %v294
    %505 = vmatmul.bf16.gmra.mxu0 %v95
    %v506 = vpop.f32.mrf.mxu0
    %v507 = vadd.f32 0.0, %v506
    %v508 = vpop.f32.mrf.mxu0
    %509 = vdwg.mxu0
    %510 = vmatpush.bf16.msra.mxu0 %v354
    %511 = vmatpush.bf16.msra.mxu0 %v350
    %512 = vmatpush.bf16.msra.mxu0 %v346
    %513 = vmatpush.bf16.msra.mxu0 %v342
    %514 = vmatpush.bf16.msra.mxu0 %v338
    %515 = vmatpush.bf16.msra.mxu0 %v334
    %516 = vmatpush.bf16.msra.mxu0 %v330
    %517 = vmatpush.bf16.msra.mxu0 %v326
    %518 = vmatmul.bf16.gmra.mxu0 %v96
    %v519 = vpop.f32.mrf.mxu0
    %v520 = vadd.f32 %v507, %v519
    %v521 = vpop.f32.mrf.mxu0
    %522 = vdwg.mxu0
    %v523 = vld [vmem:[#allocation2 + $0x200] sm:$0xf]
    %v524 = vld [vmem:[#allocation2 + $0x210] sm:$0xf]
    %v525 = vld [vmem:[#allocation2 + $0x220] sm:$0xf]
    %v526 = vld [vmem:[#allocation2 + $0x230] sm:$0xf]
    %v527 = vld [vmem:[#allocation2 + $0x240] sm:$0xf]
    %v528 = vld [vmem:[#allocation2 + $0x250] sm:$0xf]
    %v529 = vld [vmem:[#allocation2 + $0x260] sm:$0xf]
    %v530 = vld [vmem:[#allocation2 + $0x270] sm:$0xf]
    %v531 = vld [vmem:[#allocation2 + $0x280] sm:$0xf]
    %v532 = vld [vmem:[#allocation2 + $0x290] sm:$0xf]
    %v533 = vld [vmem:[#allocation2 + $0x2a0] sm:$0xf]
    %v534 = vld [vmem:[#allocation2 + $0x2b0] sm:$0xf]
    %v535 = vld [vmem:[#allocation2 + $0x2c0] sm:$0xf]
    %v536 = vld [vmem:[#allocation2 + $0x2d0] sm:$0xf]
    %v537 = vld [vmem:[#allocation2 + $0x2e0] sm:$0xf]
    %v538 = vld [vmem:[#allocation2 + $0x2f0] sm:$0xf]
    %v539 = vld [vmem:[#allocation2 + $0x300] sm:$0xf]
    %v540 = vld [vmem:[#allocation2 + $0x310] sm:$0xf]
    %v541 = vld [vmem:[#allocation2 + $0x320] sm:$0xf]
    %v542 = vld [vmem:[#allocation2 + $0x330] sm:$0xf]
    %v543 = vld [vmem:[#allocation2 + $0x340] sm:$0xf]
    %v544 = vld [vmem:[#allocation2 + $0x350] sm:$0xf]
    %v545 = vld [vmem:[#allocation2 + $0x360] sm:$0xf]
    %v546 = vld [vmem:[#allocation2 + $0x370] sm:$0xf]
    %v547 = vld [vmem:[#allocation2 + $0x380] sm:$0xf]
    %v548 = vld [vmem:[#allocation2 + $0x390] sm:$0xf]
    %v549 = vld [vmem:[#allocation2 + $0x3a0] sm:$0xf]
    %v550 = vld [vmem:[#allocation2 + $0x3b0] sm:$0xf]
    %v551 = vld [vmem:[#allocation2 + $0x3c0] sm:$0xf]
    %v552 = vld [vmem:[#allocation2 + $0x3d0] sm:$0xf]
    %v553 = vld [vmem:[#allocation2 + $0x3e0] sm:$0xf]
    %v554 = vld [vmem:[#allocation2 + $0x3f0] sm:$0xf]
    %v555 = vld [vmem:[#allocation2 + $0x400] sm:$0xf]
    %v556 = vld [vmem:[#allocation2 + $0x410] sm:$0xf]
    %v557 = vld [vmem:[#allocation2 + $0x420] sm:$0xf]
    %v558 = vld [vmem:[#allocation2 + $0x430] sm:$0xf]
    %v559 = vld [vmem:[#allocation2 + $0x440] sm:$0xf]
    %v560 = vld [vmem:[#allocation2 + $0x450] sm:$0xf]
    %v561 = vld [vmem:[#allocation2 + $0x460] sm:$0xf]
    %v562 = vld [vmem:[#allocation2 + $0x470] sm:$0xf]
    %v563 = vld [vmem:[#allocation2 + $0x480] sm:$0xf]
    %v564 = vld [vmem:[#allocation2 + $0x490] sm:$0xf]
    %v565 = vld [vmem:[#allocation2 + $0x4a0] sm:$0xf]
    %v566 = vld [vmem:[#allocation2 + $0x4b0] sm:$0xf]
    %v567 = vld [vmem:[#allocation2 + $0x4c0] sm:$0xf]
    %v568 = vld [vmem:[#allocation2 + $0x4d0] sm:$0xf]
    %v569 = vld [vmem:[#allocation2 + $0x4e0] sm:$0xf]
    %v570 = vld [vmem:[#allocation2 + $0x4f0] sm:$0xf]
    %v571 = vld [vmem:[#allocation2 + $0x500] sm:$0xf]
    %v572 = vld [vmem:[#allocation2 + $0x510] sm:$0xf]
    %v573 = vld [vmem:[#allocation2 + $0x520] sm:$0xf]
    %v574 = vld [vmem:[#allocation2 + $0x530] sm:$0xf]
    %v575 = vld [vmem:[#allocation2 + $0x540] sm:$0xf]
    %v576 = vld [vmem:[#allocation2 + $0x550] sm:$0xf]
    %v577 = vld [vmem:[#allocation2 + $0x560] sm:$0xf]
    %v578 = vld [vmem:[#allocation2 + $0x570] sm:$0xf]
    %v579 = vld [vmem:[#allocation2 + $0x580] sm:$0xf]
    %v580 = vld [vmem:[#allocation2 + $0x590] sm:$0xf]
    %v581 = vld [vmem:[#allocation2 + $0x5a0] sm:$0xf]
    %v582 = vld [vmem:[#allocation2 + $0x5b0] sm:$0xf]
    %v583 = vld [vmem:[#allocation2 + $0x5c0] sm:$0xf]
    %v584 = vld [vmem:[#allocation2 + $0x5d0] sm:$0xf]
    %v585 = vld [vmem:[#allocation2 + $0x5e0] sm:$0xf]
    %v586 = vld [vmem:[#allocation2 + $0x5f0] sm:$0xf]
    %v587 = vunpack.c.l.bf16 %v523
    %v588 = vunpack.c.l.bf16 %v524
    %v589 = vunpack.c.l.bf16 %v525
    %v590 = vunpack.c.l.bf16 %v526
    %v591 = vunpack.c.l.bf16 %v527
    %v592 = vunpack.c.l.bf16 %v528
    %v593 = vunpack.c.l.bf16 %v529
    %v594 = vunpack.c.l.bf16 %v530
    %v595 = vunpack.c.l.bf16 %v531
    %v596 = vunpack.c.l.bf16 %v532
    %v597 = vunpack.c.l.bf16 %v533
    %v598 = vunpack.c.l.bf16 %v534
    %v599 = vunpack.c.l.bf16 %v535
    %v600 = vunpack.c.l.bf16 %v536
    %v601 = vunpack.c.l.bf16 %v537
    %v602 = vunpack.c.l.bf16 %v538
    %v603 = vunpack.c.l.bf16 %v539
    %v604 = vunpack.c.l.bf16 %v540
    %v605 = vunpack.c.l.bf16 %v541
    %v606 = vunpack.c.l.bf16 %v542
    %v607 = vunpack.c.l.bf16 %v543
    %v608 = vunpack.c.l.bf16 %v544
    %v609 = vunpack.c.l.bf16 %v545
    %v610 = vunpack.c.l.bf16 %v546
    %v611 = vunpack.c.l.bf16 %v547
    %v612 = vunpack.c.l.bf16 %v548
    %v613 = vunpack.c.l.bf16 %v549
    %v614 = vunpack.c.l.bf16 %v550
    %v615 = vunpack.c.l.bf16 %v551
    %v616 = vunpack.c.l.bf16 %v552
    %v617 = vunpack.c.l.bf16 %v553
    %v618 = vunpack.c.l.bf16 %v554
    %v619 = vunpack.c.l.bf16 %v555
    %v620 = vunpack.c.l.bf16 %v556
    %v621 = vunpack.c.l.bf16 %v557
    %v622 = vunpack.c.l.bf16 %v558
    %v623 = vunpack.c.l.bf16 %v559
    %v624 = vunpack.c.l.bf16 %v560
    %v625 = vunpack.c.l.bf16 %v561
    %v626 = vunpack.c.l.bf16 %v562
    %v627 = vunpack.c.l.bf16 %v563
    %v628 = vunpack.c.l.bf16 %v564
    %v629 = vunpack.c.l.bf16 %v565
    %v630 = vunpack.c.l.bf16 %v566
    %v631 = vunpack.c.l.bf16 %v567
    %v632 = vunpack.c.l.bf16 %v568
    %v633 = vunpack.c.l.bf16 %v569
    %v634 = vunpack.c.l.bf16 %v570
    %v635 = vunpack.c.l.bf16 %v571
    %v636 = vunpack.c.l.bf16 %v572
    %v637 = vunpack.c.l.bf16 %v573
    %v638 = vunpack.c.l.bf16 %v574
    %v639 = vunpack.c.l.bf16 %v575
    %v640 = vunpack.c.l.bf16 %v576
    %v641 = vunpack.c.l.bf16 %v577
    %v642 = vunpack.c.l.bf16 %v578
    %v643 = vunpack.c.l.bf16 %v579
    %v644 = vunpack.c.l.bf16 %v580
    %v645 = vunpack.c.l.bf16 %v581
    %v646 = vunpack.c.l.bf16 %v582
    %v647 = vunpack.c.l.bf16 %v583
    %v648 = vunpack.c.l.bf16 %v584
    %v649 = vunpack.c.l.bf16 %v585
    %v650 = vunpack.c.l.bf16 %v586
    %651 = vmatpush.msra.mxu0 %v602
    %652 = vmatpush.msra.mxu0 %v601
    %653 = vmatpush.msra.mxu0 %v600
    %654 = vmatpush.msra.mxu0 %v599
    %655 = vmatpush.msra.mxu0 %v598
    %656 = vmatpush.msra.mxu0 %v597
    %657 = vmatpush.msra.mxu0 %v596
    %658 = vmatpush.msra.mxu0 %v595
    %659 = vmatpush.msra.mxu0 %v594
    %660 = vmatpush.msra.mxu0 %v593
    %661 = vmatpush.msra.mxu0 %v592
    %662 = vmatpush.msra.mxu0 %v591
    %663 = vmatpush.msra.mxu0 %v590
    %664 = vmatpush.msra.mxu0 %v589
    %665 = vmatpush.msra.mxu0 %v588
    %666 = vmatpush.msra.mxu0 %v587
    %667 = vmatmul.f32.gmra.mxu0 %v442
    %v668 = vpop.f32.mrf.mxu0
    %v669 = vadd.f32 0.0, %v668
    %670 = vdwg.mxu0
    %671 = vmatpush.msra.mxu0 %v618
    %672 = vmatpush.msra.mxu0 %v617
    %673 = vmatpush.msra.mxu0 %v616
    %674 = vmatpush.msra.mxu0 %v615
    %675 = vmatpush.msra.mxu0 %v614
    %676 = vmatpush.msra.mxu0 %v613
    %677 = vmatpush.msra.mxu0 %v612
    %678 = vmatpush.msra.mxu0 %v611
    %679 = vmatpush.msra.mxu0 %v610
    %680 = vmatpush.msra.mxu0 %v609
    %681 = vmatpush.msra.mxu0 %v608
    %682 = vmatpush.msra.mxu0 %v607
    %683 = vmatpush.msra.mxu0 %v606
    %684 = vmatpush.msra.mxu0 %v605
    %685 = vmatpush.msra.mxu0 %v604
    %686 = vmatpush.msra.mxu0 %v603
    %687 = vmatmul.f32.gmra.mxu0 %v468
    %v688 = vpop.f32.mrf.mxu0
    %v689 = vadd.f32 %v669, %v688
    %690 = vdwg.mxu0
    %691 = vmatpush.msra.mxu0 %v634
    %692 = vmatpush.msra.mxu0 %v633
    %693 = vmatpush.msra.mxu0 %v632
    %694 = vmatpush.msra.mxu0 %v631
    %695 = vmatpush.msra.mxu0 %v630
    %696 = vmatpush.msra.mxu0 %v629
    %697 = vmatpush.msra.mxu0 %v628
    %698 = vmatpush.msra.mxu0 %v627
    %699 = vmatpush.msra.mxu0 %v626
    %700 = vmatpush.msra.mxu0 %v625
    %701 = vmatpush.msra.mxu0 %v624
    %702 = vmatpush.msra.mxu0 %v623
    %703 = vmatpush.msra.mxu0 %v622
    %704 = vmatpush.msra.mxu0 %v621
    %705 = vmatpush.msra.mxu0 %v620
    %706 = vmatpush.msra.mxu0 %v619
    %707 = vmatmul.f32.gmra.mxu0 %v494
    %v708 = vpop.f32.mrf.mxu0
    %v709 = vadd.f32 %v689, %v708
    %710 = vdwg.mxu0
    %711 = vmatpush.msra.mxu0 %v650
    %712 = vmatpush.msra.mxu0 %v649
    %713 = vmatpush.msra.mxu0 %v648
    %714 = vmatpush.msra.mxu0 %v647
    %715 = vmatpush.msra.mxu0 %v646
    %716 = vmatpush.msra.mxu0 %v645
    %717 = vmatpush.msra.mxu0 %v644
    %718 = vmatpush.msra.mxu0 %v643
    %719 = vmatpush.msra.mxu0 %v642
    %720 = vmatpush.msra.mxu0 %v641
    %721 = vmatpush.msra.mxu0 %v640
    %722 = vmatpush.msra.mxu0 %v639
    %723 = vmatpush.msra.mxu0 %v638
    %724 = vmatpush.msra.mxu0 %v637
    %725 = vmatpush.msra.mxu0 %v636
    %726 = vmatpush.msra.mxu0 %v635
    %727 = vmatmul.f32.gmra.mxu0 %v520
    %v728 = vpop.f32.mrf.mxu0
    %v729 = vadd.f32 %v709, %v728
    %730 = vdwg.mxu0
    %v731 = vmul.f32 %v442, %v442
    %v732 = vmul.f32 %v468, %v468
    %v733 = vmul.f32 %v494, %v494
    %v734 = vmul.f32 %v520, %v520
    %735 = vmatpush.msra.mxu0 %v602
    %736 = vmatpush.msra.mxu0 %v601
    %737 = vmatpush.msra.mxu0 %v600
    %738 = vmatpush.msra.mxu0 %v599
    %739 = vmatpush.msra.mxu0 %v598
    %740 = vmatpush.msra.mxu0 %v597
    %741 = vmatpush.msra.mxu0 %v596
    %742 = vmatpush.msra.mxu0 %v595
    %743 = vmatpush.msra.mxu0 %v594
    %744 = vmatpush.msra.mxu0 %v593
    %745 = vmatpush.msra.mxu0 %v592
    %746 = vmatpush.msra.mxu0 %v591
    %747 = vmatpush.msra.mxu0 %v590
    %748 = vmatpush.msra.mxu0 %v589
    %749 = vmatpush.msra.mxu0 %v588
    %750 = vmatpush.msra.mxu0 %v587
    %751 = vmatmul.f32.gmra.mxu0 %v731
    %v752 = vpop.f32.mrf.mxu0
    %v753 = vadd.f32 0.0, %v752
    %754 = vdwg.mxu0
    %755 = vmatpush.msra.mxu0 %v618
    %756 = vmatpush.msra.mxu0 %v617
    %757 = vmatpush.msra.mxu0 %v616
    %758 = vmatpush.msra.mxu0 %v615
    %759 = vmatpush.msra.mxu0 %v614
    %760 = vmatpush.msra.mxu0 %v613
    %761 = vmatpush.msra.mxu0 %v612
    %762 = vmatpush.msra.mxu0 %v611
    %763 = vmatpush.msra.mxu0 %v610
    %764 = vmatpush.msra.mxu0 %v609
    %765 = vmatpush.msra.mxu0 %v608
    %766 = vmatpush.msra.mxu0 %v607
    %767 = vmatpush.msra.mxu0 %v606
    %768 = vmatpush.msra.mxu0 %v605
    %769 = vmatpush.msra.mxu0 %v604
    %770 = vmatpush.msra.mxu0 %v603
    %771 = vmatmul.f32.gmra.mxu0 %v732
    %v772 = vpop.f32.mrf.mxu0
    %v773 = vadd.f32 %v753, %v772
    %774 = vdwg.mxu0
    %775 = vmatpush.msra.mxu0 %v634
    %776 = vmatpush.msra.mxu0 %v633
    %777 = vmatpush.msra.mxu0 %v632
    %778 = vmatpush.msra.mxu0 %v631
    %779 = vmatpush.msra.mxu0 %v630
    %780 = vmatpush.msra.mxu0 %v629
    %781 = vmatpush.msra.mxu0 %v628
    %782 = vmatpush.msra.mxu0 %v627
    %783 = vmatpush.msra.mxu0 %v626
    %784 = vmatpush.msra.mxu0 %v625
    %785 = vmatpush.msra.mxu0 %v624
    %786 = vmatpush.msra.mxu0 %v623
    %787 = vmatpush.msra.mxu0 %v622
    %788 = vmatpush.msra.mxu0 %v621
    %789 = vmatpush.msra.mxu0 %v620
    %790 = vmatpush.msra.mxu0 %v619
    %791 = vmatmul.f32.gmra.mxu0 %v733
    %v792 = vpop.f32.mrf.mxu0
    %v793 = vadd.f32 %v773, %v792
    %794 = vdwg.mxu0
    %795 = vmatpush.msra.mxu0 %v650
    %796 = vmatpush.msra.mxu0 %v649
    %797 = vmatpush.msra.mxu0 %v648
    %798 = vmatpush.msra.mxu0 %v647
    %799 = vmatpush.msra.mxu0 %v646
    %800 = vmatpush.msra.mxu0 %v645
    %801 = vmatpush.msra.mxu0 %v644
    %802 = vmatpush.msra.mxu0 %v643
    %803 = vmatpush.msra.mxu0 %v642
    %804 = vmatpush.msra.mxu0 %v641
    %805 = vmatpush.msra.mxu0 %v640
    %806 = vmatpush.msra.mxu0 %v639
    %807 = vmatpush.msra.mxu0 %v638
    %808 = vmatpush.msra.mxu0 %v637
    %809 = vmatpush.msra.mxu0 %v636
    %810 = vmatpush.msra.mxu0 %v635
    %811 = vmatmul.f32.gmra.mxu0 %v734
    %v812 = vpop.f32.mrf.mxu0
    %v813 = vadd.f32 %v793, %v812
    %814 = vdwg.mxu0
    %v815 = vmul.f32 %v729, %v729
    %v816 = vsub.f32 %v813, %v815
    %v817 = vmax.f32 %v816, 0.0
    %v818 = vadd.f32 %v817, 1e-05
    %v819 = vrsqrt.pop %v818
    %v820 = vmul.f32 %v819, %v818
    %v821 = vmul.f32 %v820, %v819
    %v822 = vmul.f32 0.5, %v821
    %v823 = vsub.f32 1.5, %v822
    %v824 = vmul.f32 %v819, %v823
    %vm825 = vweird.f32 %v818
    %vm826 = vweird.f32 %v819
    %vm827 = vmor %vm825, %vm826
    %v828 = vsel %vm827, %v819, %v824
    %v829 = vsub.f32 0.0, %v729
    %v830 = vmul.f32 %v829, %v828
    %v831 = vld [vmem:[#allocation2 + $0x600] sm:$0xff]
    %v832 = vld [vmem:[#allocation2 + $0x608] sm:$0xff]
    %v833 = vld [vmem:[#allocation2 + $0x610] sm:$0xff]
    %v834 = vld [vmem:[#allocation2 + $0x618] sm:$0xff]
    %v835 = vld [vmem:[#allocation2 + $0x620] sm:$0xff]
    %v836 = vld [vmem:[#allocation2 + $0x628] sm:$0xff]
    %v837 = vld [vmem:[#allocation2 + $0x630] sm:$0xff]
    %v838 = vld [vmem:[#allocation2 + $0x638] sm:$0xff]
    %v839 = vld [vmem:[#allocation2 + $0x640] sm:$0xff]
    %v840 = vld [vmem:[#allocation2 + $0x648] sm:$0xff]
    %v841 = vld [vmem:[#allocation2 + $0x650] sm:$0xff]
    %v842 = vld [vmem:[#allocation2 + $0x658] sm:$0xff]
    %v843 = vld [vmem:[#allocation2 + $0x660] sm:$0xff]
    %v844 = vld [vmem:[#allocation2 + $0x668] sm:$0xff]
    %v845 = vld [vmem:[#allocation2 + $0x670] sm:$0xff]
    %v846 = vld [vmem:[#allocation2 + $0x678] sm:$0xff]
    %v847 = vld [vmem:[#allocation2 + $0x680] sm:$0xff]
    %v848 = vld [vmem:[#allocation2 + $0x688] sm:$0xff]
    %v849 = vld [vmem:[#allocation2 + $0x690] sm:$0xff]
    %v850 = vld [vmem:[#allocation2 + $0x698] sm:$0xff]
    %v851 = vld [vmem:[#allocation2 + $0x6a0] sm:$0xff]
    %v852 = vld [vmem:[#allocation2 + $0x6a8] sm:$0xff]
    %v853 = vld [vmem:[#allocation2 + $0x6b0] sm:$0xff]
    %v854 = vld [vmem:[#allocation2 + $0x6b8] sm:$0xff]
    %v855 = vld [vmem:[#allocation2 + $0x6c0] sm:$0xff]
    %v856 = vld [vmem:[#allocation2 + $0x6c8] sm:$0xff]
    %v857 = vld [vmem:[#allocation2 + $0x6d0] sm:$0xff]
    %v858 = vld [vmem:[#allocation2 + $0x6d8] sm:$0xff]
    %v859 = vld [vmem:[#allocation2 + $0x6e0] sm:$0xff]
    %v860 = vld [vmem:[#allocation2 + $0x6e8] sm:$0xff]
    %v861 = vld [vmem:[#allocation2 + $0x6f0] sm:$0xff]
    %v862 = vld [vmem:[#allocation2 + $0x6f8] sm:$0xff]
    %v863 = vunpack.c.l.bf16 %v831
    %v864 = vunpack.c.h.bf16 %v831
    %v865 = vunpack.c.l.bf16 %v832
    %v866 = vunpack.c.h.bf16 %v832
    %v867 = vunpack.c.l.bf16 %v833
    %v868 = vunpack.c.h.bf16 %v833
    %v869 = vunpack.c.l.bf16 %v834
    %v870 = vunpack.c.h.bf16 %v834
    %v871 = vunpack.c.l.bf16 %v835
    %v872 = vunpack.c.h.bf16 %v835
    %v873 = vunpack.c.l.bf16 %v836
    %v874 = vunpack.c.h.bf16 %v836
    %v875 = vunpack.c.l.bf16 %v837
    %v876 = vunpack.c.h.bf16 %v837
    %v877 = vunpack.c.l.bf16 %v838
    %v878 = vunpack.c.h.bf16 %v838
    %v879 = vunpack.c.l.bf16 %v839
    %v880 = vunpack.c.h.bf16 %v839
    %v881 = vunpack.c.l.bf16 %v840
    %v882 = vunpack.c.h.bf16 %v840
    %v883 = vunpack.c.l.bf16 %v841
    %v884 = vunpack.c.h.bf16 %v841
    %v885 = vunpack.c.l.bf16 %v842
    %v886 = vunpack.c.h.bf16 %v842
    %v887 = vunpack.c.l.bf16 %v843
    %v888 = vunpack.c.h.bf16 %v843
    %v889 = vunpack.c.l.bf16 %v844
    %v890 = vunpack.c.h.bf16 %v844
    %v891 = vunpack.c.l.bf16 %v845
    %v892 = vunpack.c.h.bf16 %v845
    %v893 = vunpack.c.l.bf16 %v846
    %v894 = vunpack.c.h.bf16 %v846
    %v895 = vunpack.c.l.bf16 %v847
    %v896 = vunpack.c.h.bf16 %v847
    %v897 = vunpack.c.l.bf16 %v848
    %v898 = vunpack.c.h.bf16 %v848
    %v899 = vunpack.c.l.bf16 %v849
    %v900 = vunpack.c.h.bf16 %v849
    %v901 = vunpack.c.l.bf16 %v850
    %v902 = vunpack.c.h.bf16 %v850
    %v903 = vunpack.c.l.bf16 %v851
    %v904 = vunpack.c.h.bf16 %v851
    %v905 = vunpack.c.l.bf16 %v852
    %v906 = vunpack.c.h.bf16 %v852
    %v907 = vunpack.c.l.bf16 %v853
    %v908 = vunpack.c.h.bf16 %v853
    %v909 = vunpack.c.l.bf16 %v854
    %v910 = vunpack.c.h.bf16 %v854
    %v911 = vunpack.c.l.bf16 %v855
    %v912 = vunpack.c.h.bf16 %v855
    %v913 = vunpack.c.l.bf16 %v856
    %v914 = vunpack.c.h.bf16 %v856
    %v915 = vunpack.c.l.bf16 %v857
    %v916 = vunpack.c.h.bf16 %v857
    %v917 = vunpack.c.l.bf16 %v858
    %v918 = vunpack.c.h.bf16 %v858
    %v919 = vunpack.c.l.bf16 %v859
    %v920 = vunpack.c.h.bf16 %v859
    %v921 = vunpack.c.l.bf16 %v860
    %v922 = vunpack.c.h.bf16 %v860
    %v923 = vunpack.c.l.bf16 %v861
    %v924 = vunpack.c.h.bf16 %v861
    %v925 = vunpack.c.l.bf16 %v862
    %v926 = vunpack.c.h.bf16 %v862
    %927 = vmatpush.msra.mxu0 %v923
    %928 = vmatpush.msra.mxu0 %v919
    %929 = vmatpush.msra.mxu0 %v915
    %930 = vmatpush.msra.mxu0 %v911
    %931 = vmatpush.msra.mxu0 %v907
    %932 = vmatpush.msra.mxu0 %v903
    %933 = vmatpush.msra.mxu0 %v899
    %934 = vmatpush.msra.mxu0 %v895
    %935 = vmatpush.msra.mxu0 %v891
    %936 = vmatpush.msra.mxu0 %v887
    %937 = vmatpush.msra.mxu0 %v883
    %938 = vmatpush.msra.mxu0 %v879
    %939 = vmatpush.msra.mxu0 %v875
    %940 = vmatpush.msra.mxu0 %v871
    %941 = vmatpush.msra.mxu0 %v867
    %942 = vmatpush.msra.mxu0 %v863
    %943 = vmatmul.f32.gmra.mxu0 %v828
    %v944 = vpop.f32.mrf.mxu0
    %v945 = vadd.f32 0.0, %v944
    %946 = vmatmul.f32.gmra.mxu0 %v830
    %v947 = vpop.f32.mrf.mxu0
    %v948 = vadd.f32 0.0, %v947
    %949 = vdwg.mxu0
    %950 = vmatpush.msra.mxu0 %v924
    %951 = vmatpush.msra.mxu0 %v920
    %952 = vmatpush.msra.mxu0 %v916
    %953 = vmatpush.msra.mxu0 %v912
    %954 = vmatpush.msra.mxu0 %v908
    %955 = vmatpush.msra.mxu0 %v904
    %956 = vmatpush.msra.mxu0 %v900
    %957 = vmatpush.msra.mxu0 %v896
    %958 = vmatpush.msra.mxu0 %v892
    %959 = vmatpush.msra.mxu0 %v888
    %960 = vmatpush.msra.mxu0 %v884
    %961 = vmatpush.msra.mxu0 %v880
    %962 = vmatpush.msra.mxu0 %v876
    %963 = vmatpush.msra.mxu0 %v872
    %964 = vmatpush.msra.mxu0 %v868
    %965 = vmatpush.msra.mxu0 %v864
    %966 = vmatmul.f32.gmra.mxu0 %v828
    %v967 = vpop.f32.mrf.mxu0
    %v968 = vadd.f32 0.0, %v967
    %969 = vmatmul.f32.gmra.mxu0 %v830
    %v970 = vpop.f32.mrf.mxu0
    %v971 = vadd.f32 0.0, %v970
    %972 = vdwg.mxu0
    %973 = vmatpush.msra.mxu0 %v925
    %974 = vmatpush.msra.mxu0 %v921
    %975 = vmatpush.msra.mxu0 %v917
    %976 = vmatpush.msra.mxu0 %v913
    %977 = vmatpush.msra.mxu0 %v909
    %978 = vmatpush.msra.mxu0 %v905
    %979 = vmatpush.msra.mxu0 %v901
    %980 = vmatpush.msra.mxu0 %v897
    %981 = vmatpush.msra.mxu0 %v893
    %982 = vmatpush.msra.mxu0 %v889
    %983 = vmatpush.msra.mxu0 %v885
    %984 = vmatpush.msra.mxu0 %v881
    %985 = vmatpush.msra.mxu0 %v877
    %986 = vmatpush.msra.mxu0 %v873
    %987 = vmatpush.msra.mxu0 %v869
    %988 = vmatpush.msra.mxu0 %v865
    %989 = vmatmul.f32.gmra.mxu0 %v828
    %v990 = vpop.f32.mrf.mxu0
    %v991 = vadd.f32 0.0, %v990
    %992 = vmatmul.f32.gmra.mxu0 %v830
    %v993 = vpop.f32.mrf.mxu0
    %v994 = vadd.f32 0.0, %v993
    %995 = vdwg.mxu0
    %996 = vmatpush.msra.mxu0 %v926
    %997 = vmatpush.msra.mxu0 %v922
    %998 = vmatpush.msra.mxu0 %v918
    %999 = vmatpush.msra.mxu0 %v914
    %1000 = vmatpush.msra.mxu0 %v910
    %1001 = vmatpush.msra.mxu0 %v906
    %1002 = vmatpush.msra.mxu0 %v902
    %1003 = vmatpush.msra.mxu0 %v898
    %1004 = vmatpush.msra.mxu0 %v894
    %1005 = vmatpush.msra.mxu0 %v890
    %1006 = vmatpush.msra.mxu0 %v886
    %1007 = vmatpush.msra.mxu0 %v882
    %1008 = vmatpush.msra.mxu0 %v878
    %1009 = vmatpush.msra.mxu0 %v874
    %1010 = vmatpush.msra.mxu0 %v870
    %1011 = vmatpush.msra.mxu0 %v866
    %1012 = vmatmul.f32.gmra.mxu0 %v828
    %v1013 = vpop.f32.mrf.mxu0
    %v1014 = vadd.f32 0.0, %v1013
    %1015 = vmatmul.f32.gmra.mxu0 %v830
    %v1016 = vpop.f32.mrf.mxu0
    %v1017 = vadd.f32 0.0, %v1016
    %1018 = vdwg.mxu0
    %v1019 = vmul.f32 %v442, %v945
    %v1020 = vmul.f32 %v468, %v968
    %v1021 = vmul.f32 %v494, %v991
    %v1022 = vmul.f32 %v520, %v1014
    %v1023 = vadd.f32 %v1019, %v948
    %v1024 = vadd.f32 %v1020, %v971
    %v1025 = vadd.f32 %v1021, %v994
    %v1026 = vadd.f32 %v1022, %v1017
    %vm1027 = vcmp.ge.f32.partialorder %v1023, 0.0
    %vm1028 = vcmp.ge.f32.partialorder %v1024, 0.0
    %vm1029 = vcmp.ge.f32.partialorder %v1025, 0.0
    %vm1030 = vcmp.ge.f32.partialorder %v1026, 0.0
    %v1031 = vmul.f32 %v1023, 0.2
    %v1032 = vmul.f32 %v1024, 0.2
    %v1033 = vmul.f32 %v1025, 0.2
    %v1034 = vmul.f32 %v1026, 0.2
    %v1035 = vsel %vm1027, %v1023, %v1031
    %v1036 = vsel %vm1028, %v1024, %v1032
    %v1037 = vsel %vm1029, %v1025, %v1033
    %v1038 = vsel %vm1030, %v1026, %v1034
    %v1039 = vpack.c.bf16 %v1035, %v1035
    %v1040 = vpack.c.bf16 %v1036, %v1036
    %v1041 = vpack.c.bf16 %v1037, %v1037
    %v1042 = vpack.c.bf16 %v1038, %v1038
    %v1043 = vld [vmem:[#allocation2 + $0x700] sm:$0xff]
    %v1044 = vld [vmem:[#allocation2 + $0x710] sm:$0xff]
    %v1045 = vld [vmem:[#allocation2 + $0x720] sm:$0xff]
    %v1046 = vld [vmem:[#allocation2 + $0x730] sm:$0xff]
    %v1047 = vld [vmem:[#allocation2 + $0x740] sm:$0xff]
    %v1048 = vld [vmem:[#allocation2 + $0x750] sm:$0xff]
    %v1049 = vld [vmem:[#allocation2 + $0x760] sm:$0xff]
    %v1050 = vld [vmem:[#allocation2 + $0x770] sm:$0xff]
    %v1051 = vld [vmem:[#allocation2 + $0x780] sm:$0xff]
    %v1052 = vld [vmem:[#allocation2 + $0x790] sm:$0xff]
    %v1053 = vld [vmem:[#allocation2 + $0x7a0] sm:$0xff]
    %v1054 = vld [vmem:[#allocation2 + $0x7b0] sm:$0xff]
    %v1055 = vld [vmem:[#allocation2 + $0x7c0] sm:$0xff]
    %v1056 = vld [vmem:[#allocation2 + $0x7d0] sm:$0xff]
    %v1057 = vld [vmem:[#allocation2 + $0x7e0] sm:$0xff]
    %v1058 = vld [vmem:[#allocation2 + $0x7f0] sm:$0xff]
    %v1059 = vld [vmem:[#allocation2 + $0x800] sm:$0xff]
    %v1060 = vld [vmem:[#allocation2 + $0x810] sm:$0xff]
    %v1061 = vld [vmem:[#allocation2 + $0x820] sm:$0xff]
    %v1062 = vld [vmem:[#allocation2 + $0x830] sm:$0xff]
    %v1063 = vld [vmem:[#allocation2 + $0x840] sm:$0xff]
    %v1064 = vld [vmem:[#allocation2 + $0x850] sm:$0xff]
    %v1065 = vld [vmem:[#allocation2 + $0x860] sm:$0xff]
    %v1066 = vld [vmem:[#allocation2 + $0x870] sm:$0xff]
    %v1067 = vld [vmem:[#allocation2 + $0x880] sm:$0xff]
    %v1068 = vld [vmem:[#allocation2 + $0x890] sm:$0xff]
    %v1069 = vld [vmem:[#allocation2 + $0x8a0] sm:$0xff]
    %v1070 = vld [vmem:[#allocation2 + $0x8b0] sm:$0xff]
    %v1071 = vld [vmem:[#allocation2 + $0x8c0] sm:$0xff]
    %v1072 = vld [vmem:[#allocation2 + $0x8d0] sm:$0xff]
    %v1073 = vld [vmem:[#allocation2 + $0x8e0] sm:$0xff]
    %v1074 = vld [vmem:[#allocation2 + $0x8f0] sm:$0xff]
    %v1075 = vld [vmem:[#allocation2 + $0x900] sm:$0xff]
    %v1076 = vld [vmem:[#allocation2 + $0x910] sm:$0xff]
    %v1077 = vld [vmem:[#allocation2 + $0x920] sm:$0xff]
    %v1078 = vld [vmem:[#allocation2 + $0x930] sm:$0xff]
    %v1079 = vld [vmem:[#allocation2 + $0x940] sm:$0xff]
    %v1080 = vld [vmem:[#allocation2 + $0x950] sm:$0xff]
    %v1081 = vld [vmem:[#allocation2 + $0x960] sm:$0xff]
    %v1082 = vld [vmem:[#allocation2 + $0x970] sm:$0xff]
    %v1083 = vld [vmem:[#allocation2 + $0x980] sm:$0xff]
    %v1084 = vld [vmem:[#allocation2 + $0x990] sm:$0xff]
    %v1085 = vld [vmem:[#allocation2 + $0x9a0] sm:$0xff]
    %v1086 = vld [vmem:[#allocation2 + $0x9b0] sm:$0xff]
    %v1087 = vld [vmem:[#allocation2 + $0x9c0] sm:$0xff]
    %v1088 = vld [vmem:[#allocation2 + $0x9d0] sm:$0xff]
    %v1089 = vld [vmem:[#allocation2 + $0x9e0] sm:$0xff]
    %v1090 = vld [vmem:[#allocation2 + $0x9f0] sm:$0xff]
    %v1091 = vld [vmem:[#allocation2 + $0xa00] sm:$0xff]
    %v1092 = vld [vmem:[#allocation2 + $0xa10] sm:$0xff]
    %v1093 = vld [vmem:[#allocation2 + $0xa20] sm:$0xff]
    %v1094 = vld [vmem:[#allocation2 + $0xa30] sm:$0xff]
    %v1095 = vld [vmem:[#allocation2 + $0xa40] sm:$0xff]
    %v1096 = vld [vmem:[#allocation2 + $0xa50] sm:$0xff]
    %v1097 = vld [vmem:[#allocation2 + $0xa60] sm:$0xff]
    %v1098 = vld [vmem:[#allocation2 + $0xa70] sm:$0xff]
    %v1099 = vld [vmem:[#allocation2 + $0xa80] sm:$0xff]
    %v1100 = vld [vmem:[#allocation2 + $0xa90] sm:$0xff]
    %v1101 = vld [vmem:[#allocation2 + $0xaa0] sm:$0xff]
    %v1102 = vld [vmem:[#allocation2 + $0xab0] sm:$0xff]
    %v1103 = vld [vmem:[#allocation2 + $0xac0] sm:$0xff]
    %v1104 = vld [vmem:[#allocation2 + $0xad0] sm:$0xff]
    %v1105 = vld [vmem:[#allocation2 + $0xae0] sm:$0xff]
    %v1106 = vld [vmem:[#allocation2 + $0xaf0] sm:$0xff]
    %v1171 = vunpack.c.l.b16 %v1043
    %v1172 = vunpack.c.h.b16 %v1043
    %v1173 = vunpack.c.l.b16 %v1044
    %v1174 = vunpack.c.h.b16 %v1044
    %v1175 = vunpack.c.l.b16 %v1045
    %v1176 = vunpack.c.h.b16 %v1045
    %v1177 = vunpack.c.l.b16 %v1046
    %v1178 = vunpack.c.h.b16 %v1046
    %v1179 = vunpack.c.l.b16 %v1047
    %v1180 = vunpack.c.h.b16 %v1047
    %v1181 = vunpack.c.l.b16 %v1048
    %v1182 = vunpack.c.h.b16 %v1048
    %v1183 = vunpack.c.l.b16 %v1049
    %v1184 = vunpack.c.h.b16 %v1049
    %v1185 = vunpack.c.l.b16 %v1050
    %v1186 = vunpack.c.h.b16 %v1050
    %v1187 = vunpack.c.l.b16 %v1051
    %v1188 = vunpack.c.h.b16 %v1051
    %v1189 = vunpack.c.l.b16 %v1052
    %v1190 = vunpack.c.h.b16 %v1052
    %v1191 = vunpack.c.l.b16 %v1053
    %v1192 = vunpack.c.h.b16 %v1053
    %v1193 = vunpack.c.l.b16 %v1054
    %v1194 = vunpack.c.h.b16 %v1054
    %v1195 = vunpack.c.l.b16 %v1055
    %v1196 = vunpack.c.h.b16 %v1055
    %v1197 = vunpack.c.l.b16 %v1056
    %v1198 = vunpack.c.h.b16 %v1056
    %v1199 = vunpack.c.l.b16 %v1057
    %v1200 = vunpack.c.h.b16 %v1057
    %v1201 = vunpack.c.l.b16 %v1058
    %v1202 = vunpack.c.h.b16 %v1058
    %v1203 = vunpack.c.l.b16 %v1059
    %v1204 = vunpack.c.h.b16 %v1059
    %v1205 = vunpack.c.l.b16 %v1060
    %v1206 = vunpack.c.h.b16 %v1060
    %v1207 = vunpack.c.l.b16 %v1061
    %v1208 = vunpack.c.h.b16 %v1061
    %v1209 = vunpack.c.l.b16 %v1062
    %v1210 = vunpack.c.h.b16 %v1062
    %v1211 = vunpack.c.l.b16 %v1063
    %v1212 = vunpack.c.h.b16 %v1063
    %v1213 = vunpack.c.l.b16 %v1064
    %v1214 = vunpack.c.h.b16 %v1064
    %v1215 = vunpack.c.l.b16 %v1065
    %v1216 = vunpack.c.h.b16 %v1065
    %v1217 = vunpack.c.l.b16 %v1066
    %v1218 = vunpack.c.h.b16 %v1066
    %v1219 = vunpack.c.l.b16 %v1067
    %v1220 = vunpack.c.h.b16 %v1067
    %v1221 = vunpack.c.l.b16 %v1068
    %v1222 = vunpack.c.h.b16 %v1068
    %v1223 = vunpack.c.l.b16 %v1069
    %v1224 = vunpack.c.h.b16 %v1069
    %v1225 = vunpack.c.l.b16 %v1070
    %v1226 = vunpack.c.h.b16 %v1070
    %v1227 = vunpack.c.l.b16 %v1071
    %v1228 = vunpack.c.h.b16 %v1071
    %v1229 = vunpack.c.l.b16 %v1072
    %v1230 = vunpack.c.h.b16 %v1072
    %v1231 = vunpack.c.l.b16 %v1073
    %v1232 = vunpack.c.h.b16 %v1073
    %v1233 = vunpack.c.l.b16 %v1074
    %v1234 = vunpack.c.h.b16 %v1074
    %v1235 = vunpack.c.l.b16 %v1075
    %v1236 = vunpack.c.h.b16 %v1075
    %v1237 = vunpack.c.l.b16 %v1076
    %v1238 = vunpack.c.h.b16 %v1076
    %v1239 = vunpack.c.l.b16 %v1077
    %v1240 = vunpack.c.h.b16 %v1077
    %v1241 = vunpack.c.l.b16 %v1078
    %v1242 = vunpack.c.h.b16 %v1078
    %v1243 = vunpack.c.l.b16 %v1079
    %v1244 = vunpack.c.h.b16 %v1079
    %v1245 = vunpack.c.l.b16 %v1080
    %v1246 = vunpack.c.h.b16 %v1080
    %v1247 = vunpack.c.l.b16 %v1081
    %v1248 = vunpack.c.h.b16 %v1081
    %v1249 = vunpack.c.l.b16 %v1082
    %v1250 = vunpack.c.h.b16 %v1082
    %v1251 = vunpack.c.l.b16 %v1083
    %v1252 = vunpack.c.h.b16 %v1083
    %v1253 = vunpack.c.l.b16 %v1084
    %v1254 = vunpack.c.h.b16 %v1084
    %v1255 = vunpack.c.l.b16 %v1085
    %v1256 = vunpack.c.h.b16 %v1085
    %v1257 = vunpack.c.l.b16 %v1086
    %v1258 = vunpack.c.h.b16 %v1086
    %v1259 = vunpack.c.l.b16 %v1087
    %v1260 = vunpack.c.h.b16 %v1087
    %v1261 = vunpack.c.l.b16 %v1088
    %v1262 = vunpack.c.h.b16 %v1088
    %v1263 = vunpack.c.l.b16 %v1089
    %v1264 = vunpack.c.h.b16 %v1089
    %v1265 = vunpack.c.l.b16 %v1090
    %v1266 = vunpack.c.h.b16 %v1090
    %v1267 = vunpack.c.l.b16 %v1091
    %v1268 = vunpack.c.h.b16 %v1091
    %v1269 = vunpack.c.l.b16 %v1092
    %v1270 = vunpack.c.h.b16 %v1092
    %v1271 = vunpack.c.l.b16 %v1093
    %v1272 = vunpack.c.h.b16 %v1093
    %v1273 = vunpack.c.l.b16 %v1094
    %v1274 = vunpack.c.h.b16 %v1094
    %v1275 = vunpack.c.l.b16 %v1095
    %v1276 = vunpack.c.h.b16 %v1095
    %v1277 = vunpack.c.l.b16 %v1096
    %v1278 = vunpack.c.h.b16 %v1096
    %v1279 = vunpack.c.l.b16 %v1097
    %v1280 = vunpack.c.h.b16 %v1097
    %v1281 = vunpack.c.l.b16 %v1098
    %v1282 = vunpack.c.h.b16 %v1098
    %v1283 = vunpack.c.l.b16 %v1099
    %v1284 = vunpack.c.h.b16 %v1099
    %v1285 = vunpack.c.l.b16 %v1100
    %v1286 = vunpack.c.h.b16 %v1100
    %v1287 = vunpack.c.l.b16 %v1101
    %v1288 = vunpack.c.h.b16 %v1101
    %v1289 = vunpack.c.l.b16 %v1102
    %v1290 = vunpack.c.h.b16 %v1102
    %v1291 = vunpack.c.l.b16 %v1103
    %v1292 = vunpack.c.h.b16 %v1103
    %v1293 = vunpack.c.l.b16 %v1104
    %v1294 = vunpack.c.h.b16 %v1104
    %v1295 = vunpack.c.l.b16 %v1105
    %v1296 = vunpack.c.h.b16 %v1105
    %v1297 = vunpack.c.l.b16 %v1106
    %v1298 = vunpack.c.h.b16 %v1106
    %v1299 = vpack.c.b16 %v1173, %v1171
    %v1300 = vpack.c.b16 %v1174, %v1172
    %v1301 = vpack.c.b16 %v1177, %v1175
    %v1302 = vpack.c.b16 %v1178, %v1176
    %v1303 = vpack.c.b16 %v1181, %v1179
    %v1304 = vpack.c.b16 %v1182, %v1180
    %v1305 = vpack.c.b16 %v1185, %v1183
    %v1306 = vpack.c.b16 %v1186, %v1184
    %v1307 = vpack.c.b16 %v1189, %v1187
    %v1308 = vpack.c.b16 %v1190, %v1188
    %v1309 = vpack.c.b16 %v1193, %v1191
    %v1310 = vpack.c.b16 %v1194, %v1192
    %v1311 = vpack.c.b16 %v1197, %v1195
    %v1312 = vpack.c.b16 %v1198, %v1196
    %v1313 = vpack.c.b16 %v1201, %v1199
    %v1314 = vpack.c.b16 %v1202, %v1200
    %v1315 = vpack.c.b16 %v1205, %v1203
    %v1316 = vpack.c.b16 %v1206, %v1204
    %v1317 = vpack.c.b16 %v1209, %v1207
    %v1318 = vpack.c.b16 %v1210, %v1208
    %v1319 = vpack.c.b16 %v1213, %v1211
    %v1320 = vpack.c.b16 %v1214, %v1212
    %v1321 = vpack.c.b16 %v1217, %v1215
    %v1322 = vpack.c.b16 %v1218, %v1216
    %v1323 = vpack.c.b16 %v1221, %v1219
    %v1324 = vpack.c.b16 %v1222, %v1220
    %v1325 = vpack.c.b16 %v1225, %v1223
    %v1326 = vpack.c.b16 %v1226, %v1224
    %v1327 = vpack.c.b16 %v1229, %v1227
    %v1328 = vpack.c.b16 %v1230, %v1228
    %v1329 = vpack.c.b16 %v1233, %v1231
    %v1330 = vpack.c.b16 %v1234, %v1232
    %v1331 = vpack.c.b16 %v1237, %v1235
    %v1332 = vpack.c.b16 %v1238, %v1236
    %v1333 = vpack.c.b16 %v1241, %v1239
    %v1334 = vpack.c.b16 %v1242, %v1240
    %v1335 = vpack.c.b16 %v1245, %v1243
    %v1336 = vpack.c.b16 %v1246, %v1244
    %v1337 = vpack.c.b16 %v1249, %v1247
    %v1338 = vpack.c.b16 %v1250, %v1248
    %v1339 = vpack.c.b16 %v1253, %v1251
    %v1340 = vpack.c.b16 %v1254, %v1252
    %v1341 = vpack.c.b16 %v1257, %v1255
    %v1342 = vpack.c.b16 %v1258, %v1256
    %v1343 = vpack.c.b16 %v1261, %v1259
    %v1344 = vpack.c.b16 %v1262, %v1260
    %v1345 = vpack.c.b16 %v1265, %v1263
    %v1346 = vpack.c.b16 %v1266, %v1264
    %v1347 = vpack.c.b16 %v1269, %v1267
    %v1348 = vpack.c.b16 %v1270, %v1268
    %v1349 = vpack.c.b16 %v1273, %v1271
    %v1350 = vpack.c.b16 %v1274, %v1272
    %v1351 = vpack.c.b16 %v1277, %v1275
    %v1352 = vpack.c.b16 %v1278, %v1276
    %v1353 = vpack.c.b16 %v1281, %v1279
    %v1354 = vpack.c.b16 %v1282, %v1280
    %v1355 = vpack.c.b16 %v1285, %v1283
    %v1356 = vpack.c.b16 %v1286, %v1284
    %v1357 = vpack.c.b16 %v1289, %v1287
    %v1358 = vpack.c.b16 %v1290, %v1288
    %v1359 = vpack.c.b16 %v1293, %v1291
    %v1360 = vpack.c.b16 %v1294, %v1292
    %v1361 = vpack.c.b16 %v1297, %v1295
    %v1362 = vpack.c.b16 %v1298, %v1296
    %1427 = vmatpush.bf16.msra.mxu0 %v1313
    %1428 = vmatpush.bf16.msra.mxu0 %v1311
    %1429 = vmatpush.bf16.msra.mxu0 %v1309
    %1430 = vmatpush.bf16.msra.mxu0 %v1307
    %1431 = vmatpush.bf16.msra.mxu0 %v1305
    %1432 = vmatpush.bf16.msra.mxu0 %v1303
    %1433 = vmatpush.bf16.msra.mxu0 %v1301
    %1434 = vmatpush.bf16.msra.mxu0 %v1299
    %1435 = vmatmul.bf16.gmra.mxu0 %v1039
    %v1436 = vpop.f32.mrf.mxu0
    %v1437 = vadd.f32 0.0, %v1436
    %v1438 = vpop.f32.mrf.mxu0
    %1439 = vdwg.mxu0
    %1440 = vmatpush.bf16.msra.mxu0 %v1329
    %1441 = vmatpush.bf16.msra.mxu0 %v1327
    %1442 = vmatpush.bf16.msra.mxu0 %v1325
    %1443 = vmatpush.bf16.msra.mxu0 %v1323
    %1444 = vmatpush.bf16.msra.mxu0 %v1321
    %1445 = vmatpush.bf16.msra.mxu0 %v1319
    %1446 = vmatpush.bf16.msra.mxu0 %v1317
    %1447 = vmatpush.bf16.msra.mxu0 %v1315
    %1448 = vmatmul.bf16.gmra.mxu0 %v1040
    %v1449 = vpop.f32.mrf.mxu0
    %v1450 = vadd.f32 %v1437, %v1449
    %v1451 = vpop.f32.mrf.mxu0
    %1452 = vdwg.mxu0
    %1453 = vmatpush.bf16.msra.mxu0 %v1345
    %1454 = vmatpush.bf16.msra.mxu0 %v1343
    %1455 = vmatpush.bf16.msra.mxu0 %v1341
    %1456 = vmatpush.bf16.msra.mxu0 %v1339
    %1457 = vmatpush.bf16.msra.mxu0 %v1337
    %1458 = vmatpush.bf16.msra.mxu0 %v1335
    %1459 = vmatpush.bf16.msra.mxu0 %v1333
    %1460 = vmatpush.bf16.msra.mxu0 %v1331
    %1461 = vmatmul.bf16.gmra.mxu0 %v1041
    %v1462 = vpop.f32.mrf.mxu0
    %v1463 = vadd.f32 %v1450, %v1462
    %v1464 = vpop.f32.mrf.mxu0
    %1465 = vdwg.mxu0
    %1466 = vmatpush.bf16.msra.mxu0 %v1361
    %1467 = vmatpush.bf16.msra.mxu0 %v1359
    %1468 = vmatpush.bf16.msra.mxu0 %v1357
    %1469 = vmatpush.bf16.msra.mxu0 %v1355
    %1470 = vmatpush.bf16.msra.mxu0 %v1353
    %1471 = vmatpush.bf16.msra.mxu0 %v1351
    %1472 = vmatpush.bf16.msra.mxu0 %v1349
    %1473 = vmatpush.bf16.msra.mxu0 %v1347
    %1474 = vmatmul.bf16.gmra.mxu0 %v1042
    %v1475 = vpop.f32.mrf.mxu0
    %v1476 = vadd.f32 %v1463, %v1475
    %v1477 = vpop.f32.mrf.mxu0
    %1478 = vdwg.mxu0
    %1479 = vmatpush.bf16.msra.mxu0 %v1314
    %1480 = vmatpush.bf16.msra.mxu0 %v1312
    %1481 = vmatpush.bf16.msra.mxu0 %v1310
    %1482 = vmatpush.bf16.msra.mxu0 %v1308
    %1483 = vmatpush.bf16.msra.mxu0 %v1306
    %1484 = vmatpush.bf16.msra.mxu0 %v1304
    %1485 = vmatpush.bf16.msra.mxu0 %v1302
    %1486 = vmatpush.bf16.msra.mxu0 %v1300
    %1487 = vmatmul.bf16.gmra.mxu0 %v1039
    %v1488 = vpop.f32.mrf.mxu0
    %v1489 = vadd.f32 0.0, %v1488
    %v1490 = vpop.f32.mrf.mxu0
    %1491 = vdwg.mxu0
    %1492 = vmatpush.bf16.msra.mxu0 %v1330
    %1493 = vmatpush.bf16.msra.mxu0 %v1328
    %1494 = vmatpush.bf16.msra.mxu0 %v1326
    %1495 = vmatpush.bf16.msra.mxu0 %v1324
    %1496 = vmatpush.bf16.msra.mxu0 %v1322
    %1497 = vmatpush.bf16.msra.mxu0 %v1320
    %1498 = vmatpush.bf16.msra.mxu0 %v1318
    %1499 = vmatpush.bf16.msra.mxu0 %v1316
    %1500 = vmatmul.bf16.gmra.mxu0 %v1040
    %v1501 = vpop.f32.mrf.mxu0
    %v1502 = vadd.f32 %v1489, %v1501
    %v1503 = vpop.f32.mrf.mxu0
    %1504 = vdwg.mxu0
    %1505 = vmatpush.bf16.msra.mxu0 %v1346
    %1506 = vmatpush.bf16.msra.mxu0 %v1344
    %1507 = vmatpush.bf16.msra.mxu0 %v1342
    %1508 = vmatpush.bf16.msra.mxu0 %v1340
    %1509 = vmatpush.bf16.msra.mxu0 %v1338
    %1510 = vmatpush.bf16.msra.mxu0 %v1336
    %1511 = vmatpush.bf16.msra.mxu0 %v1334
    %1512 = vmatpush.bf16.msra.mxu0 %v1332
    %1513 = vmatmul.bf16.gmra.mxu0 %v1041
    %v1514 = vpop.f32.mrf.mxu0
    %v1515 = vadd.f32 %v1502, %v1514
    %v1516 = vpop.f32.mrf.mxu0
    %1517 = vdwg.mxu0
    %1518 = vmatpush.bf16.msra.mxu0 %v1362
    %1519 = vmatpush.bf16.msra.mxu0 %v1360
    %1520 = vmatpush.bf16.msra.mxu0 %v1358
    %1521 = vmatpush.bf16.msra.mxu0 %v1356
    %1522 = vmatpush.bf16.msra.mxu0 %v1354
    %1523 = vmatpush.bf16.msra.mxu0 %v1352
    %1524 = vmatpush.bf16.msra.mxu0 %v1350
    %1525 = vmatpush.bf16.msra.mxu0 %v1348
    %1526 = vmatmul.bf16.gmra.mxu0 %v1042
    %v1527 = vpop.f32.mrf.mxu0
    %v1528 = vadd.f32 %v1515, %v1527
    %v1529 = vpop.f32.mrf.mxu0
    %1530 = vdwg.mxu0
    %v1531 = vld [vmem:[#allocation2 + $0xb00] sm:$0xf]
    %v1532 = vld [vmem:[#allocation2 + $0xb10] sm:$0xf]
    %v1533 = vld [vmem:[#allocation2 + $0xb20] sm:$0xf]
    %v1534 = vld [vmem:[#allocation2 + $0xb30] sm:$0xf]
    %v1535 = vld [vmem:[#allocation2 + $0xb40] sm:$0xf]
    %v1536 = vld [vmem:[#allocation2 + $0xb50] sm:$0xf]
    %v1537 = vld [vmem:[#allocation2 + $0xb60] sm:$0xf]
    %v1538 = vld [vmem:[#allocation2 + $0xb70] sm:$0xf]
    %v1539 = vld [vmem:[#allocation2 + $0xb80] sm:$0xf]
    %v1540 = vld [vmem:[#allocation2 + $0xb90] sm:$0xf]
    %v1541 = vld [vmem:[#allocation2 + $0xba0] sm:$0xf]
    %v1542 = vld [vmem:[#allocation2 + $0xbb0] sm:$0xf]
    %v1543 = vld [vmem:[#allocation2 + $0xbc0] sm:$0xf]
    %v1544 = vld [vmem:[#allocation2 + $0xbd0] sm:$0xf]
    %v1545 = vld [vmem:[#allocation2 + $0xbe0] sm:$0xf]
    %v1546 = vld [vmem:[#allocation2 + $0xbf0] sm:$0xf]
    %v1547 = vld [vmem:[#allocation2 + $0xc00] sm:$0xf]
    %v1548 = vld [vmem:[#allocation2 + $0xc10] sm:$0xf]
    %v1549 = vld [vmem:[#allocation2 + $0xc20] sm:$0xf]
    %v1550 = vld [vmem:[#allocation2 + $0xc30] sm:$0xf]
    %v1551 = vld [vmem:[#allocation2 + $0xc40] sm:$0xf]
    %v1552 = vld [vmem:[#allocation2 + $0xc50] sm:$0xf]
    %v1553 = vld [vmem:[#allocation2 + $0xc60] sm:$0xf]
    %v1554 = vld [vmem:[#allocation2 + $0xc70] sm:$0xf]
    %v1555 = vld [vmem:[#allocation2 + $0xc80] sm:$0xf]
    %v1556 = vld [vmem:[#allocation2 + $0xc90] sm:$0xf]
    %v1557 = vld [vmem:[#allocation2 + $0xca0] sm:$0xf]
    %v1558 = vld [vmem:[#allocation2 + $0xcb0] sm:$0xf]
    %v1559 = vld [vmem:[#allocation2 + $0xcc0] sm:$0xf]
    %v1560 = vld [vmem:[#allocation2 + $0xcd0] sm:$0xf]
    %v1561 = vld [vmem:[#allocation2 + $0xce0] sm:$0xf]
    %v1562 = vld [vmem:[#allocation2 + $0xcf0] sm:$0xf]
    %v1563 = vunpack.c.l.bf16 %v1531
    %v1564 = vunpack.c.l.bf16 %v1532
    %v1565 = vunpack.c.l.bf16 %v1533
    %v1566 = vunpack.c.l.bf16 %v1534
    %v1567 = vunpack.c.l.bf16 %v1535
    %v1568 = vunpack.c.l.bf16 %v1536
    %v1569 = vunpack.c.l.bf16 %v1537
    %v1570 = vunpack.c.l.bf16 %v1538
    %v1571 = vunpack.c.l.bf16 %v1539
    %v1572 = vunpack.c.l.bf16 %v1540
    %v1573 = vunpack.c.l.bf16 %v1541
    %v1574 = vunpack.c.l.bf16 %v1542
    %v1575 = vunpack.c.l.bf16 %v1543
    %v1576 = vunpack.c.l.bf16 %v1544
    %v1577 = vunpack.c.l.bf16 %v1545
    %v1578 = vunpack.c.l.bf16 %v1546
    %v1579 = vunpack.c.l.bf16 %v1547
    %v1580 = vunpack.c.l.bf16 %v1548
    %v1581 = vunpack.c.l.bf16 %v1549
    %v1582 = vunpack.c.l.bf16 %v1550
    %v1583 = vunpack.c.l.bf16 %v1551
    %v1584 = vunpack.c.l.bf16 %v1552
    %v1585 = vunpack.c.l.bf16 %v1553
    %v1586 = vunpack.c.l.bf16 %v1554
    %v1587 = vunpack.c.l.bf16 %v1555
    %v1588 = vunpack.c.l.bf16 %v1556
    %v1589 = vunpack.c.l.bf16 %v1557
    %v1590 = vunpack.c.l.bf16 %v1558
    %v1591 = vunpack.c.l.bf16 %v1559
    %v1592 = vunpack.c.l.bf16 %v1560
    %v1593 = vunpack.c.l.bf16 %v1561
    %v1594 = vunpack.c.l.bf16 %v1562
    %1595 = vmatpush.msra.mxu0 %v1578
    %1596 = vmatpush.msra.mxu0 %v1577
    %1597 = vmatpush.msra.mxu0 %v1576
    %1598 = vmatpush.msra.mxu0 %v1575
    %1599 = vmatpush.msra.mxu0 %v1574
    %1600 = vmatpush.msra.mxu0 %v1573
    %1601 = vmatpush.msra.mxu0 %v1572
    %1602 = vmatpush.msra.mxu0 %v1571
    %1603 = vmatpush.msra.mxu0 %v1570
    %1604 = vmatpush.msra.mxu0 %v1569
    %1605 = vmatpush.msra.mxu0 %v1568
    %1606 = vmatpush.msra.mxu0 %v1567
    %1607 = vmatpush.msra.mxu0 %v1566
    %1608 = vmatpush.msra.mxu0 %v1565
    %1609 = vmatpush.msra.mxu0 %v1564
    %1610 = vmatpush.msra.mxu0 %v1563
    %1611 = vmatmul.f32.gmra.mxu0 %v1476
    %v1612 = vpop.f32.mrf.mxu0
    %v1613 = vadd.f32 0.0, %v1612
    %1614 = vdwg.mxu0
    %1615 = vmatpush.msra.mxu0 %v1594
    %1616 = vmatpush.msra.mxu0 %v1593
    %1617 = vmatpush.msra.mxu0 %v1592
    %1618 = vmatpush.msra.mxu0 %v1591
    %1619 = vmatpush.msra.mxu0 %v1590
    %1620 = vmatpush.msra.mxu0 %v1589
    %1621 = vmatpush.msra.mxu0 %v1588
    %1622 = vmatpush.msra.mxu0 %v1587
    %1623 = vmatpush.msra.mxu0 %v1586
    %1624 = vmatpush.msra.mxu0 %v1585
    %1625 = vmatpush.msra.mxu0 %v1584
    %1626 = vmatpush.msra.mxu0 %v1583
    %1627 = vmatpush.msra.mxu0 %v1582
    %1628 = vmatpush.msra.mxu0 %v1581
    %1629 = vmatpush.msra.mxu0 %v1580
    %1630 = vmatpush.msra.mxu0 %v1579
    %1631 = vmatmul.f32.gmra.mxu0 %v1528
    %v1632 = vpop.f32.mrf.mxu0
    %v1633 = vadd.f32 %v1613, %v1632
    %1634 = vdwg.mxu0
    %v1635 = vmul.f32 %v1476, %v1476
    %v1636 = vmul.f32 %v1528, %v1528
    %1637 = vmatpush.msra.mxu0 %v1578
    %1638 = vmatpush.msra.mxu0 %v1577
    %1639 = vmatpush.msra.mxu0 %v1576
    %1640 = vmatpush.msra.mxu0 %v1575
    %1641 = vmatpush.msra.mxu0 %v1574
    %1642 = vmatpush.msra.mxu0 %v1573
    %1643 = vmatpush.msra.mxu0 %v1572
    %1644 = vmatpush.msra.mxu0 %v1571
    %1645 = vmatpush.msra.mxu0 %v1570
    %1646 = vmatpush.msra.mxu0 %v1569
    %1647 = vmatpush.msra.mxu0 %v1568
    %1648 = vmatpush.msra.mxu0 %v1567
    %1649 = vmatpush.msra.mxu0 %v1566
    %1650 = vmatpush.msra.mxu0 %v1565
    %1651 = vmatpush.msra.mxu0 %v1564
    %1652 = vmatpush.msra.mxu0 %v1563
    %1653 = vmatmul.f32.gmra.mxu0 %v1635
    %v1654 = vpop.f32.mrf.mxu0
    %v1655 = vadd.f32 0.0, %v1654
    %1656 = vdwg.mxu0
    %1657 = vmatpush.msra.mxu0 %v1594
    %1658 = vmatpush.msra.mxu0 %v1593
    %1659 = vmatpush.msra.mxu0 %v1592
    %1660 = vmatpush.msra.mxu0 %v1591
    %1661 = vmatpush.msra.mxu0 %v1590
    %1662 = vmatpush.msra.mxu0 %v1589
    %1663 = vmatpush.msra.mxu0 %v1588
    %1664 = vmatpush.msra.mxu0 %v1587
    %1665 = vmatpush.msra.mxu0 %v1586
    %1666 = vmatpush.msra.mxu0 %v1585
    %1667 = vmatpush.msra.mxu0 %v1584
    %1668 = vmatpush.msra.mxu0 %v1583
    %1669 = vmatpush.msra.mxu0 %v1582
    %1670 = vmatpush.msra.mxu0 %v1581
    %1671 = vmatpush.msra.mxu0 %v1580
    %1672 = vmatpush.msra.mxu0 %v1579
    %1673 = vmatmul.f32.gmra.mxu0 %v1636
    %v1674 = vpop.f32.mrf.mxu0
    %v1675 = vadd.f32 %v1655, %v1674
    %1676 = vdwg.mxu0
    %v1677 = vmul.f32 %v1633, %v1633
    %v1678 = vsub.f32 %v1675, %v1677
    %v1679 = vmax.f32 %v1678, 0.0
    %v1680 = vadd.f32 %v1679, 1e-05
    %v1681 = vrsqrt.pop %v1680
    %v1682 = vmul.f32 %v1681, %v1680
    %v1683 = vmul.f32 %v1682, %v1681
    %v1684 = vmul.f32 0.5, %v1683
    %v1685 = vsub.f32 1.5, %v1684
    %v1686 = vmul.f32 %v1681, %v1685
    %vm1687 = vweird.f32 %v1680
    %vm1688 = vweird.f32 %v1681
    %vm1689 = vmor %vm1687, %vm1688
    %v1690 = vsel %vm1689, %v1681, %v1686
    %v1691 = vsub.f32 0.0, %v1633
    %v1692 = vmul.f32 %v1691, %v1690
    %v1693 = vld [vmem:[#allocation2 + $0xd00] sm:$0xff]
    %v1694 = vld [vmem:[#allocation2 + $0xd10] sm:$0xff]
    %v1695 = vld [vmem:[#allocation2 + $0xd20] sm:$0xff]
    %v1696 = vld [vmem:[#allocation2 + $0xd30] sm:$0xff]
    %v1697 = vld [vmem:[#allocation2 + $0xd40] sm:$0xff]
    %v1698 = vld [vmem:[#allocation2 + $0xd50] sm:$0xff]
    %v1699 = vld [vmem:[#allocation2 + $0xd60] sm:$0xff]
    %v1700 = vld [vmem:[#allocation2 + $0xd70] sm:$0xff]
    %v1701 = vld [vmem:[#allocation2 + $0xd80] sm:$0xff]
    %v1702 = vld [vmem:[#allocation2 + $0xd90] sm:$0xff]
    %v1703 = vld [vmem:[#allocation2 + $0xda0] sm:$0xff]
    %v1704 = vld [vmem:[#allocation2 + $0xdb0] sm:$0xff]
    %v1705 = vld [vmem:[#allocation2 + $0xdc0] sm:$0xff]
    %v1706 = vld [vmem:[#allocation2 + $0xdd0] sm:$0xff]
    %v1707 = vld [vmem:[#allocation2 + $0xde0] sm:$0xff]
    %v1708 = vld [vmem:[#allocation2 + $0xdf0] sm:$0xff]
    %v1709 = vunpack.c.l.bf16 %v1693
    %v1710 = vunpack.c.h.bf16 %v1693
    %v1711 = vunpack.c.l.bf16 %v1694
    %v1712 = vunpack.c.h.bf16 %v1694
    %v1713 = vunpack.c.l.bf16 %v1695
    %v1714 = vunpack.c.h.bf16 %v1695
    %v1715 = vunpack.c.l.bf16 %v1696
    %v1716 = vunpack.c.h.bf16 %v1696
    %v1717 = vunpack.c.l.bf16 %v1697
    %v1718 = vunpack.c.h.bf16 %v1697
    %v1719 = vunpack.c.l.bf16 %v1698
    %v1720 = vunpack.c.h.bf16 %v1698
    %v1721 = vunpack.c.l.bf16 %v1699
    %v1722 = vunpack.c.h.bf16 %v1699
    %v1723 = vunpack.c.l.bf16 %v1700
    %v1724 = vunpack.c.h.bf16 %v1700
    %v1725 = vunpack.c.l.bf16 %v1701
    %v1726 = vunpack.c.h.bf16 %v1701
    %v1727 = vunpack.c.l.bf16 %v1702
    %v1728 = vunpack.c.h.bf16 %v1702
    %v1729 = vunpack.c.l.bf16 %v1703
    %v1730 = vunpack.c.h.bf16 %v1703
    %v1731 = vunpack.c.l.bf16 %v1704
    %v1732 = vunpack.c.h.bf16 %v1704
    %v1733 = vunpack.c.l.bf16 %v1705
    %v1734 = vunpack.c.h.bf16 %v1705
    %v1735 = vunpack.c.l.bf16 %v1706
    %v1736 = vunpack.c.h.bf16 %v1706
    %v1737 = vunpack.c.l.bf16 %v1707
    %v1738 = vunpack.c.h.bf16 %v1707
    %v1739 = vunpack.c.l.bf16 %v1708
    %v1740 = vunpack.c.h.bf16 %v1708
    %1741 = vmatpush.msra.mxu0 %v1739
    %1742 = vmatpush.msra.mxu0 %v1737
    %1743 = vmatpush.msra.mxu0 %v1735
    %1744 = vmatpush.msra.mxu0 %v1733
    %1745 = vmatpush.msra.mxu0 %v1731
    %1746 = vmatpush.msra.mxu0 %v1729
    %1747 = vmatpush.msra.mxu0 %v1727
    %1748 = vmatpush.msra.mxu0 %v1725
    %1749 = vmatpush.msra.mxu0 %v1723
    %1750 = vmatpush.msra.mxu0 %v1721
    %1751 = vmatpush.msra.mxu0 %v1719
    %1752 = vmatpush.msra.mxu0 %v1717
    %1753 = vmatpush.msra.mxu0 %v1715
    %1754 = vmatpush.msra.mxu0 %v1713
    %1755 = vmatpush.msra.mxu0 %v1711
    %1756 = vmatpush.msra.mxu0 %v1709
    %1757 = vmatmul.f32.gmra.mxu0 %v1690
    %v1758 = vpop.f32.mrf.mxu0
    %v1759 = vadd.f32 0.0, %v1758
    %1760 = vmatmul.f32.gmra.mxu0 %v1692
    %v1761 = vpop.f32.mrf.mxu0
    %v1762 = vadd.f32 0.0, %v1761
    %1763 = vdwg.mxu0
    %1764 = vmatpush.msra.mxu0 %v1740
    %1765 = vmatpush.msra.mxu0 %v1738
    %1766 = vmatpush.msra.mxu0 %v1736
    %1767 = vmatpush.msra.mxu0 %v1734
    %1768 = vmatpush.msra.mxu0 %v1732
    %1769 = vmatpush.msra.mxu0 %v1730
    %1770 = vmatpush.msra.mxu0 %v1728
    %1771 = vmatpush.msra.mxu0 %v1726
    %1772 = vmatpush.msra.mxu0 %v1724
    %1773 = vmatpush.msra.mxu0 %v1722
    %1774 = vmatpush.msra.mxu0 %v1720
    %1775 = vmatpush.msra.mxu0 %v1718
    %1776 = vmatpush.msra.mxu0 %v1716
    %1777 = vmatpush.msra.mxu0 %v1714
    %1778 = vmatpush.msra.mxu0 %v1712
    %1779 = vmatpush.msra.mxu0 %v1710
    %1780 = vmatmul.f32.gmra.mxu0 %v1690
    %v1781 = vpop.f32.mrf.mxu0
    %v1782 = vadd.f32 0.0, %v1781
    %1783 = vmatmul.f32.gmra.mxu0 %v1692
    %v1784 = vpop.f32.mrf.mxu0
    %v1785 = vadd.f32 0.0, %v1784
    %1786 = vdwg.mxu0
    %v1787 = vmul.f32 %v1476, %v1759
    %v1788 = vmul.f32 %v1528, %v1782
    %v1789 = vadd.f32 %v1787, %v1762
    %v1790 = vadd.f32 %v1788, %v1785
    %vm1791 = vcmp.ge.f32.partialorder %v1789, 0.0
    %vm1792 = vcmp.ge.f32.partialorder %v1790, 0.0
    %v1793 = vmul.f32 %v1789, 0.2
    %v1794 = vmul.f32 %v1790, 0.2
    %v1795 = vsel %vm1791, %v1789, %v1793
    %v1796 = vsel %vm1792, %v1790, %v1794
    %v1797 = vpack.c.bf16 %v1795, %v1795
    %v1798 = vpack.c.bf16 %v1796, %v1796
    %v1799 = vld [vmem:[#allocation2 + $0x1000] sm:$0xff]
    %v1800 = vld [vmem:[#allocation2 + $0x1010] sm:$0xff]
    %v1801 = vld [vmem:[#allocation2 + $0x1020] sm:$0xff]
    %v1802 = vld [vmem:[#allocation2 + $0x1030] sm:$0xff]
    %v1803 = vld [vmem:[#allocation2 + $0x1040] sm:$0xff]
    %v1804 = vld [vmem:[#allocation2 + $0x1050] sm:$0xff]
    %v1805 = vld [vmem:[#allocation2 + $0x1060] sm:$0xff]
    %v1806 = vld [vmem:[#allocation2 + $0x1070] sm:$0xff]
    %v1807 = vld [vmem:[#allocation2 + $0x1080] sm:$0xff]
    %v1808 = vld [vmem:[#allocation2 + $0x1090] sm:$0xff]
    %v1809 = vld [vmem:[#allocation2 + $0x10a0] sm:$0xff]
    %v1810 = vld [vmem:[#allocation2 + $0x10b0] sm:$0xff]
    %v1811 = vld [vmem:[#allocation2 + $0x10c0] sm:$0xff]
    %v1812 = vld [vmem:[#allocation2 + $0x10d0] sm:$0xff]
    %v1813 = vld [vmem:[#allocation2 + $0x10e0] sm:$0xff]
    %v1814 = vld [vmem:[#allocation2 + $0x10f0] sm:$0xff]
    %v1815 = vld [vmem:[#allocation2 + $0x1100] sm:$0xff]
    %v1816 = vld [vmem:[#allocation2 + $0x1110] sm:$0xff]
    %v1817 = vld [vmem:[#allocation2 + $0x1120] sm:$0xff]
    %v1818 = vld [vmem:[#allocation2 + $0x1130] sm:$0xff]
    %v1819 = vld [vmem:[#allocation2 + $0x1140] sm:$0xff]
    %v1820 = vld [vmem:[#allocation2 + $0x1150] sm:$0xff]
    %v1821 = vld [vmem:[#allocation2 + $0x1160] sm:$0xff]
    %v1822 = vld [vmem:[#allocation2 + $0x1170] sm:$0xff]
    %v1823 = vld [vmem:[#allocation2 + $0x1180] sm:$0xff]
    %v1824 = vld [vmem:[#allocation2 + $0x1190] sm:$0xff]
    %v1825 = vld [vmem:[#allocation2 + $0x11a0] sm:$0xff]
    %v1826 = vld [vmem:[#allocation2 + $0x11b0] sm:$0xff]
    %v1827 = vld [vmem:[#allocation2 + $0x11c0] sm:$0xff]
    %v1828 = vld [vmem:[#allocation2 + $0x11d0] sm:$0xff]
    %v1829 = vld [vmem:[#allocation2 + $0x11e0] sm:$0xff]
    %v1830 = vld [vmem:[#allocation2 + $0x11f0] sm:$0xff]
    %v1863 = vunpack.c.l.b16 %v1799
    %v1864 = vunpack.c.h.b16 %v1799
    %v1865 = vunpack.c.l.b16 %v1800
    %v1866 = vunpack.c.h.b16 %v1800
    %v1867 = vunpack.c.l.b16 %v1801
    %v1868 = vunpack.c.h.b16 %v1801
    %v1869 = vunpack.c.l.b16 %v1802
    %v1870 = vunpack.c.h.b16 %v1802
    %v1871 = vunpack.c.l.b16 %v1803
    %v1872 = vunpack.c.h.b16 %v1803
    %v1873 = vunpack.c.l.b16 %v1804
    %v1874 = vunpack.c.h.b16 %v1804
    %v1875 = vunpack.c.l.b16 %v1805
    %v1876 = vunpack.c.h.b16 %v1805
    %v1877 = vunpack.c.l.b16 %v1806
    %v1878 = vunpack.c.h.b16 %v1806
    %v1879 = vunpack.c.l.b16 %v1807
    %v1880 = vunpack.c.h.b16 %v1807
    %v1881 = vunpack.c.l.b16 %v1808
    %v1882 = vunpack.c.h.b16 %v1808
    %v1883 = vunpack.c.l.b16 %v1809
    %v1884 = vunpack.c.h.b16 %v1809
    %v1885 = vunpack.c.l.b16 %v1810
    %v1886 = vunpack.c.h.b16 %v1810
    %v1887 = vunpack.c.l.b16 %v1811
    %v1888 = vunpack.c.h.b16 %v1811
    %v1889 = vunpack.c.l.b16 %v1812
    %v1890 = vunpack.c.h.b16 %v1812
    %v1891 = vunpack.c.l.b16 %v1813
    %v1892 = vunpack.c.h.b16 %v1813
    %v1893 = vunpack.c.l.b16 %v1814
    %v1894 = vunpack.c.h.b16 %v1814
    %v1895 = vunpack.c.l.b16 %v1815
    %v1896 = vunpack.c.h.b16 %v1815
    %v1897 = vunpack.c.l.b16 %v1816
    %v1898 = vunpack.c.h.b16 %v1816
    %v1899 = vunpack.c.l.b16 %v1817
    %v1900 = vunpack.c.h.b16 %v1817
    %v1901 = vunpack.c.l.b16 %v1818
    %v1902 = vunpack.c.h.b16 %v1818
    %v1903 = vunpack.c.l.b16 %v1819
    %v1904 = vunpack.c.h.b16 %v1819
    %v1905 = vunpack.c.l.b16 %v1820
    %v1906 = vunpack.c.h.b16 %v1820
    %v1907 = vunpack.c.l.b16 %v1821
    %v1908 = vunpack.c.h.b16 %v1821
    %v1909 = vunpack.c.l.b16 %v1822
    %v1910 = vunpack.c.h.b16 %v1822
    %v1911 = vunpack.c.l.b16 %v1823
    %v1912 = vunpack.c.h.b16 %v1823
    %v1913 = vunpack.c.l.b16 %v1824
    %v1914 = vunpack.c.h.b16 %v1824
    %v1915 = vunpack.c.l.b16 %v1825
    %v1916 = vunpack.c.h.b16 %v1825
    %v1917 = vunpack.c.l.b16 %v1826
    %v1918 = vunpack.c.h.b16 %v1826
    %v1919 = vunpack.c.l.b16 %v1827
    %v1920 = vunpack.c.h.b16 %v1827
    %v1921 = vunpack.c.l.b16 %v1828
    %v1922 = vunpack.c.h.b16 %v1828
    %v1923 = vunpack.c.l.b16 %v1829
    %v1924 = vunpack.c.h.b16 %v1829
    %v1925 = vunpack.c.l.b16 %v1830
    %v1926 = vunpack.c.h.b16 %v1830
    %v1927 = vpack.c.b16 %v1865, %v1863
    %v1928 = vpack.c.b16 %v1866, %v1864
    %v1929 = vpack.c.b16 %v1869, %v1867
    %v1930 = vpack.c.b16 %v1870, %v1868
    %v1931 = vpack.c.b16 %v1873, %v1871
    %v1932 = vpack.c.b16 %v1874, %v1872
    %v1933 = vpack.c.b16 %v1877, %v1875
    %v1934 = vpack.c.b16 %v1878, %v1876
    %v1935 = vpack.c.b16 %v1881, %v1879
    %v1936 = vpack.c.b16 %v1882, %v1880
    %v1937 = vpack.c.b16 %v1885, %v1883
    %v1938 = vpack.c.b16 %v1886, %v1884
    %v1939 = vpack.c.b16 %v1889, %v1887
    %v1940 = vpack.c.b16 %v1890, %v1888
    %v1941 = vpack.c.b16 %v1893, %v1891
    %v1942 = vpack.c.b16 %v1894, %v1892
    %v1943 = vpack.c.b16 %v1897, %v1895
    %v1944 = vpack.c.b16 %v1898, %v1896
    %v1945 = vpack.c.b16 %v1901, %v1899
    %v1946 = vpack.c.b16 %v1902, %v1900
    %v1947 = vpack.c.b16 %v1905, %v1903
    %v1948 = vpack.c.b16 %v1906, %v1904
    %v1949 = vpack.c.b16 %v1909, %v1907
    %v1950 = vpack.c.b16 %v1910, %v1908
    %v1951 = vpack.c.b16 %v1913, %v1911
    %v1952 = vpack.c.b16 %v1914, %v1912
    %v1953 = vpack.c.b16 %v1917, %v1915
    %v1954 = vpack.c.b16 %v1918, %v1916
    %v1955 = vpack.c.b16 %v1921, %v1919
    %v1956 = vpack.c.b16 %v1922, %v1920
    %v1957 = vpack.c.b16 %v1925, %v1923
    %v1958 = vpack.c.b16 %v1926, %v1924
    %1991 = vmatpush.bf16.msra.mxu0 %v1941
    %1992 = vmatpush.bf16.msra.mxu0 %v1939
    %1993 = vmatpush.bf16.msra.mxu0 %v1937
    %1994 = vmatpush.bf16.msra.mxu0 %v1935
    %1995 = vmatpush.bf16.msra.mxu0 %v1933
    %1996 = vmatpush.bf16.msra.mxu0 %v1931
    %1997 = vmatpush.bf16.msra.mxu0 %v1929
    %1998 = vmatpush.bf16.msra.mxu0 %v1927
    %1999 = vmatmul.bf16.gmra.mxu0 %v1797
    %v2000 = vpop.f32.mrf.mxu0
    %v2001 = vadd.f32 0.0, %v2000
    %v2002 = vpop.f32.mrf.mxu0
    %2003 = vdwg.mxu0
    %2004 = vmatpush.bf16.msra.mxu0 %v1957
    %2005 = vmatpush.bf16.msra.mxu0 %v1955
    %2006 = vmatpush.bf16.msra.mxu0 %v1953
    %2007 = vmatpush.bf16.msra.mxu0 %v1951
    %2008 = vmatpush.bf16.msra.mxu0 %v1949
    %2009 = vmatpush.bf16.msra.mxu0 %v1947
    %2010 = vmatpush.bf16.msra.mxu0 %v1945
    %2011 = vmatpush.bf16.msra.mxu0 %v1943
    %2012 = vmatmul.bf16.gmra.mxu0 %v1798
    %v2013 = vpop.f32.mrf.mxu0
    %v2014 = vadd.f32 %v2001, %v2013
    %v2015 = vpop.f32.mrf.mxu0
    %2016 = vdwg.mxu0
    %2017 = vmatpush.bf16.msra.mxu0 %v1942
    %2018 = vmatpush.bf16.msra.mxu0 %v1940
    %2019 = vmatpush.bf16.msra.mxu0 %v1938
    %2020 = vmatpush.bf16.msra.mxu0 %v1936
    %2021 = vmatpush.bf16.msra.mxu0 %v1934
    %2022 = vmatpush.bf16.msra.mxu0 %v1932
    %2023 = vmatpush.bf16.msra.mxu0 %v1930
    %2024 = vmatpush.bf16.msra.mxu0 %v1928
    %2025 = vmatmul.bf16.gmra.mxu0 %v1797
    %v2026 = vpop.f32.mrf.mxu0
    %v2027 = vadd.f32 0.0, %v2026
    %v2028 = vpop.f32.mrf.mxu0
    %2029 = vdwg.mxu0
    %2030 = vmatpush.bf16.msra.mxu0 %v1958
    %2031 = vmatpush.bf16.msra.mxu0 %v1956
    %2032 = vmatpush.bf16.msra.mxu0 %v1954
    %2033 = vmatpush.bf16.msra.mxu0 %v1952
    %2034 = vmatpush.bf16.msra.mxu0 %v1950
    %2035 = vmatpush.bf16.msra.mxu0 %v1948
    %2036 = vmatpush.bf16.msra.mxu0 %v1946
    %2037 = vmatpush.bf16.msra.mxu0 %v1944
    %2038 = vmatmul.bf16.gmra.mxu0 %v1798
    %v2039 = vpop.f32.mrf.mxu0
    %v2040 = vadd.f32 %v2027, %v2039
    %v2041 = vpop.f32.mrf.mxu0
    %2042 = vdwg.mxu0
    %v2043 = vld [vmem:[#allocation2 + $0x1200] sm:$0xf]
    %v2044 = vld [vmem:[#allocation2 + $0x1210] sm:$0xf]
    %v2045 = vld [vmem:[#allocation2 + $0x1220] sm:$0xf]
    %v2046 = vld [vmem:[#allocation2 + $0x1230] sm:$0xf]
    %v2047 = vld [vmem:[#allocation2 + $0x1240] sm:$0xf]
    %v2048 = vld [vmem:[#allocation2 + $0x1250] sm:$0xf]
    %v2049 = vld [vmem:[#allocation2 + $0x1260] sm:$0xf]
    %v2050 = vld [vmem:[#allocation2 + $0x1270] sm:$0xf]
    %v2051 = vld [vmem:[#allocation2 + $0x1280] sm:$0xf]
    %v2052 = vld [vmem:[#allocation2 + $0x1290] sm:$0xf]
    %v2053 = vld [vmem:[#allocation2 + $0x12a0] sm:$0xf]
    %v2054 = vld [vmem:[#allocation2 + $0x12b0] sm:$0xf]
    %v2055 = vld [vmem:[#allocation2 + $0x12c0] sm:$0xf]
    %v2056 = vld [vmem:[#allocation2 + $0x12d0] sm:$0xf]
    %v2057 = vld [vmem:[#allocation2 + $0x12e0] sm:$0xf]
    %v2058 = vld [vmem:[#allocation2 + $0x12f0] sm:$0xf]
    %v2059 = vld [vmem:[#allocation2 + $0x1300] sm:$0xf]
    %v2060 = vld [vmem:[#allocation2 + $0x1310] sm:$0xf]
    %v2061 = vld [vmem:[#allocation2 + $0x1320] sm:$0xf]
    %v2062 = vld [vmem:[#allocation2 + $0x1330] sm:$0xf]
    %v2063 = vld [vmem:[#allocation2 + $0x1340] sm:$0xf]
    %v2064 = vld [vmem:[#allocation2 + $0x1350] sm:$0xf]
    %v2065 = vld [vmem:[#allocation2 + $0x1360] sm:$0xf]
    %v2066 = vld [vmem:[#allocation2 + $0x1370] sm:$0xf]
    %v2067 = vld [vmem:[#allocation2 + $0x1380] sm:$0xf]
    %v2068 = vld [vmem:[#allocation2 + $0x1390] sm:$0xf]
    %v2069 = vld [vmem:[#allocation2 + $0x13a0] sm:$0xf]
    %v2070 = vld [vmem:[#allocation2 + $0x13b0] sm:$0xf]
    %v2071 = vld [vmem:[#allocation2 + $0x13c0] sm:$0xf]
    %v2072 = vld [vmem:[#allocation2 + $0x13d0] sm:$0xf]
    %v2073 = vld [vmem:[#allocation2 + $0x13e0] sm:$0xf]
    %v2074 = vld [vmem:[#allocation2 + $0x13f0] sm:$0xf]
    %v2075 = vunpack.c.l.bf16 %v2043
    %v2076 = vunpack.c.l.bf16 %v2044
    %v2077 = vunpack.c.l.bf16 %v2045
    %v2078 = vunpack.c.l.bf16 %v2046
    %v2079 = vunpack.c.l.bf16 %v2047
    %v2080 = vunpack.c.l.bf16 %v2048
    %v2081 = vunpack.c.l.bf16 %v2049
    %v2082 = vunpack.c.l.bf16 %v2050
    %v2083 = vunpack.c.l.bf16 %v2051
    %v2084 = vunpack.c.l.bf16 %v2052
    %v2085 = vunpack.c.l.bf16 %v2053
    %v2086 = vunpack.c.l.bf16 %v2054
    %v2087 = vunpack.c.l.bf16 %v2055
    %v2088 = vunpack.c.l.bf16 %v2056
    %v2089 = vunpack.c.l.bf16 %v2057
    %v2090 = vunpack.c.l.bf16 %v2058
    %v2091 = vunpack.c.l.bf16 %v2059
    %v2092 = vunpack.c.l.bf16 %v2060
    %v2093 = vunpack.c.l.bf16 %v2061
    %v2094 = vunpack.c.l.bf16 %v2062
    %v2095 = vunpack.c.l.bf16 %v2063
    %v2096 = vunpack.c.l.bf16 %v2064
    %v2097 = vunpack.c.l.bf16 %v2065
    %v2098 = vunpack.c.l.bf16 %v2066
    %v2099 = vunpack.c.l.bf16 %v2067
    %v2100 = vunpack.c.l.bf16 %v2068
    %v2101 = vunpack.c.l.bf16 %v2069
    %v2102 = vunpack.c.l.bf16 %v2070
    %v2103 = vunpack.c.l.bf16 %v2071
    %v2104 = vunpack.c.l.bf16 %v2072
    %v2105 = vunpack.c.l.bf16 %v2073
    %v2106 = vunpack.c.l.bf16 %v2074
    %2107 = vmatpush.msra.mxu0 %v2090
    %2108 = vmatpush.msra.mxu0 %v2089
    %2109 = vmatpush.msra.mxu0 %v2088
    %2110 = vmatpush.msra.mxu0 %v2087
    %2111 = vmatpush.msra.mxu0 %v2086
    %2112 = vmatpush.msra.mxu0 %v2085
    %2113 = vmatpush.msra.mxu0 %v2084
    %2114 = vmatpush.msra.mxu0 %v2083
    %2115 = vmatpush.msra.mxu0 %v2082
    %2116 = vmatpush.msra.mxu0 %v2081
    %2117 = vmatpush.msra.mxu0 %v2080
    %2118 = vmatpush.msra.mxu0 %v2079
    %2119 = vmatpush.msra.mxu0 %v2078
    %2120 = vmatpush.msra.mxu0 %v2077
    %2121 = vmatpush.msra.mxu0 %v2076
    %2122 = vmatpush.msra.mxu0 %v2075
    %2123 = vmatmul.f32.gmra.mxu0 %v2014
    %v2124 = vpop.f32.mrf.mxu0
    %v2125 = vadd.f32 0.0, %v2124
    %2126 = vdwg.mxu0
    %2127 = vmatpush.msra.mxu0 %v2106
    %2128 = vmatpush.msra.mxu0 %v2105
    %2129 = vmatpush.msra.mxu0 %v2104
    %2130 = vmatpush.msra.mxu0 %v2103
    %2131 = vmatpush.msra.mxu0 %v2102
    %2132 = vmatpush.msra.mxu0 %v2101
    %2133 = vmatpush.msra.mxu0 %v2100
    %2134 = vmatpush.msra.mxu0 %v2099
    %2135 = vmatpush.msra.mxu0 %v2098
    %2136 = vmatpush.msra.mxu0 %v2097
    %2137 = vmatpush.msra.mxu0 %v2096
    %2138 = vmatpush.msra.mxu0 %v2095
    %2139 = vmatpush.msra.mxu0 %v2094
    %2140 = vmatpush.msra.mxu0 %v2093
    %2141 = vmatpush.msra.mxu0 %v2092
    %2142 = vmatpush.msra.mxu0 %v2091
    %2143 = vmatmul.f32.gmra.mxu0 %v2040
    %v2144 = vpop.f32.mrf.mxu0
    %v2145 = vadd.f32 %v2125, %v2144
    %2146 = vdwg.mxu0
    %v2147 = vmul.f32 %v2014, %v2014
    %v2148 = vmul.f32 %v2040, %v2040
    %2149 = vmatpush.msra.mxu0 %v2090
    %2150 = vmatpush.msra.mxu0 %v2089
    %2151 = vmatpush.msra.mxu0 %v2088
    %2152 = vmatpush.msra.mxu0 %v2087
    %2153 = vmatpush.msra.mxu0 %v2086
    %2154 = vmatpush.msra.mxu0 %v2085
    %2155 = vmatpush.msra.mxu0 %v2084
    %2156 = vmatpush.msra.mxu0 %v2083
    %2157 = vmatpush.msra.mxu0 %v2082
    %2158 = vmatpush.msra.mxu0 %v2081
    %2159 = vmatpush.msra.mxu0 %v2080
    %2160 = vmatpush.msra.mxu0 %v2079
    %2161 = vmatpush.msra.mxu0 %v2078
    %2162 = vmatpush.msra.mxu0 %v2077
    %2163 = vmatpush.msra.mxu0 %v2076
    %2164 = vmatpush.msra.mxu0 %v2075
    %2165 = vmatmul.f32.gmra.mxu0 %v2147
    %v2166 = vpop.f32.mrf.mxu0
    %v2167 = vadd.f32 0.0, %v2166
    %2168 = vdwg.mxu0
    %2169 = vmatpush.msra.mxu0 %v2106
    %2170 = vmatpush.msra.mxu0 %v2105
    %2171 = vmatpush.msra.mxu0 %v2104
    %2172 = vmatpush.msra.mxu0 %v2103
    %2173 = vmatpush.msra.mxu0 %v2102
    %2174 = vmatpush.msra.mxu0 %v2101
    %2175 = vmatpush.msra.mxu0 %v2100
    %2176 = vmatpush.msra.mxu0 %v2099
    %2177 = vmatpush.msra.mxu0 %v2098
    %2178 = vmatpush.msra.mxu0 %v2097
    %2179 = vmatpush.msra.mxu0 %v2096
    %2180 = vmatpush.msra.mxu0 %v2095
    %2181 = vmatpush.msra.mxu0 %v2094
    %2182 = vmatpush.msra.mxu0 %v2093
    %2183 = vmatpush.msra.mxu0 %v2092
    %2184 = vmatpush.msra.mxu0 %v2091
    %2185 = vmatmul.f32.gmra.mxu0 %v2148
    %v2186 = vpop.f32.mrf.mxu0
    %v2187 = vadd.f32 %v2167, %v2186
    %2188 = vdwg.mxu0
    %v2189 = vmul.f32 %v2145, %v2145
    %v2190 = vsub.f32 %v2187, %v2189
    %v2191 = vmax.f32 %v2190, 0.0
    %v2192 = vadd.f32 %v2191, 1e-05
    %v2193 = vrsqrt.pop %v2192
    %v2194 = vmul.f32 %v2193, %v2192
    %v2195 = vmul.f32 %v2194, %v2193
    %v2196 = vmul.f32 0.5, %v2195
    %v2197 = vsub.f32 1.5, %v2196
    %v2198 = vmul.f32 %v2193, %v2197
    %vm2199 = vweird.f32 %v2192
    %vm2200 = vweird.f32 %v2193
    %vm2201 = vmor %vm2199, %vm2200
    %v2202 = vsel %vm2201, %v2193, %v2198
    %v2203 = vsub.f32 0.0, %v2145
    %v2204 = vmul.f32 %v2203, %v2202
    %v2205 = vld [vmem:[#allocation2 + $0x1400] sm:$0xff]
    %v2206 = vld [vmem:[#allocation2 + $0x1410] sm:$0xff]
    %v2207 = vld [vmem:[#allocation2 + $0x1420] sm:$0xff]
    %v2208 = vld [vmem:[#allocation2 + $0x1430] sm:$0xff]
    %v2209 = vld [vmem:[#allocation2 + $0x1440] sm:$0xff]
    %v2210 = vld [vmem:[#allocation2 + $0x1450] sm:$0xff]
    %v2211 = vld [vmem:[#allocation2 + $0x1460] sm:$0xff]
    %v2212 = vld [vmem:[#allocation2 + $0x1470] sm:$0xff]
    %v2213 = vld [vmem:[#allocation2 + $0x1480] sm:$0xff]
    %v2214 = vld [vmem:[#allocation2 + $0x1490] sm:$0xff]
    %v2215 = vld [vmem:[#allocation2 + $0x14a0] sm:$0xff]
    %v2216 = vld [vmem:[#allocation2 + $0x14b0] sm:$0xff]
    %v2217 = vld [vmem:[#allocation2 + $0x14c0] sm:$0xff]
    %v2218 = vld [vmem:[#allocation2 + $0x14d0] sm:$0xff]
    %v2219 = vld [vmem:[#allocation2 + $0x14e0] sm:$0xff]
    %v2220 = vld [vmem:[#allocation2 + $0x14f0] sm:$0xff]
    %v2221 = vunpack.c.l.bf16 %v2205
    %v2222 = vunpack.c.h.bf16 %v2205
    %v2223 = vunpack.c.l.bf16 %v2206
    %v2224 = vunpack.c.h.bf16 %v2206
    %v2225 = vunpack.c.l.bf16 %v2207
    %v2226 = vunpack.c.h.bf16 %v2207
    %v2227 = vunpack.c.l.bf16 %v2208
    %v2228 = vunpack.c.h.bf16 %v2208
    %v2229 = vunpack.c.l.bf16 %v2209
    %v2230 = vunpack.c.h.bf16 %v2209
    %v2231 = vunpack.c.l.bf16 %v2210
    %v2232 = vunpack.c.h.bf16 %v2210
    %v2233 = vunpack.c.l.bf16 %v2211
    %v2234 = vunpack.c.h.bf16 %v2211
    %v2235 = vunpack.c.l.bf16 %v2212
    %v2236 = vunpack.c.h.bf16 %v2212
    %v2237 = vunpack.c.l.bf16 %v2213
    %v2238 = vunpack.c.h.bf16 %v2213
    %v2239 = vunpack.c.l.bf16 %v2214
    %v2240 = vunpack.c.h.bf16 %v2214
    %v2241 = vunpack.c.l.bf16 %v2215
    %v2242 = vunpack.c.h.bf16 %v2215
    %v2243 = vunpack.c.l.bf16 %v2216
    %v2244 = vunpack.c.h.bf16 %v2216
    %v2245 = vunpack.c.l.bf16 %v2217
    %v2246 = vunpack.c.h.bf16 %v2217
    %v2247 = vunpack.c.l.bf16 %v2218
    %v2248 = vunpack.c.h.bf16 %v2218
    %v2249 = vunpack.c.l.bf16 %v2219
    %v2250 = vunpack.c.h.bf16 %v2219
    %v2251 = vunpack.c.l.bf16 %v2220
    %v2252 = vunpack.c.h.bf16 %v2220
    %2253 = vmatpush.msra.mxu0 %v2251
    %2254 = vmatpush.msra.mxu0 %v2249
    %2255 = vmatpush.msra.mxu0 %v2247
    %2256 = vmatpush.msra.mxu0 %v2245
    %2257 = vmatpush.msra.mxu0 %v2243
    %2258 = vmatpush.msra.mxu0 %v2241
    %2259 = vmatpush.msra.mxu0 %v2239
    %2260 = vmatpush.msra.mxu0 %v2237
    %2261 = vmatpush.msra.mxu0 %v2235
    %2262 = vmatpush.msra.mxu0 %v2233
    %2263 = vmatpush.msra.mxu0 %v2231
    %2264 = vmatpush.msra.mxu0 %v2229
    %2265 = vmatpush.msra.mxu0 %v2227
    %2266 = vmatpush.msra.mxu0 %v2225
    %2267 = vmatpush.msra.mxu0 %v2223
    %2268 = vmatpush.msra.mxu0 %v2221
    %2269 = vmatmul.f32.gmra.mxu0 %v2202
    %v2270 = vpop.f32.mrf.mxu0
    %v2271 = vadd.f32 0.0, %v2270
    %2272 = vmatmul.f32.gmra.mxu0 %v2204
    %v2273 = vpop.f32.mrf.mxu0
    %v2274 = vadd.f32 0.0, %v2273
    %2275 = vdwg.mxu0
    %2276 = vmatpush.msra.mxu0 %v2252
    %2277 = vmatpush.msra.mxu0 %v2250
    %2278 = vmatpush.msra.mxu0 %v2248
    %2279 = vmatpush.msra.mxu0 %v2246
    %2280 = vmatpush.msra.mxu0 %v2244
    %2281 = vmatpush.msra.mxu0 %v2242
    %2282 = vmatpush.msra.mxu0 %v2240
    %2283 = vmatpush.msra.mxu0 %v2238
    %2284 = vmatpush.msra.mxu0 %v2236
    %2285 = vmatpush.msra.mxu0 %v2234
    %2286 = vmatpush.msra.mxu0 %v2232
    %2287 = vmatpush.msra.mxu0 %v2230
    %2288 = vmatpush.msra.mxu0 %v2228
    %2289 = vmatpush.msra.mxu0 %v2226
    %2290 = vmatpush.msra.mxu0 %v2224
    %2291 = vmatpush.msra.mxu0 %v2222
    %2292 = vmatmul.f32.gmra.mxu0 %v2202
    %v2293 = vpop.f32.mrf.mxu0
    %v2294 = vadd.f32 0.0, %v2293
    %2295 = vmatmul.f32.gmra.mxu0 %v2204
    %v2296 = vpop.f32.mrf.mxu0
    %v2297 = vadd.f32 0.0, %v2296
    %2298 = vdwg.mxu0
    %v2299 = vmul.f32 %v2014, %v2271
    %v2300 = vmul.f32 %v2040, %v2294
    %v2301 = vadd.f32 %v2299, %v2274
    %v2302 = vadd.f32 %v2300, %v2297
    %v2303 = vmax.f32 %v2301, 0.0
    %v2304 = vmax.f32 %v2302, 0.0
    %v2305 = vpack.c.bf16 %v2303, %v2303
    %v2306 = vpack.c.bf16 %v2304, %v2304
    %v2307 = vld [vmem:[#allocation2 + $0x1500] sm:$0xff]
    %v2308 = vld [vmem:[#allocation2 + $0x1508] sm:$0xff]
    %v2309 = vld [vmem:[#allocation2 + $0x1510] sm:$0xff]
    %v2310 = vld [vmem:[#allocation2 + $0x1518] sm:$0xff]
    %v2311 = vld [vmem:[#allocation2 + $0x1520] sm:$0xff]
    %v2312 = vld [vmem:[#allocation2 + $0x1528] sm:$0xff]
    %v2313 = vld [vmem:[#allocation2 + $0x1530] sm:$0xff]
    %v2314 = vld [vmem:[#allocation2 + $0x1538] sm:$0xff]
    %v2315 = vld [vmem:[#allocation2 + $0x1540] sm:$0xff]
    %v2316 = vld [vmem:[#allocation2 + $0x1548] sm:$0xff]
    %v2317 = vld [vmem:[#allocation2 + $0x1550] sm:$0xff]
    %v2318 = vld [vmem:[#allocation2 + $0x1558] sm:$0xff]
    %v2319 = vld [vmem:[#allocation2 + $0x1560] sm:$0xff]
    %v2320 = vld [vmem:[#allocation2 + $0x1568] sm:$0xff]
    %v2321 = vld [vmem:[#allocation2 + $0x1570] sm:$0xff]
    %v2322 = vld [vmem:[#allocation2 + $0x1578] sm:$0xff]
    %v2323 = vld [vmem:[#allocation2 + $0x1580] sm:$0xff]
    %v2324 = vld [vmem:[#allocation2 + $0x1588] sm:$0xff]
    %v2325 = vld [vmem:[#allocation2 + $0x1590] sm:$0xff]
    %v2326 = vld [vmem:[#allocation2 + $0x1598] sm:$0xff]
    %v2327 = vld [vmem:[#allocation2 + $0x15a0] sm:$0xff]
    %v2328 = vld [vmem:[#allocation2 + $0x15a8] sm:$0xff]
    %v2329 = vld [vmem:[#allocation2 + $0x15b0] sm:$0xff]
    %v2330 = vld [vmem:[#allocation2 + $0x15b8] sm:$0xff]
    %v2331 = vld [vmem:[#allocation2 + $0x15c0] sm:$0xff]
    %v2332 = vld [vmem:[#allocation2 + $0x15c8] sm:$0xff]
    %v2333 = vld [vmem:[#allocation2 + $0x15d0] sm:$0xff]
    %v2334 = vld [vmem:[#allocation2 + $0x15d8] sm:$0xff]
    %v2335 = vld [vmem:[#allocation2 + $0x15e0] sm:$0xff]
    %v2336 = vld [vmem:[#allocation2 + $0x15e8] sm:$0xff]
    %v2337 = vld [vmem:[#allocation2 + $0x15f0] sm:$0xff]
    %v2338 = vld [vmem:[#allocation2 + $0x15f8] sm:$0xff]
    %v2339 = vld [vmem:[#allocation2 + $0x1600] sm:$0xff]
    %v2340 = vld [vmem:[#allocation2 + $0x1608] sm:$0xff]
    %v2341 = vld [vmem:[#allocation2 + $0x1610] sm:$0xff]
    %v2342 = vld [vmem:[#allocation2 + $0x1618] sm:$0xff]
    %v2343 = vld [vmem:[#allocation2 + $0x1620] sm:$0xff]
    %v2344 = vld [vmem:[#allocation2 + $0x1628] sm:$0xff]
    %v2345 = vld [vmem:[#allocation2 + $0x1630] sm:$0xff]
    %v2346 = vld [vmem:[#allocation2 + $0x1638] sm:$0xff]
    %v2347 = vld [vmem:[#allocation2 + $0x1640] sm:$0xff]
    %v2348 = vld [vmem:[#allocation2 + $0x1648] sm:$0xff]
    %v2349 = vld [vmem:[#allocation2 + $0x1650] sm:$0xff]
    %v2350 = vld [vmem:[#allocation2 + $0x1658] sm:$0xff]
    %v2351 = vld [vmem:[#allocation2 + $0x1660] sm:$0xff]
    %v2352 = vld [vmem:[#allocation2 + $0x1668] sm:$0xff]
    %v2353 = vld [vmem:[#allocation2 + $0x1670] sm:$0xff]
    %v2354 = vld [vmem:[#allocation2 + $0x1678] sm:$0xff]
    %v2355 = vld [vmem:[#allocation2 + $0x1680] sm:$0xff]
    %v2356 = vld [vmem:[#allocation2 + $0x1688] sm:$0xff]
    %v2357 = vld [vmem:[#allocation2 + $0x1690] sm:$0xff]
    %v2358 = vld [vmem:[#allocation2 + $0x1698] sm:$0xff]
    %v2359 = vld [vmem:[#allocation2 + $0x16a0] sm:$0xff]
    %v2360 = vld [vmem:[#allocation2 + $0x16a8] sm:$0xff]
    %v2361 = vld [vmem:[#allocation2 + $0x16b0] sm:$0xff]
    %v2362 = vld [vmem:[#allocation2 + $0x16b8] sm:$0xff]
    %v2363 = vld [vmem:[#allocation2 + $0x16c0] sm:$0xff]
    %v2364 = vld [vmem:[#allocation2 + $0x16c8] sm:$0xff]
    %v2365 = vld [vmem:[#allocation2 + $0x16d0] sm:$0xff]
    %v2366 = vld [vmem:[#allocation2 + $0x16d8] sm:$0xff]
    %v2367 = vld [vmem:[#allocation2 + $0x16e0] sm:$0xff]
    %v2368 = vld [vmem:[#allocation2 + $0x16e8] sm:$0xff]
    %v2369 = vld [vmem:[#allocation2 + $0x16f0] sm:$0xff]
    %v2370 = vld [vmem:[#allocation2 + $0x16f8] sm:$0xff]
    %v2435 = vunpack.c.l.b16 %v2307
    %v2436 = vunpack.c.h.b16 %v2307
    %v2437 = vunpack.c.l.b16 %v2308
    %v2438 = vunpack.c.h.b16 %v2308
    %v2439 = vunpack.c.l.b16 %v2309
    %v2440 = vunpack.c.h.b16 %v2309
    %v2441 = vunpack.c.l.b16 %v2310
    %v2442 = vunpack.c.h.b16 %v2310
    %v2443 = vunpack.c.l.b16 %v2311
    %v2444 = vunpack.c.h.b16 %v2311
    %v2445 = vunpack.c.l.b16 %v2312
    %v2446 = vunpack.c.h.b16 %v2312
    %v2447 = vunpack.c.l.b16 %v2313
    %v2448 = vunpack.c.h.b16 %v2313
    %v2449 = vunpack.c.l.b16 %v2314
    %v2450 = vunpack.c.h.b16 %v2314
    %v2451 = vunpack.c.l.b16 %v2315
    %v2452 = vunpack.c.h.b16 %v2315
    %v2453 = vunpack.c.l.b16 %v2316
    %v2454 = vunpack.c.h.b16 %v2316
    %v2455 = vunpack.c.l.b16 %v2317
    %v2456 = vunpack.c.h.b16 %v2317
    %v2457 = vunpack.c.l.b16 %v2318
    %v2458 = vunpack.c.h.b16 %v2318
    %v2459 = vunpack.c.l.b16 %v2319
    %v2460 = vunpack.c.h.b16 %v2319
    %v2461 = vunpack.c.l.b16 %v2320
    %v2462 = vunpack.c.h.b16 %v2320
    %v2463 = vunpack.c.l.b16 %v2321
    %v2464 = vunpack.c.h.b16 %v2321
    %v2465 = vunpack.c.l.b16 %v2322
    %v2466 = vunpack.c.h.b16 %v2322
    %v2467 = vunpack.c.l.b16 %v2323
    %v2468 = vunpack.c.h.b16 %v2323
    %v2469 = vunpack.c.l.b16 %v2324
    %v2470 = vunpack.c.h.b16 %v2324
    %v2471 = vunpack.c.l.b16 %v2325
    %v2472 = vunpack.c.h.b16 %v2325
    %v2473 = vunpack.c.l.b16 %v2326
    %v2474 = vunpack.c.h.b16 %v2326
    %v2475 = vunpack.c.l.b16 %v2327
    %v2476 = vunpack.c.h.b16 %v2327
    %v2477 = vunpack.c.l.b16 %v2328
    %v2478 = vunpack.c.h.b16 %v2328
    %v2479 = vunpack.c.l.b16 %v2329
    %v2480 = vunpack.c.h.b16 %v2329
    %v2481 = vunpack.c.l.b16 %v2330
    %v2482 = vunpack.c.h.b16 %v2330
    %v2483 = vunpack.c.l.b16 %v2331
    %v2484 = vunpack.c.h.b16 %v2331
    %v2485 = vunpack.c.l.b16 %v2332
    %v2486 = vunpack.c.h.b16 %v2332
    %v2487 = vunpack.c.l.b16 %v2333
    %v2488 = vunpack.c.h.b16 %v2333
    %v2489 = vunpack.c.l.b16 %v2334
    %v2490 = vunpack.c.h.b16 %v2334
    %v2491 = vunpack.c.l.b16 %v2335
    %v2492 = vunpack.c.h.b16 %v2335
    %v2493 = vunpack.c.l.b16 %v2336
    %v2494 = vunpack.c.h.b16 %v2336
    %v2495 = vunpack.c.l.b16 %v2337
    %v2496 = vunpack.c.h.b16 %v2337
    %v2497 = vunpack.c.l.b16 %v2338
    %v2498 = vunpack.c.h.b16 %v2338
    %v2499 = vunpack.c.l.b16 %v2339
    %v2500 = vunpack.c.h.b16 %v2339
    %v2501 = vunpack.c.l.b16 %v2340
    %v2502 = vunpack.c.h.b16 %v2340
    %v2503 = vunpack.c.l.b16 %v2341
    %v2504 = vunpack.c.h.b16 %v2341
    %v2505 = vunpack.c.l.b16 %v2342
    %v2506 = vunpack.c.h.b16 %v2342
    %v2507 = vunpack.c.l.b16 %v2343
    %v2508 = vunpack.c.h.b16 %v2343
    %v2509 = vunpack.c.l.b16 %v2344
    %v2510 = vunpack.c.h.b16 %v2344
    %v2511 = vunpack.c.l.b16 %v2345
    %v2512 = vunpack.c.h.b16 %v2345
    %v2513 = vunpack.c.l.b16 %v2346
    %v2514 = vunpack.c.h.b16 %v2346
    %v2515 = vunpack.c.l.b16 %v2347
    %v2516 = vunpack.c.h.b16 %v2347
    %v2517 = vunpack.c.l.b16 %v2348
    %v2518 = vunpack.c.h.b16 %v2348
    %v2519 = vunpack.c.l.b16 %v2349
    %v2520 = vunpack.c.h.b16 %v2349
    %v2521 = vunpack.c.l.b16 %v2350
    %v2522 = vunpack.c.h.b16 %v2350
    %v2523 = vunpack.c.l.b16 %v2351
    %v2524 = vunpack.c.h.b16 %v2351
    %v2525 = vunpack.c.l.b16 %v2352
    %v2526 = vunpack.c.h.b16 %v2352
    %v2527 = vunpack.c.l.b16 %v2353
    %v2528 = vunpack.c.h.b16 %v2353
    %v2529 = vunpack.c.l.b16 %v2354
    %v2530 = vunpack.c.h.b16 %v2354
    %v2531 = vunpack.c.l.b16 %v2355
    %v2532 = vunpack.c.h.b16 %v2355
    %v2533 = vunpack.c.l.b16 %v2356
    %v2534 = vunpack.c.h.b16 %v2356
    %v2535 = vunpack.c.l.b16 %v2357
    %v2536 = vunpack.c.h.b16 %v2357
    %v2537 = vunpack.c.l.b16 %v2358
    %v2538 = vunpack.c.h.b16 %v2358
    %v2539 = vunpack.c.l.b16 %v2359
    %v2540 = vunpack.c.h.b16 %v2359
    %v2541 = vunpack.c.l.b16 %v2360
    %v2542 = vunpack.c.h.b16 %v2360
    %v2543 = vunpack.c.l.b16 %v2361
    %v2544 = vunpack.c.h.b16 %v2361
    %v2545 = vunpack.c.l.b16 %v2362
    %v2546 = vunpack.c.h.b16 %v2362
    %v2547 = vunpack.c.l.b16 %v2363
    %v2548 = vunpack.c.h.b16 %v2363
    %v2549 = vunpack.c.l.b16 %v2364
    %v2550 = vunpack.c.h.b16 %v2364
    %v2551 = vunpack.c.l.b16 %v2365
    %v2552 = vunpack.c.h.b16 %v2365
    %v2553 = vunpack.c.l.b16 %v2366
    %v2554 = vunpack.c.h.b16 %v2366
    %v2555 = vunpack.c.l.b16 %v2367
    %v2556 = vunpack.c.h.b16 %v2367
    %v2557 = vunpack.c.l.b16 %v2368
    %v2558 = vunpack.c.h.b16 %v2368
    %v2559 = vunpack.c.l.b16 %v2369
    %v2560 = vunpack.c.h.b16 %v2369
    %v2561 = vunpack.c.l.b16 %v2370
    %v2562 = vunpack.c.h.b16 %v2370
    %v2563 = vpack.c.b16 %v2439, %v2435
    %v2564 = vpack.c.b16 %v2440, %v2436
    %v2565 = vpack.c.b16 %v2441, %v2437
    %v2566 = vpack.c.b16 %v2442, %v2438
    %v2567 = vpack.c.b16 %v2447, %v2443
    %v2568 = vpack.c.b16 %v2448, %v2444
    %v2569 = vpack.c.b16 %v2449, %v2445
    %v2570 = vpack.c.b16 %v2450, %v2446
    %v2571 = vpack.c.b16 %v2455, %v2451
    %v2572 = vpack.c.b16 %v2456, %v2452
    %v2573 = vpack.c.b16 %v2457, %v2453
    %v2574 = vpack.c.b16 %v2458, %v2454
    %v2575 = vpack.c.b16 %v2463, %v2459
    %v2576 = vpack.c.b16 %v2464, %v2460
    %v2577 = vpack.c.b16 %v2465, %v2461
    %v2578 = vpack.c.b16 %v2466, %v2462
    %v2579 = vpack.c.b16 %v2471, %v2467
    %v2580 = vpack.c.b16 %v2472, %v2468
    %v2581 = vpack.c.b16 %v2473, %v2469
    %v2582 = vpack.c.b16 %v2474, %v2470
    %v2583 = vpack.c.b16 %v2479, %v2475
    %v2584 = vpack.c.b16 %v2480, %v2476
    %v2585 = vpack.c.b16 %v2481, %v2477
    %v2586 = vpack.c.b16 %v2482, %v2478
    %v2587 = vpack.c.b16 %v2487, %v2483
    %v2588 = vpack.c.b16 %v2488, %v2484
    %v2589 = vpack.c.b16 %v2489, %v2485
    %v2590 = vpack.c.b16 %v2490, %v2486
    %v2591 = vpack.c.b16 %v2495, %v2491
    %v2592 = vpack.c.b16 %v2496, %v2492
    %v2593 = vpack.c.b16 %v2497, %v2493
    %v2594 = vpack.c.b16 %v2498, %v2494
    %v2595 = vpack.c.b16 %v2503, %v2499
    %v2596 = vpack.c.b16 %v2504, %v2500
    %v2597 = vpack.c.b16 %v2505, %v2501
    %v2598 = vpack.c.b16 %v2506, %v2502
    %v2599 = vpack.c.b16 %v2511, %v2507
    %v2600 = vpack.c.b16 %v2512, %v2508
    %v2601 = vpack.c.b16 %v2513, %v2509
    %v2602 = vpack.c.b16 %v2514, %v2510
    %v2603 = vpack.c.b16 %v2519, %v2515
    %v2604 = vpack.c.b16 %v2520, %v2516
    %v2605 = vpack.c.b16 %v2521, %v2517
    %v2606 = vpack.c.b16 %v2522, %v2518
    %v2607 = vpack.c.b16 %v2527, %v2523
    %v2608 = vpack.c.b16 %v2528, %v2524
    %v2609 = vpack.c.b16 %v2529, %v2525
    %v2610 = vpack.c.b16 %v2530, %v2526
    %v2611 = vpack.c.b16 %v2535, %v2531
    %v2612 = vpack.c.b16 %v2536, %v2532
    %v2613 = vpack.c.b16 %v2537, %v2533
    %v2614 = vpack.c.b16 %v2538, %v2534
    %v2615 = vpack.c.b16 %v2543, %v2539
    %v2616 = vpack.c.b16 %v2544, %v2540
    %v2617 = vpack.c.b16 %v2545, %v2541
    %v2618 = vpack.c.b16 %v2546, %v2542
    %v2619 = vpack.c.b16 %v2551, %v2547
    %v2620 = vpack.c.b16 %v2552, %v2548
    %v2621 = vpack.c.b16 %v2553, %v2549
    %v2622 = vpack.c.b16 %v2554, %v2550
    %v2623 = vpack.c.b16 %v2559, %v2555
    %v2624 = vpack.c.b16 %v2560, %v2556
    %v2625 = vpack.c.b16 %v2561, %v2557
    %v2626 = vpack.c.b16 %v2562, %v2558
    %2691 = vmatpush.bf16.msra.mxu0 %v2591
    %2692 = vmatpush.bf16.msra.mxu0 %v2587
    %2693 = vmatpush.bf16.msra.mxu0 %v2583
    %2694 = vmatpush.bf16.msra.mxu0 %v2579
    %2695 = vmatpush.bf16.msra.mxu0 %v2575
    %2696 = vmatpush.bf16.msra.mxu0 %v2571
    %2697 = vmatpush.bf16.msra.mxu0 %v2567
    %2698 = vmatpush.bf16.msra.mxu0 %v2563
    %2699 = vmatmul.bf16.gmra.mxu0 %v2305
    %v2700 = vpop.f32.mrf.mxu0
    %v2701 = vadd.f32 0.0, %v2700
    %v2702 = vpop.f32.mrf.mxu0
    %2703 = vdwg.mxu0
    %2704 = vmatpush.bf16.msra.mxu0 %v2623
    %2705 = vmatpush.bf16.msra.mxu0 %v2619
    %2706 = vmatpush.bf16.msra.mxu0 %v2615
    %2707 = vmatpush.bf16.msra.mxu0 %v2611
    %2708 = vmatpush.bf16.msra.mxu0 %v2607
    %2709 = vmatpush.bf16.msra.mxu0 %v2603
    %2710 = vmatpush.bf16.msra.mxu0 %v2599
    %2711 = vmatpush.bf16.msra.mxu0 %v2595
    %2712 = vmatmul.bf16.gmra.mxu0 %v2306
    %v2713 = vpop.f32.mrf.mxu0
    %v2714 = vadd.f32 %v2701, %v2713
    %v2715 = vpop.f32.mrf.mxu0
    %2716 = vdwg.mxu0
    %2717 = vmatpush.bf16.msra.mxu0 %v2592
    %2718 = vmatpush.bf16.msra.mxu0 %v2588
    %2719 = vmatpush.bf16.msra.mxu0 %v2584
    %2720 = vmatpush.bf16.msra.mxu0 %v2580
    %2721 = vmatpush.bf16.msra.mxu0 %v2576
    %2722 = vmatpush.bf16.msra.mxu0 %v2572
    %2723 = vmatpush.bf16.msra.mxu0 %v2568
    %2724 = vmatpush.bf16.msra.mxu0 %v2564
    %2725 = vmatmul.bf16.gmra.mxu0 %v2305
    %v2726 = vpop.f32.mrf.mxu0
    %v2727 = vadd.f32 0.0, %v2726
    %v2728 = vpop.f32.mrf.mxu0
    %2729 = vdwg.mxu0
    %2730 = vmatpush.bf16.msra.mxu0 %v2624
    %2731 = vmatpush.bf16.msra.mxu0 %v2620
    %2732 = vmatpush.bf16.msra.mxu0 %v2616
    %2733 = vmatpush.bf16.msra.mxu0 %v2612
    %2734 = vmatpush.bf16.msra.mxu0 %v2608
    %2735 = vmatpush.bf16.msra.mxu0 %v2604
    %2736 = vmatpush.bf16.msra.mxu0 %v2600
    %2737 = vmatpush.bf16.msra.mxu0 %v2596
    %2738 = vmatmul.bf16.gmra.mxu0 %v2306
    %v2739 = vpop.f32.mrf.mxu0
    %v2740 = vadd.f32 %v2727, %v2739
    %v2741 = vpop.f32.mrf.mxu0
    %2742 = vdwg.mxu0
    %2743 = vmatpush.bf16.msra.mxu0 %v2593
    %2744 = vmatpush.bf16.msra.mxu0 %v2589
    %2745 = vmatpush.bf16.msra.mxu0 %v2585
    %2746 = vmatpush.bf16.msra.mxu0 %v2581
    %2747 = vmatpush.bf16.msra.mxu0 %v2577
    %2748 = vmatpush.bf16.msra.mxu0 %v2573
    %2749 = vmatpush.bf16.msra.mxu0 %v2569
    %2750 = vmatpush.bf16.msra.mxu0 %v2565
    %2751 = vmatmul.bf16.gmra.mxu0 %v2305
    %v2752 = vpop.f32.mrf.mxu0
    %v2753 = vadd.f32 0.0, %v2752
    %v2754 = vpop.f32.mrf.mxu0
    %2755 = vdwg.mxu0
    %2756 = vmatpush.bf16.msra.mxu0 %v2625
    %2757 = vmatpush.bf16.msra.mxu0 %v2621
    %2758 = vmatpush.bf16.msra.mxu0 %v2617
    %2759 = vmatpush.bf16.msra.mxu0 %v2613
    %2760 = vmatpush.bf16.msra.mxu0 %v2609
    %2761 = vmatpush.bf16.msra.mxu0 %v2605
    %2762 = vmatpush.bf16.msra.mxu0 %v2601
    %2763 = vmatpush.bf16.msra.mxu0 %v2597
    %2764 = vmatmul.bf16.gmra.mxu0 %v2306
    %v2765 = vpop.f32.mrf.mxu0
    %v2766 = vadd.f32 %v2753, %v2765
    %v2767 = vpop.f32.mrf.mxu0
    %2768 = vdwg.mxu0
    %2769 = vmatpush.bf16.msra.mxu0 %v2594
    %2770 = vmatpush.bf16.msra.mxu0 %v2590
    %2771 = vmatpush.bf16.msra.mxu0 %v2586
    %2772 = vmatpush.bf16.msra.mxu0 %v2582
    %2773 = vmatpush.bf16.msra.mxu0 %v2578
    %2774 = vmatpush.bf16.msra.mxu0 %v2574
    %2775 = vmatpush.bf16.msra.mxu0 %v2570
    %2776 = vmatpush.bf16.msra.mxu0 %v2566
    %2777 = vmatmul.bf16.gmra.mxu0 %v2305
    %v2778 = vpop.f32.mrf.mxu0
    %v2779 = vadd.f32 0.0, %v2778
    %v2780 = vpop.f32.mrf.mxu0
    %2781 = vdwg.mxu0
    %2782 = vmatpush.bf16.msra.mxu0 %v2626
    %2783 = vmatpush.bf16.msra.mxu0 %v2622
    %2784 = vmatpush.bf16.msra.mxu0 %v2618
    %2785 = vmatpush.bf16.msra.mxu0 %v2614
    %2786 = vmatpush.bf16.msra.mxu0 %v2610
    %2787 = vmatpush.bf16.msra.mxu0 %v2606
    %2788 = vmatpush.bf16.msra.mxu0 %v2602
    %2789 = vmatpush.bf16.msra.mxu0 %v2598
    %2790 = vmatmul.bf16.gmra.mxu0 %v2306
    %v2791 = vpop.f32.mrf.mxu0
    %v2792 = vadd.f32 %v2779, %v2791
    %v2793 = vpop.f32.mrf.mxu0
    %2794 = vdwg.mxu0
    %v2795 = vld [vmem:[#allocation2 + $0x1700] sm:$0xf]
    %v2796 = vld [vmem:[#allocation2 + $0x1710] sm:$0xf]
    %v2797 = vld [vmem:[#allocation2 + $0x1720] sm:$0xf]
    %v2798 = vld [vmem:[#allocation2 + $0x1730] sm:$0xf]
    %v2799 = vld [vmem:[#allocation2 + $0x1740] sm:$0xf]
    %v2800 = vld [vmem:[#allocation2 + $0x1750] sm:$0xf]
    %v2801 = vld [vmem:[#allocation2 + $0x1760] sm:$0xf]
    %v2802 = vld [vmem:[#allocation2 + $0x1770] sm:$0xf]
    %v2803 = vld [vmem:[#allocation2 + $0x1780] sm:$0xf]
    %v2804 = vld [vmem:[#allocation2 + $0x1790] sm:$0xf]
    %v2805 = vld [vmem:[#allocation2 + $0x17a0] sm:$0xf]
    %v2806 = vld [vmem:[#allocation2 + $0x17b0] sm:$0xf]
    %v2807 = vld [vmem:[#allocation2 + $0x17c0] sm:$0xf]
    %v2808 = vld [vmem:[#allocation2 + $0x17d0] sm:$0xf]
    %v2809 = vld [vmem:[#allocation2 + $0x17e0] sm:$0xf]
    %v2810 = vld [vmem:[#allocation2 + $0x17f0] sm:$0xf]
    %v2811 = vld [vmem:[#allocation2 + $0x1800] sm:$0xf]
    %v2812 = vld [vmem:[#allocation2 + $0x1810] sm:$0xf]
    %v2813 = vld [vmem:[#allocation2 + $0x1820] sm:$0xf]
    %v2814 = vld [vmem:[#allocation2 + $0x1830] sm:$0xf]
    %v2815 = vld [vmem:[#allocation2 + $0x1840] sm:$0xf]
    %v2816 = vld [vmem:[#allocation2 + $0x1850] sm:$0xf]
    %v2817 = vld [vmem:[#allocation2 + $0x1860] sm:$0xf]
    %v2818 = vld [vmem:[#allocation2 + $0x1870] sm:$0xf]
    %v2819 = vld [vmem:[#allocation2 + $0x1880] sm:$0xf]
    %v2820 = vld [vmem:[#allocation2 + $0x1890] sm:$0xf]
    %v2821 = vld [vmem:[#allocation2 + $0x18a0] sm:$0xf]
    %v2822 = vld [vmem:[#allocation2 + $0x18b0] sm:$0xf]
    %v2823 = vld [vmem:[#allocation2 + $0x18c0] sm:$0xf]
    %v2824 = vld [vmem:[#allocation2 + $0x18d0] sm:$0xf]
    %v2825 = vld [vmem:[#allocation2 + $0x18e0] sm:$0xf]
    %v2826 = vld [vmem:[#allocation2 + $0x18f0] sm:$0xf]
    %v2827 = vld [vmem:[#allocation2 + $0x1900] sm:$0xf]
    %v2828 = vld [vmem:[#allocation2 + $0x1910] sm:$0xf]
    %v2829 = vld [vmem:[#allocation2 + $0x1920] sm:$0xf]
    %v2830 = vld [vmem:[#allocation2 + $0x1930] sm:$0xf]
    %v2831 = vld [vmem:[#allocation2 + $0x1940] sm:$0xf]
    %v2832 = vld [vmem:[#allocation2 + $0x1950] sm:$0xf]
    %v2833 = vld [vmem:[#allocation2 + $0x1960] sm:$0xf]
    %v2834 = vld [vmem:[#allocation2 + $0x1970] sm:$0xf]
    %v2835 = vld [vmem:[#allocation2 + $0x1980] sm:$0xf]
    %v2836 = vld [vmem:[#allocation2 + $0x1990] sm:$0xf]
    %v2837 = vld [vmem:[#allocation2 + $0x19a0] sm:$0xf]
    %v2838 = vld [vmem:[#allocation2 + $0x19b0] sm:$0xf]
    %v2839 = vld [vmem:[#allocation2 + $0x19c0] sm:$0xf]
    %v2840 = vld [vmem:[#allocation2 + $0x19d0] sm:$0xf]
    %v2841 = vld [vmem:[#allocation2 + $0x19e0] sm:$0xf]
    %v2842 = vld [vmem:[#allocation2 + $0x19f0] sm:$0xf]
    %v2843 = vld [vmem:[#allocation2 + $0x1a00] sm:$0xf]
    %v2844 = vld [vmem:[#allocation2 + $0x1a10] sm:$0xf]
    %v2845 = vld [vmem:[#allocation2 + $0x1a20] sm:$0xf]
    %v2846 = vld [vmem:[#allocation2 + $0x1a30] sm:$0xf]
    %v2847 = vld [vmem:[#allocation2 + $0x1a40] sm:$0xf]
    %v2848 = vld [vmem:[#allocation2 + $0x1a50] sm:$0xf]
    %v2849 = vld [vmem:[#allocation2 + $0x1a60] sm:$0xf]
    %v2850 = vld [vmem:[#allocation2 + $0x1a70] sm:$0xf]
    %v2851 = vld [vmem:[#allocation2 + $0x1a80] sm:$0xf]
    %v2852 = vld [vmem:[#allocation2 + $0x1a90] sm:$0xf]
    %v2853 = vld [vmem:[#allocation2 + $0x1aa0] sm:$0xf]
    %v2854 = vld [vmem:[#allocation2 + $0x1ab0] sm:$0xf]
    %v2855 = vld [vmem:[#allocation2 + $0x1ac0] sm:$0xf]
    %v2856 = vld [vmem:[#allocation2 + $0x1ad0] sm:$0xf]
    %v2857 = vld [vmem:[#allocation2 + $0x1ae0] sm:$0xf]
    %v2858 = vld [vmem:[#allocation2 + $0x1af0] sm:$0xf]
    %v2859 = vunpack.c.l.bf16 %v2795
    %v2860 = vunpack.c.l.bf16 %v2796
    %v2861 = vunpack.c.l.bf16 %v2797
    %v2862 = vunpack.c.l.bf16 %v2798
    %v2863 = vunpack.c.l.bf16 %v2799
    %v2864 = vunpack.c.l.bf16 %v2800
    %v2865 = vunpack.c.l.bf16 %v2801
    %v2866 = vunpack.c.l.bf16 %v2802
    %v2867 = vunpack.c.l.bf16 %v2803
    %v2868 = vunpack.c.l.bf16 %v2804
    %v2869 = vunpack.c.l.bf16 %v2805
    %v2870 = vunpack.c.l.bf16 %v2806
    %v2871 = vunpack.c.l.bf16 %v2807
    %v2872 = vunpack.c.l.bf16 %v2808
    %v2873 = vunpack.c.l.bf16 %v2809
    %v2874 = vunpack.c.l.bf16 %v2810
    %v2875 = vunpack.c.l.bf16 %v2811
    %v2876 = vunpack.c.l.bf16 %v2812
    %v2877 = vunpack.c.l.bf16 %v2813
    %v2878 = vunpack.c.l.bf16 %v2814
    %v2879 = vunpack.c.l.bf16 %v2815
    %v2880 = vunpack.c.l.bf16 %v2816
    %v2881 = vunpack.c.l.bf16 %v2817
    %v2882 = vunpack.c.l.bf16 %v2818
    %v2883 = vunpack.c.l.bf16 %v2819
    %v2884 = vunpack.c.l.bf16 %v2820
    %v2885 = vunpack.c.l.bf16 %v2821
    %v2886 = vunpack.c.l.bf16 %v2822
    %v2887 = vunpack.c.l.bf16 %v2823
    %v2888 = vunpack.c.l.bf16 %v2824
    %v2889 = vunpack.c.l.bf16 %v2825
    %v2890 = vunpack.c.l.bf16 %v2826
    %v2891 = vunpack.c.l.bf16 %v2827
    %v2892 = vunpack.c.l.bf16 %v2828
    %v2893 = vunpack.c.l.bf16 %v2829
    %v2894 = vunpack.c.l.bf16 %v2830
    %v2895 = vunpack.c.l.bf16 %v2831
    %v2896 = vunpack.c.l.bf16 %v2832
    %v2897 = vunpack.c.l.bf16 %v2833
    %v2898 = vunpack.c.l.bf16 %v2834
    %v2899 = vunpack.c.l.bf16 %v2835
    %v2900 = vunpack.c.l.bf16 %v2836
    %v2901 = vunpack.c.l.bf16 %v2837
    %v2902 = vunpack.c.l.bf16 %v2838
    %v2903 = vunpack.c.l.bf16 %v2839
    %v2904 = vunpack.c.l.bf16 %v2840
    %v2905 = vunpack.c.l.bf16 %v2841
    %v2906 = vunpack.c.l.bf16 %v2842
    %v2907 = vunpack.c.l.bf16 %v2843
    %v2908 = vunpack.c.l.bf16 %v2844
    %v2909 = vunpack.c.l.bf16 %v2845
    %v2910 = vunpack.c.l.bf16 %v2846
    %v2911 = vunpack.c.l.bf16 %v2847
    %v2912 = vunpack.c.l.bf16 %v2848
    %v2913 = vunpack.c.l.bf16 %v2849
    %v2914 = vunpack.c.l.bf16 %v2850
    %v2915 = vunpack.c.l.bf16 %v2851
    %v2916 = vunpack.c.l.bf16 %v2852
    %v2917 = vunpack.c.l.bf16 %v2853
    %v2918 = vunpack.c.l.bf16 %v2854
    %v2919 = vunpack.c.l.bf16 %v2855
    %v2920 = vunpack.c.l.bf16 %v2856
    %v2921 = vunpack.c.l.bf16 %v2857
    %v2922 = vunpack.c.l.bf16 %v2858
    %2923 = vmatpush.msra.mxu0 %v2874
    %2924 = vmatpush.msra.mxu0 %v2873
    %2925 = vmatpush.msra.mxu0 %v2872
    %2926 = vmatpush.msra.mxu0 %v2871
    %2927 = vmatpush.msra.mxu0 %v2870
    %2928 = vmatpush.msra.mxu0 %v2869
    %2929 = vmatpush.msra.mxu0 %v2868
    %2930 = vmatpush.msra.mxu0 %v2867
    %2931 = vmatpush.msra.mxu0 %v2866
    %2932 = vmatpush.msra.mxu0 %v2865
    %2933 = vmatpush.msra.mxu0 %v2864
    %2934 = vmatpush.msra.mxu0 %v2863
    %2935 = vmatpush.msra.mxu0 %v2862
    %2936 = vmatpush.msra.mxu0 %v2861
    %2937 = vmatpush.msra.mxu0 %v2860
    %2938 = vmatpush.msra.mxu0 %v2859
    %2939 = vmatmul.f32.gmra.mxu0 %v2714
    %v2940 = vpop.f32.mrf.mxu0
    %v2941 = vadd.f32 0.0, %v2940
    %2942 = vdwg.mxu0
    %2943 = vmatpush.msra.mxu0 %v2890
    %2944 = vmatpush.msra.mxu0 %v2889
    %2945 = vmatpush.msra.mxu0 %v2888
    %2946 = vmatpush.msra.mxu0 %v2887
    %2947 = vmatpush.msra.mxu0 %v2886
    %2948 = vmatpush.msra.mxu0 %v2885
    %2949 = vmatpush.msra.mxu0 %v2884
    %2950 = vmatpush.msra.mxu0 %v2883
    %2951 = vmatpush.msra.mxu0 %v2882
    %2952 = vmatpush.msra.mxu0 %v2881
    %2953 = vmatpush.msra.mxu0 %v2880
    %2954 = vmatpush.msra.mxu0 %v2879
    %2955 = vmatpush.msra.mxu0 %v2878
    %2956 = vmatpush.msra.mxu0 %v2877
    %2957 = vmatpush.msra.mxu0 %v2876
    %2958 = vmatpush.msra.mxu0 %v2875
    %2959 = vmatmul.f32.gmra.mxu0 %v2740
    %v2960 = vpop.f32.mrf.mxu0
    %v2961 = vadd.f32 %v2941, %v2960
    %2962 = vdwg.mxu0
    %2963 = vmatpush.msra.mxu0 %v2906
    %2964 = vmatpush.msra.mxu0 %v2905
    %2965 = vmatpush.msra.mxu0 %v2904
    %2966 = vmatpush.msra.mxu0 %v2903
    %2967 = vmatpush.msra.mxu0 %v2902
    %2968 = vmatpush.msra.mxu0 %v2901
    %2969 = vmatpush.msra.mxu0 %v2900
    %2970 = vmatpush.msra.mxu0 %v2899
    %2971 = vmatpush.msra.mxu0 %v2898
    %2972 = vmatpush.msra.mxu0 %v2897
    %2973 = vmatpush.msra.mxu0 %v2896
    %2974 = vmatpush.msra.mxu0 %v2895
    %2975 = vmatpush.msra.mxu0 %v2894
    %2976 = vmatpush.msra.mxu0 %v2893
    %2977 = vmatpush.msra.mxu0 %v2892
    %2978 = vmatpush.msra.mxu0 %v2891
    %2979 = vmatmul.f32.gmra.mxu0 %v2766
    %v2980 = vpop.f32.mrf.mxu0
    %v2981 = vadd.f32 %v2961, %v2980
    %2982 = vdwg.mxu0
    %2983 = vmatpush.msra.mxu0 %v2922
    %2984 = vmatpush.msra.mxu0 %v2921
    %2985 = vmatpush.msra.mxu0 %v2920
    %2986 = vmatpush.msra.mxu0 %v2919
    %2987 = vmatpush.msra.mxu0 %v2918
    %2988 = vmatpush.msra.mxu0 %v2917
    %2989 = vmatpush.msra.mxu0 %v2916
    %2990 = vmatpush.msra.mxu0 %v2915
    %2991 = vmatpush.msra.mxu0 %v2914
    %2992 = vmatpush.msra.mxu0 %v2913
    %2993 = vmatpush.msra.mxu0 %v2912
    %2994 = vmatpush.msra.mxu0 %v2911
    %2995 = vmatpush.msra.mxu0 %v2910
    %2996 = vmatpush.msra.mxu0 %v2909
    %2997 = vmatpush.msra.mxu0 %v2908
    %2998 = vmatpush.msra.mxu0 %v2907
    %2999 = vmatmul.f32.gmra.mxu0 %v2792
    %v3000 = vpop.f32.mrf.mxu0
    %v3001 = vadd.f32 %v2981, %v3000
    %3002 = vdwg.mxu0
    %v3003 = vmul.f32 %v2714, %v2714
    %v3004 = vmul.f32 %v2740, %v2740
    %v3005 = vmul.f32 %v2766, %v2766
    %v3006 = vmul.f32 %v2792, %v2792
    %3007 = vmatpush.msra.mxu0 %v2874
    %3008 = vmatpush.msra.mxu0 %v2873
    %3009 = vmatpush.msra.mxu0 %v2872
    %3010 = vmatpush.msra.mxu0 %v2871
    %3011 = vmatpush.msra.mxu0 %v2870
    %3012 = vmatpush.msra.mxu0 %v2869
    %3013 = vmatpush.msra.mxu0 %v2868
    %3014 = vmatpush.msra.mxu0 %v2867
    %3015 = vmatpush.msra.mxu0 %v2866
    %3016 = vmatpush.msra.mxu0 %v2865
    %3017 = vmatpush.msra.mxu0 %v2864
    %3018 = vmatpush.msra.mxu0 %v2863
    %3019 = vmatpush.msra.mxu0 %v2862
    %3020 = vmatpush.msra.mxu0 %v2861
    %3021 = vmatpush.msra.mxu0 %v2860
    %3022 = vmatpush.msra.mxu0 %v2859
    %3023 = vmatmul.f32.gmra.mxu0 %v3003
    %v3024 = vpop.f32.mrf.mxu0
    %v3025 = vadd.f32 0.0, %v3024
    %3026 = vdwg.mxu0
    %3027 = vmatpush.msra.mxu0 %v2890
    %3028 = vmatpush.msra.mxu0 %v2889
    %3029 = vmatpush.msra.mxu0 %v2888
    %3030 = vmatpush.msra.mxu0 %v2887
    %3031 = vmatpush.msra.mxu0 %v2886
    %3032 = vmatpush.msra.mxu0 %v2885
    %3033 = vmatpush.msra.mxu0 %v2884
    %3034 = vmatpush.msra.mxu0 %v2883
    %3035 = vmatpush.msra.mxu0 %v2882
    %3036 = vmatpush.msra.mxu0 %v2881
    %3037 = vmatpush.msra.mxu0 %v2880
    %3038 = vmatpush.msra.mxu0 %v2879
    %3039 = vmatpush.msra.mxu0 %v2878
    %3040 = vmatpush.msra.mxu0 %v2877
    %3041 = vmatpush.msra.mxu0 %v2876
    %3042 = vmatpush.msra.mxu0 %v2875
    %3043 = vmatmul.f32.gmra.mxu0 %v3004
    %v3044 = vpop.f32.mrf.mxu0
    %v3045 = vadd.f32 %v3025, %v3044
    %3046 = vdwg.mxu0
    %3047 = vmatpush.msra.mxu0 %v2906
    %3048 = vmatpush.msra.mxu0 %v2905
    %3049 = vmatpush.msra.mxu0 %v2904
    %3050 = vmatpush.msra.mxu0 %v2903
    %3051 = vmatpush.msra.mxu0 %v2902
    %3052 = vmatpush.msra.mxu0 %v2901
    %3053 = vmatpush.msra.mxu0 %v2900
    %3054 = vmatpush.msra.mxu0 %v2899
    %3055 = vmatpush.msra.mxu0 %v2898
    %3056 = vmatpush.msra.mxu0 %v2897
    %3057 = vmatpush.msra.mxu0 %v2896
    %3058 = vmatpush.msra.mxu0 %v2895
    %3059 = vmatpush.msra.mxu0 %v2894
    %3060 = vmatpush.msra.mxu0 %v2893
    %3061 = vmatpush.msra.mxu0 %v2892
    %3062 = vmatpush.msra.mxu0 %v2891
    %3063 = vmatmul.f32.gmra.mxu0 %v3005
    %v3064 = vpop.f32.mrf.mxu0
    %v3065 = vadd.f32 %v3045, %v3064
    %3066 = vdwg.mxu0
    %3067 = vmatpush.msra.mxu0 %v2922
    %3068 = vmatpush.msra.mxu0 %v2921
    %3069 = vmatpush.msra.mxu0 %v2920
    %3070 = vmatpush.msra.mxu0 %v2919
    %3071 = vmatpush.msra.mxu0 %v2918
    %3072 = vmatpush.msra.mxu0 %v2917
    %3073 = vmatpush.msra.mxu0 %v2916
    %3074 = vmatpush.msra.mxu0 %v2915
    %3075 = vmatpush.msra.mxu0 %v2914
    %3076 = vmatpush.msra.mxu0 %v2913
    %3077 = vmatpush.msra.mxu0 %v2912
    %3078 = vmatpush.msra.mxu0 %v2911
    %3079 = vmatpush.msra.mxu0 %v2910
    %3080 = vmatpush.msra.mxu0 %v2909
    %3081 = vmatpush.msra.mxu0 %v2908
    %3082 = vmatpush.msra.mxu0 %v2907
    %3083 = vmatmul.f32.gmra.mxu0 %v3006
    %v3084 = vpop.f32.mrf.mxu0
    %v3085 = vadd.f32 %v3065, %v3084
    %3086 = vdwg.mxu0
    %v3087 = vmul.f32 %v3001, %v3001
    %v3088 = vsub.f32 %v3085, %v3087
    %v3089 = vmax.f32 %v3088, 0.0
    %v3090 = vadd.f32 %v3089, 1e-05
    %v3091 = vrsqrt.pop %v3090
    %v3092 = vmul.f32 %v3091, %v3090
    %v3093 = vmul.f32 %v3092, %v3091
    %v3094 = vmul.f32 0.5, %v3093
    %v3095 = vsub.f32 1.5, %v3094
    %v3096 = vmul.f32 %v3091, %v3095
    %vm3097 = vweird.f32 %v3090
    %vm3098 = vweird.f32 %v3091
    %vm3099 = vmor %vm3097, %vm3098
    %v3100 = vsel %vm3099, %v3091, %v3096
    %v3101 = vsub.f32 0.0, %v3001
    %v3102 = vmul.f32 %v3101, %v3100
    %v3103 = vld [vmem:[#allocation2 + $0x1b00] sm:$0xff]
    %v3104 = vld [vmem:[#allocation2 + $0x1b08] sm:$0xff]
    %v3105 = vld [vmem:[#allocation2 + $0x1b10] sm:$0xff]
    %v3106 = vld [vmem:[#allocation2 + $0x1b18] sm:$0xff]
    %v3107 = vld [vmem:[#allocation2 + $0x1b20] sm:$0xff]
    %v3108 = vld [vmem:[#allocation2 + $0x1b28] sm:$0xff]
    %v3109 = vld [vmem:[#allocation2 + $0x1b30] sm:$0xff]
    %v3110 = vld [vmem:[#allocation2 + $0x1b38] sm:$0xff]
    %v3111 = vld [vmem:[#allocation2 + $0x1b40] sm:$0xff]
    %v3112 = vld [vmem:[#allocation2 + $0x1b48] sm:$0xff]
    %v3113 = vld [vmem:[#allocation2 + $0x1b50] sm:$0xff]
    %v3114 = vld [vmem:[#allocation2 + $0x1b58] sm:$0xff]
    %v3115 = vld [vmem:[#allocation2 + $0x1b60] sm:$0xff]
    %v3116 = vld [vmem:[#allocation2 + $0x1b68] sm:$0xff]
    %v3117 = vld [vmem:[#allocation2 + $0x1b70] sm:$0xff]
    %v3118 = vld [vmem:[#allocation2 + $0x1b78] sm:$0xff]
    %v3119 = vld [vmem:[#allocation2 + $0x1b80] sm:$0xff]
    %v3120 = vld [vmem:[#allocation2 + $0x1b88] sm:$0xff]
    %v3121 = vld [vmem:[#allocation2 + $0x1b90] sm:$0xff]
    %v3122 = vld [vmem:[#allocation2 + $0x1b98] sm:$0xff]
    %v3123 = vld [vmem:[#allocation2 + $0x1ba0] sm:$0xff]
    %v3124 = vld [vmem:[#allocation2 + $0x1ba8] sm:$0xff]
    %v3125 = vld [vmem:[#allocation2 + $0x1bb0] sm:$0xff]
    %v3126 = vld [vmem:[#allocation2 + $0x1bb8] sm:$0xff]
    %v3127 = vld [vmem:[#allocation2 + $0x1bc0] sm:$0xff]
    %v3128 = vld [vmem:[#allocation2 + $0x1bc8] sm:$0xff]
    %v3129 = vld [vmem:[#allocation2 + $0x1bd0] sm:$0xff]
    %v3130 = vld [vmem:[#allocation2 + $0x1bd8] sm:$0xff]
    %v3131 = vld [vmem:[#allocation2 + $0x1be0] sm:$0xff]
    %v3132 = vld [vmem:[#allocation2 + $0x1be8] sm:$0xff]
    %v3133 = vld [vmem:[#allocation2 + $0x1bf0] sm:$0xff]
    %v3134 = vld [vmem:[#allocation2 + $0x1bf8] sm:$0xff]
    %v3135 = vunpack.c.l.bf16 %v3103
    %v3136 = vunpack.c.h.bf16 %v3103
    %v3137 = vunpack.c.l.bf16 %v3104
    %v3138 = vunpack.c.h.bf16 %v3104
    %v3139 = vunpack.c.l.bf16 %v3105
    %v3140 = vunpack.c.h.bf16 %v3105
    %v3141 = vunpack.c.l.bf16 %v3106
    %v3142 = vunpack.c.h.bf16 %v3106
    %v3143 = vunpack.c.l.bf16 %v3107
    %v3144 = vunpack.c.h.bf16 %v3107
    %v3145 = vunpack.c.l.bf16 %v3108
    %v3146 = vunpack.c.h.bf16 %v3108
    %v3147 = vunpack.c.l.bf16 %v3109
    %v3148 = vunpack.c.h.bf16 %v3109
    %v3149 = vunpack.c.l.bf16 %v3110
    %v3150 = vunpack.c.h.bf16 %v3110
    %v3151 = vunpack.c.l.bf16 %v3111
    %v3152 = vunpack.c.h.bf16 %v3111
    %v3153 = vunpack.c.l.bf16 %v3112
    %v3154 = vunpack.c.h.bf16 %v3112
    %v3155 = vunpack.c.l.bf16 %v3113
    %v3156 = vunpack.c.h.bf16 %v3113
    %v3157 = vunpack.c.l.bf16 %v3114
    %v3158 = vunpack.c.h.bf16 %v3114
    %v3159 = vunpack.c.l.bf16 %v3115
    %v3160 = vunpack.c.h.bf16 %v3115
    %v3161 = vunpack.c.l.bf16 %v3116
    %v3162 = vunpack.c.h.bf16 %v3116
    %v3163 = vunpack.c.l.bf16 %v3117
    %v3164 = vunpack.c.h.bf16 %v3117
    %v3165 = vunpack.c.l.bf16 %v3118
    %v3166 = vunpack.c.h.bf16 %v3118
    %v3167 = vunpack.c.l.bf16 %v3119
    %v3168 = vunpack.c.h.bf16 %v3119
    %v3169 = vunpack.c.l.bf16 %v3120
    %v3170 = vunpack.c.h.bf16 %v3120
    %v3171 = vunpack.c.l.bf16 %v3121
    %v3172 = vunpack.c.h.bf16 %v3121
    %v3173 = vunpack.c.l.bf16 %v3122
    %v3174 = vunpack.c.h.bf16 %v3122
    %v3175 = vunpack.c.l.bf16 %v3123
    %v3176 = vunpack.c.h.bf16 %v3123
    %v3177 = vunpack.c.l.bf16 %v3124
    %v3178 = vunpack.c.h.bf16 %v3124
    %v3179 = vunpack.c.l.bf16 %v3125
    %v3180 = vunpack.c.h.bf16 %v3125
    %v3181 = vunpack.c.l.bf16 %v3126
    %v3182 = vunpack.c.h.bf16 %v3126
    %v3183 = vunpack.c.l.bf16 %v3127
    %v3184 = vunpack.c.h.bf16 %v3127
    %v3185 = vunpack.c.l.bf16 %v3128
    %v3186 = vunpack.c.h.bf16 %v3128
    %v3187 = vunpack.c.l.bf16 %v3129
    %v3188 = vunpack.c.h.bf16 %v3129
    %v3189 = vunpack.c.l.bf16 %v3130
    %v3190 = vunpack.c.h.bf16 %v3130
    %v3191 = vunpack.c.l.bf16 %v3131
    %v3192 = vunpack.c.h.bf16 %v3131
    %v3193 = vunpack.c.l.bf16 %v3132
    %v3194 = vunpack.c.h.bf16 %v3132
    %v3195 = vunpack.c.l.bf16 %v3133
    %v3196 = vunpack.c.h.bf16 %v3133
    %v3197 = vunpack.c.l.bf16 %v3134
    %v3198 = vunpack.c.h.bf16 %v3134
    %3199 = vmatpush.msra.mxu0 %v3195
    %3200 = vmatpush.msra.mxu0 %v3191
    %3201 = vmatpush.msra.mxu0 %v3187
    %3202 = vmatpush.msra.mxu0 %v3183
    %3203 = vmatpush.msra.mxu0 %v3179
    %3204 = vmatpush.msra.mxu0 %v3175
    %3205 = vmatpush.msra.mxu0 %v3171
    %3206 = vmatpush.msra.mxu0 %v3167
    %3207 = vmatpush.msra.mxu0 %v3163
    %3208 = vmatpush.msra.mxu0 %v3159
    %3209 = vmatpush.msra.mxu0 %v3155
    %3210 = vmatpush.msra.mxu0 %v3151
    %3211 = vmatpush.msra.mxu0 %v3147
    %3212 = vmatpush.msra.mxu0 %v3143
    %3213 = vmatpush.msra.mxu0 %v3139
    %3214 = vmatpush.msra.mxu0 %v3135
    %3215 = vmatmul.f32.gmra.mxu0 %v3100
    %v3216 = vpop.f32.mrf.mxu0
    %v3217 = vadd.f32 0.0, %v3216
    %3218 = vmatmul.f32.gmra.mxu0 %v3102
    %v3219 = vpop.f32.mrf.mxu0
    %v3220 = vadd.f32 0.0, %v3219
    %3221 = vdwg.mxu0
    %3222 = vmatpush.msra.mxu0 %v3196
    %3223 = vmatpush.msra.mxu0 %v3192
    %3224 = vmatpush.msra.mxu0 %v3188
    %3225 = vmatpush.msra.mxu0 %v3184
    %3226 = vmatpush.msra.mxu0 %v3180
    %3227 = vmatpush.msra.mxu0 %v3176
    %3228 = vmatpush.msra.mxu0 %v3172
    %3229 = vmatpush.msra.mxu0 %v3168
    %3230 = vmatpush.msra.mxu0 %v3164
    %3231 = vmatpush.msra.mxu0 %v3160
    %3232 = vmatpush.msra.mxu0 %v3156
    %3233 = vmatpush.msra.mxu0 %v3152
    %3234 = vmatpush.msra.mxu0 %v3148
    %3235 = vmatpush.msra.mxu0 %v3144
    %3236 = vmatpush.msra.mxu0 %v3140
    %3237 = vmatpush.msra.mxu0 %v3136
    %3238 = vmatmul.f32.gmra.mxu0 %v3100
    %v3239 = vpop.f32.mrf.mxu0
    %v3240 = vadd.f32 0.0, %v3239
    %3241 = vmatmul.f32.gmra.mxu0 %v3102
    %v3242 = vpop.f32.mrf.mxu0
    %v3243 = vadd.f32 0.0, %v3242
    %3244 = vdwg.mxu0
    %3245 = vmatpush.msra.mxu0 %v3197
    %3246 = vmatpush.msra.mxu0 %v3193
    %3247 = vmatpush.msra.mxu0 %v3189
    %3248 = vmatpush.msra.mxu0 %v3185
    %3249 = vmatpush.msra.mxu0 %v3181
    %3250 = vmatpush.msra.mxu0 %v3177
    %3251 = vmatpush.msra.mxu0 %v3173
    %3252 = vmatpush.msra.mxu0 %v3169
    %3253 = vmatpush.msra.mxu0 %v3165
    %3254 = vmatpush.msra.mxu0 %v3161
    %3255 = vmatpush.msra.mxu0 %v3157
    %3256 = vmatpush.msra.mxu0 %v3153
    %3257 = vmatpush.msra.mxu0 %v3149
    %3258 = vmatpush.msra.mxu0 %v3145
    %3259 = vmatpush.msra.mxu0 %v3141
    %3260 = vmatpush.msra.mxu0 %v3137
    %3261 = vmatmul.f32.gmra.mxu0 %v3100
    %v3262 = vpop.f32.mrf.mxu0
    %v3263 = vadd.f32 0.0, %v3262
    %3264 = vmatmul.f32.gmra.mxu0 %v3102
    %v3265 = vpop.f32.mrf.mxu0
    %v3266 = vadd.f32 0.0, %v3265
    %3267 = vdwg.mxu0
    %3268 = vmatpush.msra.mxu0 %v3198
    %3269 = vmatpush.msra.mxu0 %v3194
    %3270 = vmatpush.msra.mxu0 %v3190
    %3271 = vmatpush.msra.mxu0 %v3186
    %3272 = vmatpush.msra.mxu0 %v3182
    %3273 = vmatpush.msra.mxu0 %v3178
    %3274 = vmatpush.msra.mxu0 %v3174
    %3275 = vmatpush.msra.mxu0 %v3170
    %3276 = vmatpush.msra.mxu0 %v3166
    %3277 = vmatpush.msra.mxu0 %v3162
    %3278 = vmatpush.msra.mxu0 %v3158
    %3279 = vmatpush.msra.mxu0 %v3154
    %3280 = vmatpush.msra.mxu0 %v3150
    %3281 = vmatpush.msra.mxu0 %v3146
    %3282 = vmatpush.msra.mxu0 %v3142
    %3283 = vmatpush.msra.mxu0 %v3138
    %3284 = vmatmul.f32.gmra.mxu0 %v3100
    %v3285 = vpop.f32.mrf.mxu0
    %v3286 = vadd.f32 0.0, %v3285
    %3287 = vmatmul.f32.gmra.mxu0 %v3102
    %v3288 = vpop.f32.mrf.mxu0
    %v3289 = vadd.f32 0.0, %v3288
    %3290 = vdwg.mxu0
    %v3291 = vmul.f32 %v2714, %v3217
    %v3292 = vmul.f32 %v2740, %v3240
    %v3293 = vmul.f32 %v2766, %v3263
    %v3294 = vmul.f32 %v2792, %v3286
    %v3295 = vadd.f32 %v3291, %v3220
    %v3296 = vadd.f32 %v3292, %v3243
    %v3297 = vadd.f32 %v3293, %v3266
    %v3298 = vadd.f32 %v3294, %v3289
    %v3299 = vmax.f32 %v3295, 0.0
    %v3300 = vmax.f32 %v3296, 0.0
    %v3301 = vmax.f32 %v3297, 0.0
    %v3302 = vmax.f32 %v3298, 0.0
    %v3303 = vpack.c.bf16 %v3299, %v3299
    %v3304 = vpack.c.bf16 %v3300, %v3300
    %v3305 = vpack.c.bf16 %v3301, %v3301
    %v3306 = vpack.c.bf16 %v3302, %v3302
    %v3307 = vld [vmem:[#allocation2 + $0x1c00] sm:$0xff]
    %v3308 = vld [vmem:[#allocation2 + $0x1c10] sm:$0xff]
    %v3309 = vld [vmem:[#allocation2 + $0x1c20] sm:$0xff]
    %v3310 = vld [vmem:[#allocation2 + $0x1c30] sm:$0xff]
    %v3311 = vld [vmem:[#allocation2 + $0x1c40] sm:$0xff]
    %v3312 = vld [vmem:[#allocation2 + $0x1c50] sm:$0xff]
    %v3313 = vld [vmem:[#allocation2 + $0x1c60] sm:$0xff]
    %v3314 = vld [vmem:[#allocation2 + $0x1c70] sm:$0xff]
    %v3315 = vld [vmem:[#allocation2 + $0x1c80] sm:$0xff]
    %v3316 = vld [vmem:[#allocation2 + $0x1c90] sm:$0xff]
    %v3317 = vld [vmem:[#allocation2 + $0x1ca0] sm:$0xff]
    %v3318 = vld [vmem:[#allocation2 + $0x1cb0] sm:$0xff]
    %v3319 = vld [vmem:[#allocation2 + $0x1cc0] sm:$0xff]
    %v3320 = vld [vmem:[#allocation2 + $0x1cd0] sm:$0xff]
    %v3321 = vld [vmem:[#allocation2 + $0x1ce0] sm:$0xff]
    %v3322 = vld [vmem:[#allocation2 + $0x1cf0] sm:$0xff]
    %v3323 = vld [vmem:[#allocation2 + $0x1d00] sm:$0xff]
    %v3324 = vld [vmem:[#allocation2 + $0x1d10] sm:$0xff]
    %v3325 = vld [vmem:[#allocation2 + $0x1d20] sm:$0xff]
    %v3326 = vld [vmem:[#allocation2 + $0x1d30] sm:$0xff]
    %v3327 = vld [vmem:[#allocation2 + $0x1d40] sm:$0xff]
    %v3328 = vld [vmem:[#allocation2 + $0x1d50] sm:$0xff]
    %v3329 = vld [vmem:[#allocation2 + $0x1d60] sm:$0xff]
    %v3330 = vld [vmem:[#allocation2 + $0x1d70] sm:$0xff]
    %v3331 = vld [vmem:[#allocation2 + $0x1d80] sm:$0xff]
    %v3332 = vld [vmem:[#allocation2 + $0x1d90] sm:$0xff]
    %v3333 = vld [vmem:[#allocation2 + $0x1da0] sm:$0xff]
    %v3334 = vld [vmem:[#allocation2 + $0x1db0] sm:$0xff]
    %v3335 = vld [vmem:[#allocation2 + $0x1dc0] sm:$0xff]
    %v3336 = vld [vmem:[#allocation2 + $0x1dd0] sm:$0xff]
    %v3337 = vld [vmem:[#allocation2 + $0x1de0] sm:$0xff]
    %v3338 = vld [vmem:[#allocation2 + $0x1df0] sm:$0xff]
    %v3339 = vld [vmem:[#allocation2 + $0x1e00] sm:$0xff]
    %v3340 = vld [vmem:[#allocation2 + $0x1e10] sm:$0xff]
    %v3341 = vld [vmem:[#allocation2 + $0x1e20] sm:$0xff]
    %v3342 = vld [vmem:[#allocation2 + $0x1e30] sm:$0xff]
    %v3343 = vld [vmem:[#allocation2 + $0x1e40] sm:$0xff]
    %v3344 = vld [vmem:[#allocation2 + $0x1e50] sm:$0xff]
    %v3345 = vld [vmem:[#allocation2 + $0x1e60] sm:$0xff]
    %v3346 = vld [vmem:[#allocation2 + $0x1e70] sm:$0xff]
    %v3347 = vld [vmem:[#allocation2 + $0x1e80] sm:$0xff]
    %v3348 = vld [vmem:[#allocation2 + $0x1e90] sm:$0xff]
    %v3349 = vld [vmem:[#allocation2 + $0x1ea0] sm:$0xff]
    %v3350 = vld [vmem:[#allocation2 + $0x1eb0] sm:$0xff]
    %v3351 = vld [vmem:[#allocation2 + $0x1ec0] sm:$0xff]
    %v3352 = vld [vmem:[#allocation2 + $0x1ed0] sm:$0xff]
    %v3353 = vld [vmem:[#allocation2 + $0x1ee0] sm:$0xff]
    %v3354 = vld [vmem:[#allocation2 + $0x1ef0] sm:$0xff]
    %v3355 = vld [vmem:[#allocation2 + $0x1f00] sm:$0xff]
    %v3356 = vld [vmem:[#allocation2 + $0x1f10] sm:$0xff]
    %v3357 = vld [vmem:[#allocation2 + $0x1f20] sm:$0xff]
    %v3358 = vld [vmem:[#allocation2 + $0x1f30] sm:$0xff]
    %v3359 = vld [vmem:[#allocation2 + $0x1f40] sm:$0xff]
    %v3360 = vld [vmem:[#allocation2 + $0x1f50] sm:$0xff]
    %v3361 = vld [vmem:[#allocation2 + $0x1f60] sm:$0xff]
    %v3362 = vld [vmem:[#allocation2 + $0x1f70] sm:$0xff]
    %v3363 = vld [vmem:[#allocation2 + $0x1f80] sm:$0xff]
    %v3364 = vld [vmem:[#allocation2 + $0x1f90] sm:$0xff]
    %v3365 = vld [vmem:[#allocation2 + $0x1fa0] sm:$0xff]
    %v3366 = vld [vmem:[#allocation2 + $0x1fb0] sm:$0xff]
    %v3367 = vld [vmem:[#allocation2 + $0x1fc0] sm:$0xff]
    %v3368 = vld [vmem:[#allocation2 + $0x1fd0] sm:$0xff]
    %v3369 = vld [vmem:[#allocation2 + $0x1fe0] sm:$0xff]
    %v3370 = vld [vmem:[#allocation2 + $0x1ff0] sm:$0xff]
    %v3435 = vunpack.c.l.b16 %v3307
    %v3436 = vunpack.c.h.b16 %v3307
    %v3437 = vunpack.c.l.b16 %v3308
    %v3438 = vunpack.c.h.b16 %v3308
    %v3439 = vunpack.c.l.b16 %v3309
    %v3440 = vunpack.c.h.b16 %v3309
    %v3441 = vunpack.c.l.b16 %v3310
    %v3442 = vunpack.c.h.b16 %v3310
    %v3443 = vunpack.c.l.b16 %v3311
    %v3444 = vunpack.c.h.b16 %v3311
    %v3445 = vunpack.c.l.b16 %v3312
    %v3446 = vunpack.c.h.b16 %v3312
    %v3447 = vunpack.c.l.b16 %v3313
    %v3448 = vunpack.c.h.b16 %v3313
    %v3449 = vunpack.c.l.b16 %v3314
    %v3450 = vunpack.c.h.b16 %v3314
    %v3451 = vunpack.c.l.b16 %v3315
    %v3452 = vunpack.c.h.b16 %v3315
    %v3453 = vunpack.c.l.b16 %v3316
    %v3454 = vunpack.c.h.b16 %v3316
    %v3455 = vunpack.c.l.b16 %v3317
    %v3456 = vunpack.c.h.b16 %v3317
    %v3457 = vunpack.c.l.b16 %v3318
    %v3458 = vunpack.c.h.b16 %v3318
    %v3459 = vunpack.c.l.b16 %v3319
    %v3460 = vunpack.c.h.b16 %v3319
    %v3461 = vunpack.c.l.b16 %v3320
    %v3462 = vunpack.c.h.b16 %v3320
    %v3463 = vunpack.c.l.b16 %v3321
    %v3464 = vunpack.c.h.b16 %v3321
    %v3465 = vunpack.c.l.b16 %v3322
    %v3466 = vunpack.c.h.b16 %v3322
    %v3467 = vunpack.c.l.b16 %v3323
    %v3468 = vunpack.c.h.b16 %v3323
    %v3469 = vunpack.c.l.b16 %v3324
    %v3470 = vunpack.c.h.b16 %v3324
    %v3471 = vunpack.c.l.b16 %v3325
    %v3472 = vunpack.c.h.b16 %v3325
    %v3473 = vunpack.c.l.b16 %v3326
    %v3474 = vunpack.c.h.b16 %v3326
    %v3475 = vunpack.c.l.b16 %v3327
    %v3476 = vunpack.c.h.b16 %v3327
    %v3477 = vunpack.c.l.b16 %v3328
    %v3478 = vunpack.c.h.b16 %v3328
    %v3479 = vunpack.c.l.b16 %v3329
    %v3480 = vunpack.c.h.b16 %v3329
    %v3481 = vunpack.c.l.b16 %v3330
    %v3482 = vunpack.c.h.b16 %v3330
    %v3483 = vunpack.c.l.b16 %v3331
    %v3484 = vunpack.c.h.b16 %v3331
    %v3485 = vunpack.c.l.b16 %v3332
    %v3486 = vunpack.c.h.b16 %v3332
    %v3487 = vunpack.c.l.b16 %v3333
    %v3488 = vunpack.c.h.b16 %v3333
    %v3489 = vunpack.c.l.b16 %v3334
    %v3490 = vunpack.c.h.b16 %v3334
    %v3491 = vunpack.c.l.b16 %v3335
    %v3492 = vunpack.c.h.b16 %v3335
    %v3493 = vunpack.c.l.b16 %v3336
    %v3494 = vunpack.c.h.b16 %v3336
    %v3495 = vunpack.c.l.b16 %v3337
    %v3496 = vunpack.c.h.b16 %v3337
    %v3497 = vunpack.c.l.b16 %v3338
    %v3498 = vunpack.c.h.b16 %v3338
    %v3499 = vunpack.c.l.b16 %v3339
    %v3500 = vunpack.c.h.b16 %v3339
    %v3501 = vunpack.c.l.b16 %v3340
    %v3502 = vunpack.c.h.b16 %v3340
    %v3503 = vunpack.c.l.b16 %v3341
    %v3504 = vunpack.c.h.b16 %v3341
    %v3505 = vunpack.c.l.b16 %v3342
    %v3506 = vunpack.c.h.b16 %v3342
    %v3507 = vunpack.c.l.b16 %v3343
    %v3508 = vunpack.c.h.b16 %v3343
    %v3509 = vunpack.c.l.b16 %v3344
    %v3510 = vunpack.c.h.b16 %v3344
    %v3511 = vunpack.c.l.b16 %v3345
    %v3512 = vunpack.c.h.b16 %v3345
    %v3513 = vunpack.c.l.b16 %v3346
    %v3514 = vunpack.c.h.b16 %v3346
    %v3515 = vunpack.c.l.b16 %v3347
    %v3516 = vunpack.c.h.b16 %v3347
    %v3517 = vunpack.c.l.b16 %v3348
    %v3518 = vunpack.c.h.b16 %v3348
    %v3519 = vunpack.c.l.b16 %v3349
    %v3520 = vunpack.c.h.b16 %v3349
    %v3521 = vunpack.c.l.b16 %v3350
    %v3522 = vunpack.c.h.b16 %v3350
    %v3523 = vunpack.c.l.b16 %v3351
    %v3524 = vunpack.c.h.b16 %v3351
    %v3525 = vunpack.c.l.b16 %v3352
    %v3526 = vunpack.c.h.b16 %v3352
    %v3527 = vunpack.c.l.b16 %v3353
    %v3528 = vunpack.c.h.b16 %v3353
    %v3529 = vunpack.c.l.b16 %v3354
    %v3530 = vunpack.c.h.b16 %v3354
    %v3531 = vunpack.c.l.b16 %v3355
    %v3532 = vunpack.c.h.b16 %v3355
    %v3533 = vunpack.c.l.b16 %v3356
    %v3534 = vunpack.c.h.b16 %v3356
    %v3535 = vunpack.c.l.b16 %v3357
    %v3536 = vunpack.c.h.b16 %v3357
    %v3537 = vunpack.c.l.b16 %v3358
    %v3538 = vunpack.c.h.b16 %v3358
    %v3539 = vunpack.c.l.b16 %v3359
    %v3540 = vunpack.c.h.b16 %v3359
    %v3541 = vunpack.c.l.b16 %v3360
    %v3542 = vunpack.c.h.b16 %v3360
    %v3543 = vunpack.c.l.b16 %v3361
    %v3544 = vunpack.c.h.b16 %v3361
    %v3545 = vunpack.c.l.b16 %v3362
    %v3546 = vunpack.c.h.b16 %v3362
    %v3547 = vunpack.c.l.b16 %v3363
    %v3548 = vunpack.c.h.b16 %v3363
    %v3549 = vunpack.c.l.b16 %v3364
    %v3550 = vunpack.c.h.b16 %v3364
    %v3551 = vunpack.c.l.b16 %v3365
    %v3552 = vunpack.c.h.b16 %v3365
    %v3553 = vunpack.c.l.b16 %v3366
    %v3554 = vunpack.c.h.b16 %v3366
    %v3555 = vunpack.c.l.b16 %v3367
    %v3556 = vunpack.c.h.b16 %v3367
    %v3557 = vunpack.c.l.b16 %v3368
    %v3558 = vunpack.c.h.b16 %v3368
    %v3559 = vunpack.c.l.b16 %v3369
    %v3560 = vunpack.c.h.b16 %v3369
    %v3561 = vunpack.c.l.b16 %v3370
    %v3562 = vunpack.c.h.b16 %v3370
    %v3563 = vpack.c.b16 %v3437, %v3435
    %v3564 = vpack.c.b16 %v3438, %v3436
    %v3565 = vpack.c.b16 %v3441, %v3439
    %v3566 = vpack.c.b16 %v3442, %v3440
    %v3567 = vpack.c.b16 %v3445, %v3443
    %v3568 = vpack.c.b16 %v3446, %v3444
    %v3569 = vpack.c.b16 %v3449, %v3447
    %v3570 = vpack.c.b16 %v3450, %v3448
    %v3571 = vpack.c.b16 %v3453, %v3451
    %v3572 = vpack.c.b16 %v3454, %v3452
    %v3573 = vpack.c.b16 %v3457, %v3455
    %v3574 = vpack.c.b16 %v3458, %v3456
    %v3575 = vpack.c.b16 %v3461, %v3459
    %v3576 = vpack.c.b16 %v3462, %v3460
    %v3577 = vpack.c.b16 %v3465, %v3463
    %v3578 = vpack.c.b16 %v3466, %v3464
    %v3579 = vpack.c.b16 %v3469, %v3467
    %v3580 = vpack.c.b16 %v3470, %v3468
    %v3581 = vpack.c.b16 %v3473, %v3471
    %v3582 = vpack.c.b16 %v3474, %v3472
    %v3583 = vpack.c.b16 %v3477, %v3475
    %v3584 = vpack.c.b16 %v3478, %v3476
    %v3585 = vpack.c.b16 %v3481, %v3479
    %v3586 = vpack.c.b16 %v3482, %v3480
    %v3587 = vpack.c.b16 %v3485, %v3483
    %v3588 = vpack.c.b16 %v3486, %v3484
    %v3589 = vpack.c.b16 %v3489, %v3487
    %v3590 = vpack.c.b16 %v3490, %v3488
    %v3591 = vpack.c.b16 %v3493, %v3491
    %v3592 = vpack.c.b16 %v3494, %v3492
    %v3593 = vpack.c.b16 %v3497, %v3495
    %v3594 = vpack.c.b16 %v3498, %v3496
    %v3595 = vpack.c.b16 %v3501, %v3499
    %v3596 = vpack.c.b16 %v3502, %v3500
    %v3597 = vpack.c.b16 %v3505, %v3503
    %v3598 = vpack.c.b16 %v3506, %v3504
    %v3599 = vpack.c.b16 %v3509, %v3507
    %v3600 = vpack.c.b16 %v3510, %v3508
    %v3601 = vpack.c.b16 %v3513, %v3511
    %v3602 = vpack.c.b16 %v3514, %v3512
    %v3603 = vpack.c.b16 %v3517, %v3515
    %v3604 = vpack.c.b16 %v3518, %v3516
    %v3605 = vpack.c.b16 %v3521, %v3519
    %v3606 = vpack.c.b16 %v3522, %v3520
    %v3607 = vpack.c.b16 %v3525, %v3523
    %v3608 = vpack.c.b16 %v3526, %v3524
    %v3609 = vpack.c.b16 %v3529, %v3527
    %v3610 = vpack.c.b16 %v3530, %v3528
    %v3611 = vpack.c.b16 %v3533, %v3531
    %v3612 = vpack.c.b16 %v3534, %v3532
    %v3613 = vpack.c.b16 %v3537, %v3535
    %v3614 = vpack.c.b16 %v3538, %v3536
    %v3615 = vpack.c.b16 %v3541, %v3539
    %v3616 = vpack.c.b16 %v3542, %v3540
    %v3617 = vpack.c.b16 %v3545, %v3543
    %v3618 = vpack.c.b16 %v3546, %v3544
    %v3619 = vpack.c.b16 %v3549, %v3547
    %v3620 = vpack.c.b16 %v3550, %v3548
    %v3621 = vpack.c.b16 %v3553, %v3551
    %v3622 = vpack.c.b16 %v3554, %v3552
    %v3623 = vpack.c.b16 %v3557, %v3555
    %v3624 = vpack.c.b16 %v3558, %v3556
    %v3625 = vpack.c.b16 %v3561, %v3559
    %v3626 = vpack.c.b16 %v3562, %v3560
    %3691 = vmatpush.bf16.msra.mxu0 %v3577
    %3692 = vmatpush.bf16.msra.mxu0 %v3575
    %3693 = vmatpush.bf16.msra.mxu0 %v3573
    %3694 = vmatpush.bf16.msra.mxu0 %v3571
    %3695 = vmatpush.bf16.msra.mxu0 %v3569
    %3696 = vmatpush.bf16.msra.mxu0 %v3567
    %3697 = vmatpush.bf16.msra.mxu0 %v3565
    %3698 = vmatpush.bf16.msra.mxu0 %v3563
    %3699 = vmatmul.bf16.gmra.mxu0 %v3303
    %v3700 = vpop.f32.mrf.mxu0
    %v3701 = vadd.f32 0.0, %v3700
    %v3702 = vpop.f32.mrf.mxu0
    %3703 = vdwg.mxu0
    %3704 = vmatpush.bf16.msra.mxu0 %v3593
    %3705 = vmatpush.bf16.msra.mxu0 %v3591
    %3706 = vmatpush.bf16.msra.mxu0 %v3589
    %3707 = vmatpush.bf16.msra.mxu0 %v3587
    %3708 = vmatpush.bf16.msra.mxu0 %v3585
    %3709 = vmatpush.bf16.msra.mxu0 %v3583
    %3710 = vmatpush.bf16.msra.mxu0 %v3581
    %3711 = vmatpush.bf16.msra.mxu0 %v3579
    %3712 = vmatmul.bf16.gmra.mxu0 %v3304
    %v3713 = vpop.f32.mrf.mxu0
    %v3714 = vadd.f32 %v3701, %v3713
    %v3715 = vpop.f32.mrf.mxu0
    %3716 = vdwg.mxu0
    %3717 = vmatpush.bf16.msra.mxu0 %v3609
    %3718 = vmatpush.bf16.msra.mxu0 %v3607
    %3719 = vmatpush.bf16.msra.mxu0 %v3605
    %3720 = vmatpush.bf16.msra.mxu0 %v3603
    %3721 = vmatpush.bf16.msra.mxu0 %v3601
    %3722 = vmatpush.bf16.msra.mxu0 %v3599
    %3723 = vmatpush.bf16.msra.mxu0 %v3597
    %3724 = vmatpush.bf16.msra.mxu0 %v3595
    %3725 = vmatmul.bf16.gmra.mxu0 %v3305
    %v3726 = vpop.f32.mrf.mxu0
    %v3727 = vadd.f32 %v3714, %v3726
    %v3728 = vpop.f32.mrf.mxu0
    %3729 = vdwg.mxu0
    %3730 = vmatpush.bf16.msra.mxu0 %v3625
    %3731 = vmatpush.bf16.msra.mxu0 %v3623
    %3732 = vmatpush.bf16.msra.mxu0 %v3621
    %3733 = vmatpush.bf16.msra.mxu0 %v3619
    %3734 = vmatpush.bf16.msra.mxu0 %v3617
    %3735 = vmatpush.bf16.msra.mxu0 %v3615
    %3736 = vmatpush.bf16.msra.mxu0 %v3613
    %3737 = vmatpush.bf16.msra.mxu0 %v3611
    %3738 = vmatmul.bf16.gmra.mxu0 %v3306
    %v3739 = vpop.f32.mrf.mxu0
    %v3740 = vadd.f32 %v3727, %v3739
    %v3741 = vpop.f32.mrf.mxu0
    %3742 = vdwg.mxu0
    %3743 = vmatpush.bf16.msra.mxu0 %v3578
    %3744 = vmatpush.bf16.msra.mxu0 %v3576
    %3745 = vmatpush.bf16.msra.mxu0 %v3574
    %3746 = vmatpush.bf16.msra.mxu0 %v3572
    %3747 = vmatpush.bf16.msra.mxu0 %v3570
    %3748 = vmatpush.bf16.msra.mxu0 %v3568
    %3749 = vmatpush.bf16.msra.mxu0 %v3566
    %3750 = vmatpush.bf16.msra.mxu0 %v3564
    %3751 = vmatmul.bf16.gmra.mxu0 %v3303
    %v3752 = vpop.f32.mrf.mxu0
    %v3753 = vadd.f32 0.0, %v3752
    %v3754 = vpop.f32.mrf.mxu0
    %3755 = vdwg.mxu0
    %3756 = vmatpush.bf16.msra.mxu0 %v3594
    %3757 = vmatpush.bf16.msra.mxu0 %v3592
    %3758 = vmatpush.bf16.msra.mxu0 %v3590
    %3759 = vmatpush.bf16.msra.mxu0 %v3588
    %3760 = vmatpush.bf16.msra.mxu0 %v3586
    %3761 = vmatpush.bf16.msra.mxu0 %v3584
    %3762 = vmatpush.bf16.msra.mxu0 %v3582
    %3763 = vmatpush.bf16.msra.mxu0 %v3580
    %3764 = vmatmul.bf16.gmra.mxu0 %v3304
    %v3765 = vpop.f32.mrf.mxu0
    %v3766 = vadd.f32 %v3753, %v3765
    %v3767 = vpop.f32.mrf.mxu0
    %3768 = vdwg.mxu0
    %3769 = vmatpush.bf16.msra.mxu0 %v3610
    %3770 = vmatpush.bf16.msra.mxu0 %v3608
    %3771 = vmatpush.bf16.msra.mxu0 %v3606
    %3772 = vmatpush.bf16.msra.mxu0 %v3604
    %3773 = vmatpush.bf16.msra.mxu0 %v3602
    %3774 = vmatpush.bf16.msra.mxu0 %v3600
    %3775 = vmatpush.bf16.msra.mxu0 %v3598
    %3776 = vmatpush.bf16.msra.mxu0 %v3596
    %3777 = vmatmul.bf16.gmra.mxu0 %v3305
    %v3778 = vpop.f32.mrf.mxu0
    %v3779 = vadd.f32 %v3766, %v3778
    %v3780 = vpop.f32.mrf.mxu0
    %3781 = vdwg.mxu0
    %3782 = vmatpush.bf16.msra.mxu0 %v3626
    %3783 = vmatpush.bf16.msra.mxu0 %v3624
    %3784 = vmatpush.bf16.msra.mxu0 %v3622
    %3785 = vmatpush.bf16.msra.mxu0 %v3620
    %3786 = vmatpush.bf16.msra.mxu0 %v3618
    %3787 = vmatpush.bf16.msra.mxu0 %v3616
    %3788 = vmatpush.bf16.msra.mxu0 %v3614
    %3789 = vmatpush.bf16.msra.mxu0 %v3612
    %3790 = vmatmul.bf16.gmra.mxu0 %v3306
    %v3791 = vpop.f32.mrf.mxu0
    %v3792 = vadd.f32 %v3779, %v3791
    %v3793 = vpop.f32.mrf.mxu0
    %3794 = vdwg.mxu0
    %v3795 = vtanh.pop %v3740
    %v3796 = vtanh.pop %v3792
    %3797 = vst [vmem:[%s2] sm:$0xff] %v3795
    %3798 = vst [vmem:[%s2 + $0x8] sm:$0xff] %v3796
    // Predicated region
    $region14: #{_lambda_.1} parent=1 // pred_check
      _
    $region15: #{_lambda_.1} parent=1 // pred_check_branch
      %3800 = sbr.rel (0) target = $region17
    $region16: #{_lambda_.1} parent=1 // pred_region
      _
    $region17: #{_lambda_.1} parent=1 // pred_fallthru
      _
    // Predicated region
    $region18: #{_lambda_.1} parent=1 // pred_check
      _
    $region19: #{_lambda_.1} parent=1 // pred_check_branch
      %3802 = sbr.rel (0) target = $region21
    $region20: #{_lambda_.1} parent=1 // pred_region
      _
    $region21: #{_lambda_.1} parent=1 // pred_fallthru
      _
    %3803 = vsyncpa [#allocation3], 1

</llo_original>
